<compile_context>
chip_gen: v7x
topology: tpu7x:2x2x1
jax: 0.10.0
libtpu: 0.0.40
codegen_flags: <defaults>
</compile_context>

<pallas_src>
import functools

import jax
import jax.numpy as jnp
from jax.experimental import pallas as pl
from jax.experimental.pallas import tpu as pltpu

LANE = 128


def _ceil_to(x, m):
    return ((x + m - 1) // m) * m


# ----------------------------------------------------------------------------
# fused kernel: conv3x3+bias+SiLU -> conv3x3+bias+SiLU (+ residual)
# ----------------------------------------------------------------------------
def _make_bottleneck_kernel(H, W, add_residual, compute_dtype):
    m = H * W

    def silu_f32(y):
        # SiLU in f32; the divide goes to the EUP slot via the approx reciprocal.
        return y * pl.reciprocal(1.0 + jnp.exp(-y), approx=True)

    def conv3x3(src, w_ref, b_ref):
        # src: (H+2, W+2, Cin) value, zero ring = conv "same" padding.
        # w_ref: (9*Cin, Cout) with BN scale folded in; b_ref: (1, Cout) f32.
        cin = src.shape[-1]
        taps = [src[dy:dy + H, dx:dx + W, :].reshape(m, cin)
                for dy in range(3) for dx in range(3)]
        patches = jnp.concatenate(taps, axis=-1)                  # (m, 9*Cin)
        y = jnp.dot(patches.astype(w_ref.dtype), w_ref[...],
                    preferred_element_type=jnp.float32)           # one K=9*Cin matmul
        return silu_f32(y + b_ref[...])                           # (m, Cout) f32

    def kernel(x_ref, w1_ref, b1_ref, w2_ref, b2_ref, o_ref):
        xp = x_ref[...]                                           # (H+2, W+2, C1p)
        # cv1
        t = conv3x3(xp, w1_ref, b1_ref)                           # (m, C_p) f32
        c_p = t.shape[-1]
        # Build the zero-padded intermediate entirely in registers / compiler
        # temporaries (no VMEM scratch round trip); the ring is cv2's padding.
        t3 = t.reshape(H, W, c_p).astype(compute_dtype)
        zrow = jnp.zeros((1, W, c_p), compute_dtype)
        zcol = jnp.zeros((H + 2, 1, c_p), compute_dtype)
        t3 = jnp.concatenate([zrow, t3, zrow], axis=0)            # (H+2, W,   C_p)
        t3 = jnp.concatenate([zcol, t3, zcol], axis=1)            # (H+2, W+2, C_p)
        # cv2
        y = conv3x3(t3, w2_ref, b2_ref)                           # (m, C2p) f32
        if add_residual:
            y = y + xp[1:H + 1, 1:W + 1, :].reshape(m, -1).astype(jnp.float32)
        o_ref[...] = y.astype(o_ref.dtype)

    return kernel


# ----------------------------------------------------------------------------
# parameters: random conv weights + folded inference BatchNorm, padded/packed
# ----------------------------------------------------------------------------
def init_bottleneck_params(key, c1, c2, shortcut=True, g=1, e=0.5, eps=1e-5,
                           dtype=jnp.float32):
    assert g == 1, "grouped conv not implemented"  # TODO(synk): groups > 1
    c_ = int(c2 * e)
    c1p = _ceil_to(max(c1, 1), LANE)
    c_p = _ceil_to(max(c_, 1), LANE)
    c2p = _ceil_to(max(c2, 1), LANE)
    keys = jax.random.split(key, 4)

    def conv_w(k, cin, cout):
        # HWIO layout, kaiming-ish scale
        return jax.random.normal(k, (3, 3, cin, cout), jnp.float32) * (9 * cin) ** -0.5

    def bn(k, c):
        k1, k2, k3, k4 = jax.random.split(k, 4)
        gamma = 1.0 + 0.1 * jax.random.normal(k1, (c,), jnp.float32)
        beta = 0.1 * jax.random.normal(k2, (c,), jnp.float32)
        mean = 0.1 * jax.random.normal(k3, (c,), jnp.float32)
        var = jnp.abs(1.0 + 0.1 * jax.random.normal(k4, (c,), jnp.float32))
        return gamma, beta, mean, var

    def fold_pad(w, gamma, beta, mean, var, cinp, coutp):
        # Fold BN scale (per output channel) into W's columns; keep only a bias.
        scale = gamma / jnp.sqrt(var + eps)
        bias = beta - mean * scale
        w = w * scale[None, None, None, :]
        kh, kw, cin, cout = w.shape
        w = jnp.pad(w, ((0, 0), (0, 0), (0, cinp - cin), (0, coutp - cout)))
        w = w.reshape(kh * kw * cinp, coutp).astype(dtype)        # (9*Cinp, Coutp)
        b = jnp.pad(bias, (0, coutp - cout)).reshape(1, coutp).astype(jnp.float32)
        return w, b

    w1, b1 = fold_pad(conv_w(keys[0], c1, c_), *bn(keys[1], c_), c1p, c_p)
    w2, b2 = fold_pad(conv_w(keys[2], c_, c2), *bn(keys[3], c2), c_p, c2p)
    add = bool(shortcut) and (c1 == c2)
    return dict(w1=w1, b1=b1, w2=w2, b2=b2, c1=c1, c2=c2, c1p=c1p, add=add)


# ----------------------------------------------------------------------------
# forward
# ----------------------------------------------------------------------------
def bottleneck_forward(x_nchw, params):
    w1, b1 = params["w1"], params["b1"]
    w2, b2 = params["w2"], params["b2"]
    c1, c2, c1p, add = params["c1"], params["c2"], params["c1p"], params["add"]
    c_p, c2p = w1.shape[1], w2.shape[1]
    cdt = w1.dtype
    isz = jnp.dtype(cdt).itemsize

    n, cin, H, W = x_nchw.shape
    assert cin == c1
    if add:
        assert c1p == c2p

    # NCHW -> NHWC, 1-pixel spatial halo (conv padding) + channel pad to 128-mult
    x = jnp.transpose(x_nchw, (0, 2, 3, 1)).astype(cdt)
    xp = jnp.pad(x, ((0, 0), (1, 1), (1, 1), (0, c1p - c1)))
    Hp, Wp = H + 2, W + 2
    m = H * W

    kernel = _make_bottleneck_kernel(H, W, add, cdt)

    # VMEM budget: double-buffered blocks + weights + in-kernel temporaries.
    blk_bytes = 2 * (Hp * Wp * c1p * isz + m * c2p * 4)
    w_bytes = 2 * (w1.size * isz + w2.size * isz + (b1.size + b2.size) * 4)
    tmp_bytes = (m * 9 * c1p + m * 9 * c_p + 2 * Hp * Wp * c_p
                 + 4 * m * max(c_p, c2p)) * 4
    vmem_limit = int(min(max(blk_bytes + w_bytes + tmp_bytes + (8 << 20), 32 << 20),
                         64 << 20))

    cost = pl.CostEstimate(
        flops=int(2 * n * m * (9 * c1p * c_p + 9 * c_p * c2p)),
        transcendentals=int(n * m * (c_p + c2p)),
        bytes_accessed=int(xp.size * isz + n * m * c2p * 4
                           + (w1.size + w2.size) * isz),
    )

    out = pl.pallas_call(
        kernel,
        out_shape=jax.ShapeDtypeStruct((n, m, c2p), x_nchw.dtype),
        grid=(n,),
        in_specs=[
            pl.BlockSpec((None, Hp, Wp, c1p), lambda i: (i, 0, 0, 0)),
            pl.BlockSpec(w1.shape, lambda i: (0, 0)),
            pl.BlockSpec(b1.shape, lambda i: (0, 0)),
            pl.BlockSpec(w2.shape, lambda i: (0, 0)),
            pl.BlockSpec(b2.shape, lambda i: (0, 0)),
        ],
        out_specs=pl.BlockSpec((None, m, c2p), lambda i: (i, 0, 0)),
        compiler_params=pltpu.CompilerParams(
            dimension_semantics=("parallel",),
            vmem_limit_bytes=vmem_limit,
        ),
        cost_estimate=cost,
    )(xp, w1, b1, w2, b2)

    out = out.reshape(n, H, W, c2p)[..., :c2]
    return jnp.transpose(out, (0, 3, 1, 2))


# ----------------------------------------------------------------------------
# pure-JAX reference (same folded/padded params) for a sanity check
# ----------------------------------------------------------------------------
def _reference_forward(x_nchw, params):
    w1, b1, w2, b2 = params["w1"], params["b1"], params["w2"], params["b2"]
    c1, c2, c1p = params["c1"], params["c2"], params["c1p"]
    c_p, c2p = w1.shape[1], w2.shape[1]
    x = jnp.transpose(x_nchw, (0, 2, 3, 1)).astype(jnp.float32)
    x = jnp.pad(x, ((0, 0), (0, 0), (0, 0), (0, c1p - c1)))
    w1h = w1.astype(jnp.float32).reshape(3, 3, c1p, c_p)
    w2h = w2.astype(jnp.float32).reshape(3, 3, c_p, c2p)

    def conv(u, w):
        return jax.lax.conv_general_dilated(
            u, w, window_strides=(1, 1), padding="SAME",
            dimension_numbers=("NHWC", "HWIO", "NHWC"),
            preferred_element_type=jnp.float32,
            precision=jax.lax.Precision.HIGHEST)

    def silu(v):
        return v * jax.nn.sigmoid(v)

    t = silu(conv(x, w1h) + b1)
    y = silu(conv(t, w2h) + b2)
    if params["add"]:
        y = y + x
    return jnp.transpose(y[..., :c2], (0, 3, 1, 2))


# ----------------------------------------------------------------------------
if __name__ == "__main__":
    key = jax.random.PRNGKey(0)
    c1 = c2 = 4
    N, H, W = 2, 16, 16

    params = init_bottleneck_params(key, c1, c2, shortcut=True, g=1, e=0.5)
    x = jax.random.normal(jax.random.fold_in(key, 123), (N, c1, H, W), jnp.float32)

    fwd = jax.jit(functools.partial(bottleneck_forward, params=params))
    out = jax.block_until_ready(fwd(x))

    assert out.shape == (N, c2, H, W), out.shape
    assert bool(jnp.all(jnp.isfinite(out)))

    ref = jax.block_until_ready(_reference_forward(x, params))
    max_err = float(jnp.max(jnp.abs(out - ref)))
    assert max_err < 2e-2, f"mismatch vs reference: {max_err}"

    print("KERNEL_OK")
</pallas_src>

<mosaic_0001>
module attributes {stable_mosaic.version = 11 : i64} {
  func.func @kernel(%arg0: i32, %arg1: memref<1x18x18x128xf32, #tpu.memory_space<vmem>>, %arg2: memref<1152x128xf32, #tpu.memory_space<vmem>>, %arg3: memref<1x128xf32, #tpu.memory_space<vmem>>, %arg4: memref<1152x128xf32, #tpu.memory_space<vmem>>, %arg5: memref<1x128xf32, #tpu.memory_space<vmem>>, %arg6: memref<1x256x128xf32, #tpu.memory_space<vmem>>) attributes {dimension_semantics = [#tpu.dimension_semantics<parallel>], iteration_bounds = array<i64: 2>, scalar_prefetch = 0 : i64, scratch_operands = 0 : i64, tpu.core_type = #tpu.core_type<tc>, window_params = [{transform_indices = @transform_0, window_bounds = array<i64: 1, 18, 18, 128>}, {pipeline_mode = #tpu.pipeline_mode<synchronous>, transform_indices = @transform_1, window_bounds = array<i64: 1152, 128>}, {pipeline_mode = #tpu.pipeline_mode<synchronous>, transform_indices = @transform_2, window_bounds = array<i64: 1, 128>}, {pipeline_mode = #tpu.pipeline_mode<synchronous>, transform_indices = @transform_3, window_bounds = array<i64: 1152, 128>}, {pipeline_mode = #tpu.pipeline_mode<synchronous>, transform_indices = @transform_4, window_bounds = array<i64: 1, 128>}, {transform_indices = @transform_5, window_bounds = array<i64: 1, 256, 128>}]} {
    %c0 = arith.constant 0 : index
    %c0_0 = arith.constant 0 : index
    %c0_1 = arith.constant 0 : index
    %c0_2 = arith.constant 0 : index
    %0 = vector.load %arg1[%c0, %c0_0, %c0_1, %c0_2] : memref<1x18x18x128xf32, #tpu.memory_space<vmem>>, vector<1x18x18x128xf32>
    %1 = vector.shape_cast %0 : vector<1x18x18x128xf32> to vector<18x18x128xf32>
    %2 = vector.extract_strided_slice %1 {offsets = [0, 0, 0], sizes = [16, 16, 128], strides = [1, 1, 1]} : vector<18x18x128xf32> to vector<16x16x128xf32>
    %3 = vector.shape_cast %2 : vector<16x16x128xf32> to vector<256x128xf32>
    %4 = vector.extract_strided_slice %1 {offsets = [0, 1, 0], sizes = [16, 16, 128], strides = [1, 1, 1]} : vector<18x18x128xf32> to vector<16x16x128xf32>
    %5 = vector.shape_cast %4 : vector<16x16x128xf32> to vector<256x128xf32>
    %6 = vector.extract_strided_slice %1 {offsets = [0, 2, 0], sizes = [16, 16, 128], strides = [1, 1, 1]} : vector<18x18x128xf32> to vector<16x16x128xf32>
    %7 = vector.shape_cast %6 : vector<16x16x128xf32> to vector<256x128xf32>
    %8 = vector.extract_strided_slice %1 {offsets = [1, 0, 0], sizes = [16, 16, 128], strides = [1, 1, 1]} : vector<18x18x128xf32> to vector<16x16x128xf32>
    %9 = vector.shape_cast %8 : vector<16x16x128xf32> to vector<256x128xf32>
    %10 = vector.extract_strided_slice %1 {offsets = [1, 1, 0], sizes = [16, 16, 128], strides = [1, 1, 1]} : vector<18x18x128xf32> to vector<16x16x128xf32>
    %11 = vector.shape_cast %10 : vector<16x16x128xf32> to vector<256x128xf32>
    %12 = vector.extract_strided_slice %1 {offsets = [1, 2, 0], sizes = [16, 16, 128], strides = [1, 1, 1]} : vector<18x18x128xf32> to vector<16x16x128xf32>
    %13 = vector.shape_cast %12 : vector<16x16x128xf32> to vector<256x128xf32>
    %14 = vector.extract_strided_slice %1 {offsets = [2, 0, 0], sizes = [16, 16, 128], strides = [1, 1, 1]} : vector<18x18x128xf32> to vector<16x16x128xf32>
    %15 = vector.shape_cast %14 : vector<16x16x128xf32> to vector<256x128xf32>
    %16 = vector.extract_strided_slice %1 {offsets = [2, 1, 0], sizes = [16, 16, 128], strides = [1, 1, 1]} : vector<18x18x128xf32> to vector<16x16x128xf32>
    %17 = vector.shape_cast %16 : vector<16x16x128xf32> to vector<256x128xf32>
    %18 = vector.extract_strided_slice %1 {offsets = [2, 2, 0], sizes = [16, 16, 128], strides = [1, 1, 1]} : vector<18x18x128xf32> to vector<16x16x128xf32>
    %19 = vector.shape_cast %18 : vector<16x16x128xf32> to vector<256x128xf32>
    %20 = tpu.concatenate %3, %5, %7, %9, %11, %13, %15, %17, %19 in 1 : vector<256x128xf32>, vector<256x128xf32>, vector<256x128xf32>, vector<256x128xf32>, vector<256x128xf32>, vector<256x128xf32>, vector<256x128xf32>, vector<256x128xf32>, vector<256x128xf32> -> vector<256x1152xf32>
    %c0_3 = arith.constant 0 : index
    %c0_4 = arith.constant 0 : index
    %21 = vector.load %arg2[%c0_3, %c0_4] : memref<1152x128xf32, #tpu.memory_space<vmem>>, vector<1152x128xf32>
    %cst = arith.constant dense<0.000000e+00> : vector<256x128xf32>
    %22 = tpu.matmul %20, %21, %cst {dimension_numbers = #tpu.dot_dimension_numbers<[1], [0], [0], [1], [0, 0, 1, 1], [], []>} : vector<256x1152xf32>, vector<1152x128xf32>, vector<256x128xf32> -> vector<256x128xf32>
    %c0_5 = arith.constant 0 : index
    %c0_6 = arith.constant 0 : index
    %23 = vector.load %arg3[%c0_5, %c0_6] : memref<1x128xf32, #tpu.memory_space<vmem>>, vector<1x128xf32>
    %24 = vector.broadcast %23 : vector<1x128xf32> to vector<256x128xf32>
    %25 = arith.addf %22, %24 : vector<256x128xf32>
    %cst_7 = arith.constant 0.000000e+00 : f32
    %26 = vector.broadcast %cst_7 : f32 to vector<256x128xf32>
    %27 = arith.subf %26, %25 : vector<256x128xf32>
    %28 = math.exp %27 : vector<256x128xf32>
    %cst_8 = arith.constant 1.000000e+00 : f32
    %29 = vector.broadcast %cst_8 : f32 to vector<256x128xf32>
    %30 = arith.addf %29, %28 : vector<256x128xf32>
    %31 = tpu.reciprocal %30 {approx = true} : vector<256x128xf32> -> vector<256x128xf32>
    %32 = arith.mulf %25, %31 : vector<256x128xf32>
    %33 = vector.shape_cast %32 : vector<256x128xf32> to vector<16x16x128xf32>
    %cst_9 = arith.constant 0.000000e+00 : f32
    %34 = vector.broadcast %cst_9 : f32 to vector<1x16x128xf32>
    %cst_10 = arith.constant 0.000000e+00 : f32
    %35 = vector.broadcast %cst_10 : f32 to vector<18x1x128xf32>
    %36 = tpu.concatenate %34, %33, %34 in 0 : vector<1x16x128xf32>, vector<16x16x128xf32>, vector<1x16x128xf32> -> vector<18x16x128xf32>
    %37 = tpu.concatenate %35, %36, %35 in 1 : vector<18x1x128xf32>, vector<18x16x128xf32>, vector<18x1x128xf32> -> vector<18x18x128xf32>
    %38 = vector.extract_strided_slice %37 {offsets = [0, 0, 0], sizes = [16, 16, 128], strides = [1, 1, 1]} : vector<18x18x128xf32> to vector<16x16x128xf32>
    %39 = vector.shape_cast %38 : vector<16x16x128xf32> to vector<256x128xf32>
    %40 = vector.extract_strided_slice %37 {offsets = [0, 1, 0], sizes = [16, 16, 128], strides = [1, 1, 1]} : vector<18x18x128xf32> to vector<16x16x128xf32>
    %41 = vector.shape_cast %40 : vector<16x16x128xf32> to vector<256x128xf32>
    %42 = vector.extract_strided_slice %37 {offsets = [0, 2, 0], sizes = [16, 16, 128], strides = [1, 1, 1]} : vector<18x18x128xf32> to vector<16x16x128xf32>
    %43 = vector.shape_cast %42 : vector<16x16x128xf32> to vector<256x128xf32>
    %44 = vector.extract_strided_slice %37 {offsets = [1, 0, 0], sizes = [16, 16, 128], strides = [1, 1, 1]} : vector<18x18x128xf32> to vector<16x16x128xf32>
    %45 = vector.shape_cast %44 : vector<16x16x128xf32> to vector<256x128xf32>
    %46 = vector.extract_strided_slice %37 {offsets = [1, 1, 0], sizes = [16, 16, 128], strides = [1, 1, 1]} : vector<18x18x128xf32> to vector<16x16x128xf32>
    %47 = vector.shape_cast %46 : vector<16x16x128xf32> to vector<256x128xf32>
    %48 = vector.extract_strided_slice %37 {offsets = [1, 2, 0], sizes = [16, 16, 128], strides = [1, 1, 1]} : vector<18x18x128xf32> to vector<16x16x128xf32>
    %49 = vector.shape_cast %48 : vector<16x16x128xf32> to vector<256x128xf32>
    %50 = vector.extract_strided_slice %37 {offsets = [2, 0, 0], sizes = [16, 16, 128], strides = [1, 1, 1]} : vector<18x18x128xf32> to vector<16x16x128xf32>
    %51 = vector.shape_cast %50 : vector<16x16x128xf32> to vector<256x128xf32>
    %52 = vector.extract_strided_slice %37 {offsets = [2, 1, 0], sizes = [16, 16, 128], strides = [1, 1, 1]} : vector<18x18x128xf32> to vector<16x16x128xf32>
    %53 = vector.shape_cast %52 : vector<16x16x128xf32> to vector<256x128xf32>
    %54 = vector.extract_strided_slice %37 {offsets = [2, 2, 0], sizes = [16, 16, 128], strides = [1, 1, 1]} : vector<18x18x128xf32> to vector<16x16x128xf32>
    %55 = vector.shape_cast %54 : vector<16x16x128xf32> to vector<256x128xf32>
    %56 = tpu.concatenate %39, %41, %43, %45, %47, %49, %51, %53, %55 in 1 : vector<256x128xf32>, vector<256x128xf32>, vector<256x128xf32>, vector<256x128xf32>, vector<256x128xf32>, vector<256x128xf32>, vector<256x128xf32>, vector<256x128xf32>, vector<256x128xf32> -> vector<256x1152xf32>
    %c0_11 = arith.constant 0 : index
    %c0_12 = arith.constant 0 : index
    %57 = vector.load %arg4[%c0_11, %c0_12] : memref<1152x128xf32, #tpu.memory_space<vmem>>, vector<1152x128xf32>
    %cst_13 = arith.constant dense<0.000000e+00> : vector<256x128xf32>
    %58 = tpu.matmul %56, %57, %cst_13 {dimension_numbers = #tpu.dot_dimension_numbers<[1], [0], [0], [1], [0, 0, 1, 1], [], []>} : vector<256x1152xf32>, vector<1152x128xf32>, vector<256x128xf32> -> vector<256x128xf32>
    %c0_14 = arith.constant 0 : index
    %c0_15 = arith.constant 0 : index
    %59 = vector.load %arg5[%c0_14, %c0_15] : memref<1x128xf32, #tpu.memory_space<vmem>>, vector<1x128xf32>
    %60 = vector.broadcast %59 : vector<1x128xf32> to vector<256x128xf32>
    %61 = arith.addf %58, %60 : vector<256x128xf32>
    %cst_16 = arith.constant 0.000000e+00 : f32
    %62 = vector.broadcast %cst_16 : f32 to vector<256x128xf32>
    %63 = arith.subf %62, %61 : vector<256x128xf32>
    %64 = math.exp %63 : vector<256x128xf32>
    %cst_17 = arith.constant 1.000000e+00 : f32
    %65 = vector.broadcast %cst_17 : f32 to vector<256x128xf32>
    %66 = arith.addf %65, %64 : vector<256x128xf32>
    %67 = tpu.reciprocal %66 {approx = true} : vector<256x128xf32> -> vector<256x128xf32>
    %68 = arith.mulf %61, %67 : vector<256x128xf32>
    %69 = vector.extract_strided_slice %1 {offsets = [1, 1, 0], sizes = [16, 16, 128], strides = [1, 1, 1]} : vector<18x18x128xf32> to vector<16x16x128xf32>
    %70 = vector.shape_cast %69 : vector<16x16x128xf32> to vector<256x128xf32>
    %71 = arith.addf %68, %70 : vector<256x128xf32>
    %c0_18 = arith.constant 0 : index
    %c0_19 = arith.constant 0 : index
    %c0_20 = arith.constant 0 : index
    %72 = vector.load %arg6[%c0_18, %c0_19, %c0_20] : memref<1x256x128xf32, #tpu.memory_space<vmem>>, vector<1x256x128xf32>
    %73 = vector.shape_cast %72 : vector<1x256x128xf32> to vector<256x128xf32>
    %74 = vector.shape_cast %71 : vector<256x128xf32> to vector<1x256x128xf32>
    tpu.vector_store %arg6[%c0_18, %c0_19, %c0_20], %74 {strides = array<i32>} : memref<1x256x128xf32, #tpu.memory_space<vmem>>, vector<1x256x128xf32>,
    return
  }
  func.func @transform_0(%arg0: i32) -> (i32, i32, i32, i32) {
    %c0_i32 = arith.constant 0 : i32
    %c0_i32_0 = arith.constant 0 : i32
    %c0_i32_1 = arith.constant 0 : i32
    %c0_i32_2 = arith.constant 0 : i32
    return %arg0, %c0_i32, %c0_i32_0, %c0_i32_1 : i32, i32, i32, i32
  }
  func.func @transform_1(%arg0: i32) -> (i32, i32) {
    %c0_i32 = arith.constant 0 : i32
    %c0_i32_0 = arith.constant 0 : i32
    %c0_i32_1 = arith.constant 0 : i32
    return %c0_i32, %c0_i32_0 : i32, i32
  }
  func.func @transform_2(%arg0: i32) -> (i32, i32) {
    %c0_i32 = arith.constant 0 : i32
    %c0_i32_0 = arith.constant 0 : i32
    %c0_i32_1 = arith.constant 0 : i32
    return %c0_i32, %c0_i32_0 : i32, i32
  }
  func.func @transform_3(%arg0: i32) -> (i32, i32) {
    %c0_i32 = arith.constant 0 : i32
    %c0_i32_0 = arith.constant 0 : i32
    %c0_i32_1 = arith.constant 0 : i32
    return %c0_i32, %c0_i32_0 : i32, i32
  }
  func.func @transform_4(%arg0: i32) -> (i32, i32) {
    %c0_i32 = arith.constant 0 : i32
    %c0_i32_0 = arith.constant 0 : i32
    %c0_i32_1 = arith.constant 0 : i32
    return %c0_i32, %c0_i32_0 : i32, i32
  }
  func.func @transform_5(%arg0: i32) -> (i32, i32, i32) {
    %c0_i32 = arith.constant 0 : i32
    %c0_i32_0 = arith.constant 0 : i32
    %c0_i32_1 = arith.constant 0 : i32
    return %arg0, %c0_i32, %c0_i32_0 : i32, i32, i32
  }
}

</mosaic_0001>

<llo_original>
// kernel: bottleneck_forward.1
$region0: #{bottleneck_forward.1}
  #allocation0 [shape = 'u32[]', space=smem, size = 0x4, offset = 0x4, fixed_abs, tag = 'smem constant byte address 0x4 - core index']
  #allocation1 [shape = 'u32[144,128]{1,0:T(1,128)}', space=vmem, size = 0x12000, scoped, tag = 'internal scratch']
  %s0 = inlined_call_operand.vmem [shape: f32[2,18,18,128], index: 0, kind: input, shape index: {}]
  %s1 = inlined_call_operand.hbm [shape: f32[1152,128], index: 1, kind: input, shape index: {}]
  %s2 = inlined_call_operand.vmem [shape: f32[1,128], index: 2, kind: input, shape index: {}]
  %s3 = inlined_call_operand.vmem [shape: f32[1152,128], index: 3, kind: input, shape index: {}]
  %s4 = inlined_call_operand.vmem [shape: f32[1,128], index: 4, kind: input, shape index: {}]
  %s5 = inlined_call_operand.vmem [shape: f32[2,256,128], index: 5, kind: output, shape index: {}]
  %s6 = sld [smem:[#allocation0]]
  $region57: #{bottleneck_forward.1} parent=0
    _
  %s8 = ssub.s32 1, %s6
  %s9 = scalar_select 0, %s8, %s6
  $region1: #{bottleneck_forward.1} parent=0
    #allocation2 [shape = 'u8[589824]{0}', space=vmem, size = 0x90000, scoped, tag = 'input window, operand 1, single buffered']
    #allocation3 [shape = 's32[2]{0}', space=sflag, size = 0x8, scoped, tag = 'scoped memory for bottleneck_forward.1']
    %10 = vsyncpa [#allocation3], 0
    loop: start=0, step=1, limit=4
    $region2: #{bottleneck_forward.1} parent=1 // loop_pre_header
      _
    $region3: #{bottleneck_forward.1} parent=1 // loop_header
      %s12 = sphi 0, %s16
      %p13 = scmp.ge.s32.totalorder %s12, 4
      %s22 = sphi 0, %s24
      %s25 = sphi 0, %s22
      %s26 = sphi 0, %s25
      %s42 = sphi 0, %s26
      %s46 = sphi 0, %s46
      %s48 = sphi 0, %s46
      %s49 = sphi 0, %s48
      %s63 = sphi 0, %s49
      %s67 = sphi 0, %s67
      %s69 = sphi 0, %s67
      %s70 = sphi 0, %s69
      %s84 = sphi 0, %s70
      %s88 = sphi 0, %s88
      %s90 = sphi 0, %s88
      %s91 = sphi 0, %s90
      %s105 = sphi 0, %s91
      %s109 = sphi 0, %s109
      %s111 = sphi 0, %s109
      %s112 = sphi 0, %s111
      %s126 = sphi 0, %s112
      %s132 = sphi 0, %s134
      %s135 = sphi 0, %s132
      %s136 = sphi 0, %s135
      %s152 = sphi 0, %s136
    $region4: #{bottleneck_forward.1} parent=1 // loop_header_branch
      %15 = sbr.rel (%p13) target = $region8
    $region5: #{bottleneck_forward.1} parent=1 // loop_body
      %s17 = ssub.s32 %s12, 1
      %s18 = ssub.s32 %s12, 2
      %s19 = sadd.s32 %s12, 1
      %s20 = ssub.s32 %s12, %s19
      %p21 = scmp.eq.s32.totalorder %s20, 0
      %s23 = sadd.s32 %s22, 1
      %s24 = scalar_select %p21, %s22, %s23
      %p27 = pneg %p21
      %p28 = scmp.eq.s32.totalorder %s12, 1
      %p29 = por %p27, %p28
      %p30 = scmp.ne.s32.totalorder %s22, %s25
      %p31 = scmp.eq.s32.totalorder %s12, 0
      %p32 = por %p30, %p31
      %p33 = scmp.ne.s32.totalorder %s22, %s25
      %p34 = scmp.eq.s32.totalorder %s17, 1
      %p35 = por %p33, %p34
      %p36 = scmp.ne.s32.totalorder %s25, %s26
      %p37 = scmp.eq.s32.totalorder %s17, 0
      %p38 = por %p36, %p37
      %p39 = scmp.ne.s32.totalorder %s25, %s26
      %p40 = scmp.eq.s32.totalorder %s18, 1
      %p41 = por %p39, %p40
      %p43 = scmp.ne.s32.totalorder %s26, %s42
      %p44 = scmp.eq.s32.totalorder %s18, 0
      %p45 = por %p43, %p44
      %s47 = sadd.s32 %s46, 1
      %p50 = scmp.eq.s32.totalorder %s12, 1
      %p51 = scmp.ne.s32.totalorder %s46, %s48
      %p52 = scmp.eq.s32.totalorder %s12, 0
      %p53 = por %p51, %p52
      %p54 = scmp.ne.s32.totalorder %s46, %s48
      %p55 = scmp.eq.s32.totalorder %s17, 1
      %p56 = por %p54, %p55
      %p57 = scmp.ne.s32.totalorder %s48, %s49
      %p58 = scmp.eq.s32.totalorder %s17, 0
      %p59 = por %p57, %p58
      %p60 = scmp.ne.s32.totalorder %s48, %s49
      %p61 = scmp.eq.s32.totalorder %s18, 1
      %p62 = por %p60, %p61
      %p64 = scmp.ne.s32.totalorder %s49, %s63
      %p65 = scmp.eq.s32.totalorder %s18, 0
      %p66 = por %p64, %p65
      %s68 = sadd.s32 %s67, 1
      %p71 = scmp.eq.s32.totalorder %s12, 1
      %p72 = scmp.ne.s32.totalorder %s67, %s69
      %p73 = scmp.eq.s32.totalorder %s12, 0
      %p74 = por %p72, %p73
      %p75 = scmp.ne.s32.totalorder %s67, %s69
      %p76 = scmp.eq.s32.totalorder %s17, 1
      %p77 = por %p75, %p76
      %p78 = scmp.ne.s32.totalorder %s69, %s70
      %p79 = scmp.eq.s32.totalorder %s17, 0
      %p80 = por %p78, %p79
      %p81 = scmp.ne.s32.totalorder %s69, %s70
      %p82 = scmp.eq.s32.totalorder %s18, 1
      %p83 = por %p81, %p82
      %p85 = scmp.ne.s32.totalorder %s70, %s84
      %p86 = scmp.eq.s32.totalorder %s18, 0
      %p87 = por %p85, %p86
      %s89 = sadd.s32 %s88, 1
      %p92 = scmp.eq.s32.totalorder %s12, 1
      %p93 = scmp.ne.s32.totalorder %s88, %s90
      %p94 = scmp.eq.s32.totalorder %s12, 0
      %p95 = por %p93, %p94
      %p96 = scmp.ne.s32.totalorder %s88, %s90
      %p97 = scmp.eq.s32.totalorder %s17, 1
      %p98 = por %p96, %p97
      %p99 = scmp.ne.s32.totalorder %s90, %s91
      %p100 = scmp.eq.s32.totalorder %s17, 0
      %p101 = por %p99, %p100
      %p102 = scmp.ne.s32.totalorder %s90, %s91
      %p103 = scmp.eq.s32.totalorder %s18, 1
      %p104 = por %p102, %p103
      %p106 = scmp.ne.s32.totalorder %s91, %s105
      %p107 = scmp.eq.s32.totalorder %s18, 0
      %p108 = por %p106, %p107
      %s110 = sadd.s32 %s109, 1
      %p113 = scmp.eq.s32.totalorder %s12, 1
      %p114 = scmp.ne.s32.totalorder %s109, %s111
      %p115 = scmp.eq.s32.totalorder %s12, 0
      %p116 = por %p114, %p115
      %p117 = scmp.ne.s32.totalorder %s109, %s111
      %p118 = scmp.eq.s32.totalorder %s17, 1
      %p119 = por %p117, %p118
      %p120 = scmp.ne.s32.totalorder %s111, %s112
      %p121 = scmp.eq.s32.totalorder %s17, 0
      %p122 = por %p120, %p121
      %p123 = scmp.ne.s32.totalorder %s111, %s112
      %p124 = scmp.eq.s32.totalorder %s18, 1
      %p125 = por %p123, %p124
      %p127 = scmp.ne.s32.totalorder %s112, %s126
      %p128 = scmp.eq.s32.totalorder %s18, 0
      %p129 = por %p127, %p128
      %s130 = ssub.s32 %s12, %s19
      %p131 = scmp.eq.s32.totalorder %s130, 0
      %s133 = sadd.s32 %s132, 1
      %s134 = scalar_select %p131, %s132, %s133
      %p137 = pneg %p131
      %p138 = scmp.eq.s32.totalorder %s12, 1
      %p139 = por %p137, %p138
      %p140 = scmp.ne.s32.totalorder %s132, %s135
      %p141 = scmp.eq.s32.totalorder %s12, 0
      %p142 = por %p140, %p141
      %p143 = scmp.ne.s32.totalorder %s132, %s135
      %p144 = scmp.eq.s32.totalorder %s17, 1
      %p145 = por %p143, %p144
      %p146 = scmp.ne.s32.totalorder %s135, %s136
      %p147 = scmp.eq.s32.totalorder %s17, 0
      %p148 = por %p146, %p147
      %p149 = scmp.ne.s32.totalorder %s135, %s136
      %p150 = scmp.eq.s32.totalorder %s18, 1
      %p151 = por %p149, %p150
      %p153 = scmp.ne.s32.totalorder %s136, %s152
      %p154 = scmp.eq.s32.totalorder %s18, 0
      %p155 = por %p153, %p154
      %p156 = scmp.le.s32.totalorder 1, %s12
      %p157 = scmp.lt.s32.totalorder %s12, 3
      %p158 = pnand %p156, %p157
      %p159 = pneg %p158
      // Predicated region
      $region9: #{bottleneck_forward.1} parent=5 // pred_check
        _
      $region10: #{bottleneck_forward.1} parent=5 // pred_check_branch
        %161 = sbr.rel (%p158) target = $region12
      $region11: #{bottleneck_forward.1} parent=5 // pred_region
        %s162 = ssub.s32 %s12, 1
        // Predicated region
        $region13: #{bottleneck_forward.1} parent=11 // pred_check
          %p163 = pneg %p59
        $region14: #{bottleneck_forward.1} parent=11 // pred_check_branch
          %165 = sbr.rel (%p163) target = $region16
        $region15: #{bottleneck_forward.1} parent=11 // pred_region
          %s167 = ssub.s32 18432, 18432
          %168 = vsyncadd [#allocation3], %s167
          %s169 = sshll.u32 [#allocation2], 4
          %s170 = int_to_ptr.vmem [resolvable:$true] %s169
          %175 = dma.hbm_to_vmem [thread:$0]  %s1, 18432, %s170, [#allocation3], 128, 128, 8
        $region16: #{bottleneck_forward.1} parent=11 // pred_fallthru
          _
        // Predicated region
        $region17: #{bottleneck_forward.1} parent=11 // pred_check
          %p176 = pneg %p80
        $region18: #{bottleneck_forward.1} parent=11 // pred_check_branch
          %178 = sbr.rel (%p176) target = $region20
        $region19: #{bottleneck_forward.1} parent=11 // pred_region
          _
        $region20: #{bottleneck_forward.1} parent=11 // pred_fallthru
          _
        // Predicated region
        $region21: #{bottleneck_forward.1} parent=11 // pred_check
          %p179 = pneg %p101
        $region22: #{bottleneck_forward.1} parent=11 // pred_check_branch
          %181 = sbr.rel (%p179) target = $region24
        $region23: #{bottleneck_forward.1} parent=11 // pred_region
          _
        $region24: #{bottleneck_forward.1} parent=11 // pred_fallthru
          _
        // Predicated region
        $region25: #{bottleneck_forward.1} parent=11 // pred_check
          %p182 = pneg %p122
        $region26: #{bottleneck_forward.1} parent=11 // pred_check_branch
          %184 = sbr.rel (%p182) target = $region28
        $region27: #{bottleneck_forward.1} parent=11 // pred_region
          _
        $region28: #{bottleneck_forward.1} parent=11 // pred_fallthru
          _
      $region12: #{bottleneck_forward.1} parent=5 // pred_fallthru
        _
      %p185 = scmp.lt.s32.totalorder %s12, 2
      // Predicated region
      $region29: #{bottleneck_forward.1} parent=5 // pred_check
        %p186 = pneg %p185
      $region30: #{bottleneck_forward.1} parent=5 // pred_check_branch
        %188 = sbr.rel (%p186) target = $region32
      $region31: #{bottleneck_forward.1} parent=5 // pred_region
        // Predicated region
        $region33: #{bottleneck_forward.1} parent=31 // pred_check
          %p189 = pneg %p32
        $region34: #{bottleneck_forward.1} parent=31 // pred_check_branch
          %191 = sbr.rel (%p189) target = $region36
        $region35: #{bottleneck_forward.1} parent=31 // pred_region
          %p192 = scmp.lt.s32.totalorder %s12, 1
          %s193 = scalar_select %p192, %s12, 1
          %s194 = smul.addr %s193, 54
          %s195 = smul.addr %s194, 8
          %s196 = scalar_lea.vmem %s0, %s195
        $region36: #{bottleneck_forward.1} parent=31 // pred_fallthru
          _
      $region32: #{bottleneck_forward.1} parent=5 // pred_fallthru
        _
      %p197 = scmp.le.s32.totalorder 1, %s12
      %p198 = scmp.lt.s32.totalorder %s12, 3
      %p199 = pnand %p197, %p198
      %p200 = pneg %p199
      // Predicated region
      $region37: #{bottleneck_forward.1} parent=5 // pred_check
        _
      $region38: #{bottleneck_forward.1} parent=5 // pred_check_branch
        %202 = sbr.rel (%p199) target = $region40
      $region39: #{bottleneck_forward.1} parent=5 // pred_region
        %s203 = ssub.s32 %s12, 1
        // Predicated region
        $region41: #{bottleneck_forward.1} parent=39 // pred_check
          %p204 = pneg %p59
        $region42: #{bottleneck_forward.1} parent=39 // pred_check_branch
          %206 = sbr.rel (%p204) target = $region44
        $region43: #{bottleneck_forward.1} parent=39 // pred_region
          %207 = dma.done [#allocation3], 18432
        $region44: #{bottleneck_forward.1} parent=39 // pred_fallthru
          _
        %p208 = scmp.lt.s32.totalorder %s17, 1
        %s209 = scalar_select %p208, %s17, 1
        %s210 = smul.addr %s209, 54
        %s211 = smul.addr %s210, 8
        %s212 = scalar_lea.vmem %s0, %s211
        %p213 = pneg %p38
        %p214 = pneg %p35
        %p215 = pneg %p59
        %p216 = pneg %p56
        %p217 = pneg %p80
        %p218 = pneg %p77
        %p219 = pneg %p101
        %p220 = pneg %p98
        %p221 = pneg %p122
        %p222 = pneg %p119
        %p223 = pneg %p148
        %p224 = pneg %p145
        %p225 = scmp.lt.s32.totalorder %s17, 1
        %s226 = scalar_select %p225, %s17, 1
        %s227 = smul.addr %s226, 32
        %s228 = smul.addr %s227, 8
        %s229 = scalar_lea.vmem %s5, %s228
        %p230 = scmp.lt.s32.totalorder %s17, 1
        %s231 = scalar_select %p230, %s17, 1
        %s232 = smul.addr %s231, 54
        %s233 = smul.addr %s232, 8
        %s234 = scalar_lea.vmem %s0, %s233
        %p235 = scmp.lt.s32.totalorder %s17, 1
        %s236 = scalar_select %p235, %s17, 1
        %s237 = smul.addr %s236, 32
        %s238 = smul.addr %s237, 8
        %s239 = scalar_lea.vmem %s5, %s238
        %v240 = vld [vmem:[%s234] sm:$0xff]
        %v241 = vld [vmem:[%s234 + $0x8] sm:$0xff]
        %v242 = vld [vmem:[%s234 + $0x10] sm:$0x3]
        %v243 = vld [vmem:[%s234 + $0x18] sm:$0xff]
        %v244 = vld [vmem:[%s234 + $0x20] sm:$0xff]
        %v245 = vld [vmem:[%s234 + $0x28] sm:$0x3]
        %v246 = vld [vmem:[%s234 + $0x30] sm:$0xff]
        %v247 = vld [vmem:[%s234 + $0x38] sm:$0xff]
        %v248 = vld [vmem:[%s234 + $0x40] sm:$0x3]
        %v249 = vld [vmem:[%s234 + $0x48] sm:$0xff]
        %v250 = vld [vmem:[%s234 + $0x50] sm:$0xff]
        %v251 = vld [vmem:[%s234 + $0x58] sm:$0x3]
        %v252 = vld [vmem:[%s234 + $0x60] sm:$0xff]
        %v253 = vld [vmem:[%s234 + $0x68] sm:$0xff]
        %v254 = vld [vmem:[%s234 + $0x70] sm:$0x3]
        %v255 = vld [vmem:[%s234 + $0x78] sm:$0xff]
        %v256 = vld [vmem:[%s234 + $0x80] sm:$0xff]
        %v257 = vld [vmem:[%s234 + $0x88] sm:$0x3]
        %v258 = vld [vmem:[%s234 + $0x90] sm:$0xff]
        %v259 = vld [vmem:[%s234 + $0x98] sm:$0xff]
        %v260 = vld [vmem:[%s234 + $0xa0] sm:$0x3]
        %v261 = vld [vmem:[%s234 + $0xa8] sm:$0xff]
        %v262 = vld [vmem:[%s234 + $0xb0] sm:$0xff]
        %v263 = vld [vmem:[%s234 + $0xb8] sm:$0x3]
        %v264 = vld [vmem:[%s234 + $0xc0] sm:$0xff]
        %v265 = vld [vmem:[%s234 + $0xc8] sm:$0xff]
        %v266 = vld [vmem:[%s234 + $0xd0] sm:$0x3]
        %v267 = vld [vmem:[%s234 + $0xd8] sm:$0xff]
        %v268 = vld [vmem:[%s234 + $0xe0] sm:$0xff]
        %v269 = vld [vmem:[%s234 + $0xe8] sm:$0x3]
        %v270 = vld [vmem:[%s234 + $0xf0] sm:$0xff]
        %v271 = vld [vmem:[%s234 + $0xf8] sm:$0xff]
        %v272 = vld [vmem:[%s234 + $0x100] sm:$0x3]
        %v273 = vld [vmem:[%s234 + $0x108] sm:$0xff]
        %v274 = vld [vmem:[%s234 + $0x110] sm:$0xff]
        %v275 = vld [vmem:[%s234 + $0x118] sm:$0x3]
        %v276 = vld [vmem:[%s234 + $0x120] sm:$0xff]
        %v277 = vld [vmem:[%s234 + $0x128] sm:$0xff]
        %v278 = vld [vmem:[%s234 + $0x130] sm:$0x3]
        %v279 = vld [vmem:[%s234 + $0x138] sm:$0xff]
        %v280 = vld [vmem:[%s234 + $0x140] sm:$0xff]
        %v281 = vld [vmem:[%s234 + $0x148] sm:$0x3]
        %v282 = vld [vmem:[%s234 + $0x150] sm:$0xff]
        %v283 = vld [vmem:[%s234 + $0x158] sm:$0xff]
        %v284 = vld [vmem:[%s234 + $0x160] sm:$0x3]
        %v285 = vld [vmem:[%s234 + $0x168] sm:$0xff]
        %v286 = vld [vmem:[%s234 + $0x170] sm:$0xff]
        %v287 = vld [vmem:[%s234 + $0x178] sm:$0x3]
        %v288 = vld [vmem:[%s234 + $0x180] sm:$0xff]
        %v289 = vld [vmem:[%s234 + $0x188] sm:$0xff]
        %v290 = vld [vmem:[%s234 + $0x190] sm:$0x3]
        %v291 = vld [vmem:[%s234 + $0x198] sm:$0xff]
        %v292 = vld [vmem:[%s234 + $0x1a0] sm:$0xff]
        %v293 = vld [vmem:[%s234 + $0x1a8] sm:$0x3]
        %vm342 = vcmask 1046528
        %v343 = vrot.slane %v240, 1
        %v344 = vrot.slane %v241, 1
        %v345 = vsel %vm342, %v343, %v344
        %v346 = vrot.slane %v242, 1
        %v347 = vsel %vm342, %v344, %v346
        %v348 = vrot.slane %v243, 1
        %v349 = vrot.slane %v244, 1
        %v350 = vsel %vm342, %v348, %v349
        %v351 = vrot.slane %v245, 1
        %v352 = vsel %vm342, %v349, %v351
        %v353 = vrot.slane %v246, 1
        %v354 = vrot.slane %v247, 1
        %v355 = vsel %vm342, %v353, %v354
        %v356 = vrot.slane %v248, 1
        %v357 = vsel %vm342, %v354, %v356
        %v358 = vrot.slane %v249, 1
        %v359 = vrot.slane %v250, 1
        %v360 = vsel %vm342, %v358, %v359
        %v361 = vrot.slane %v251, 1
        %v362 = vsel %vm342, %v359, %v361
        %v363 = vrot.slane %v252, 1
        %v364 = vrot.slane %v253, 1
        %v365 = vsel %vm342, %v363, %v364
        %v366 = vrot.slane %v254, 1
        %v367 = vsel %vm342, %v364, %v366
        %v368 = vrot.slane %v255, 1
        %v369 = vrot.slane %v256, 1
        %v370 = vsel %vm342, %v368, %v369
        %v371 = vrot.slane %v257, 1
        %v372 = vsel %vm342, %v369, %v371
        %v373 = vrot.slane %v258, 1
        %v374 = vrot.slane %v259, 1
        %v375 = vsel %vm342, %v373, %v374
        %v376 = vrot.slane %v260, 1
        %v377 = vsel %vm342, %v374, %v376
        %v378 = vrot.slane %v261, 1
        %v379 = vrot.slane %v262, 1
        %v380 = vsel %vm342, %v378, %v379
        %v381 = vrot.slane %v263, 1
        %v382 = vsel %vm342, %v379, %v381
        %v383 = vrot.slane %v264, 1
        %v384 = vrot.slane %v265, 1
        %v385 = vsel %vm342, %v383, %v384
        %v386 = vrot.slane %v266, 1
        %v387 = vsel %vm342, %v384, %v386
        %v388 = vrot.slane %v267, 1
        %v389 = vrot.slane %v268, 1
        %v390 = vsel %vm342, %v388, %v389
        %v391 = vrot.slane %v269, 1
        %v392 = vsel %vm342, %v389, %v391
        %v393 = vrot.slane %v270, 1
        %v394 = vrot.slane %v271, 1
        %v395 = vsel %vm342, %v393, %v394
        %v396 = vrot.slane %v272, 1
        %v397 = vsel %vm342, %v394, %v396
        %v398 = vrot.slane %v273, 1
        %v399 = vrot.slane %v274, 1
        %v400 = vsel %vm342, %v398, %v399
        %v401 = vrot.slane %v275, 1
        %v402 = vsel %vm342, %v399, %v401
        %v403 = vrot.slane %v276, 1
        %v404 = vrot.slane %v277, 1
        %v405 = vsel %vm342, %v403, %v404
        %v406 = vrot.slane %v278, 1
        %v407 = vsel %vm342, %v404, %v406
        %v408 = vrot.slane %v279, 1
        %v409 = vrot.slane %v280, 1
        %v410 = vsel %vm342, %v408, %v409
        %v411 = vrot.slane %v281, 1
        %v412 = vsel %vm342, %v409, %v411
        %v413 = vrot.slane %v282, 1
        %v414 = vrot.slane %v283, 1
        %v415 = vsel %vm342, %v413, %v414
        %v416 = vrot.slane %v284, 1
        %v417 = vsel %vm342, %v414, %v416
        %v418 = vrot.slane %v285, 1
        %v419 = vrot.slane %v286, 1
        %v420 = vsel %vm342, %v418, %v419
        %v421 = vrot.slane %v287, 1
        %v422 = vsel %vm342, %v419, %v421
        %vm455 = vcmask 1045504
        %v456 = vrot.slane %v240, 2
        %v457 = vrot.slane %v241, 2
        %v458 = vsel %vm455, %v456, %v457
        %v459 = vrot.slane %v242, 2
        %v460 = vsel %vm455, %v457, %v459
        %v461 = vrot.slane %v243, 2
        %v462 = vrot.slane %v244, 2
        %v463 = vsel %vm455, %v461, %v462
        %v464 = vrot.slane %v245, 2
        %v465 = vsel %vm455, %v462, %v464
        %v466 = vrot.slane %v246, 2
        %v467 = vrot.slane %v247, 2
        %v468 = vsel %vm455, %v466, %v467
        %v469 = vrot.slane %v248, 2
        %v470 = vsel %vm455, %v467, %v469
        %v471 = vrot.slane %v249, 2
        %v472 = vrot.slane %v250, 2
        %v473 = vsel %vm455, %v471, %v472
        %v474 = vrot.slane %v251, 2
        %v475 = vsel %vm455, %v472, %v474
        %v476 = vrot.slane %v252, 2
        %v477 = vrot.slane %v253, 2
        %v478 = vsel %vm455, %v476, %v477
        %v479 = vrot.slane %v254, 2
        %v480 = vsel %vm455, %v477, %v479
        %v481 = vrot.slane %v255, 2
        %v482 = vrot.slane %v256, 2
        %v483 = vsel %vm455, %v481, %v482
        %v484 = vrot.slane %v257, 2
        %v485 = vsel %vm455, %v482, %v484
        %v486 = vrot.slane %v258, 2
        %v487 = vrot.slane %v259, 2
        %v488 = vsel %vm455, %v486, %v487
        %v489 = vrot.slane %v260, 2
        %v490 = vsel %vm455, %v487, %v489
        %v491 = vrot.slane %v261, 2
        %v492 = vrot.slane %v262, 2
        %v493 = vsel %vm455, %v491, %v492
        %v494 = vrot.slane %v263, 2
        %v495 = vsel %vm455, %v492, %v494
        %v496 = vrot.slane %v264, 2
        %v497 = vrot.slane %v265, 2
        %v498 = vsel %vm455, %v496, %v497
        %v499 = vrot.slane %v266, 2
        %v500 = vsel %vm455, %v497, %v499
        %v501 = vrot.slane %v267, 2
        %v502 = vrot.slane %v268, 2
        %v503 = vsel %vm455, %v501, %v502
        %v504 = vrot.slane %v269, 2
        %v505 = vsel %vm455, %v502, %v504
        %v506 = vrot.slane %v270, 2
        %v507 = vrot.slane %v271, 2
        %v508 = vsel %vm455, %v506, %v507
        %v509 = vrot.slane %v272, 2
        %v510 = vsel %vm455, %v507, %v509
        %v511 = vrot.slane %v273, 2
        %v512 = vrot.slane %v274, 2
        %v513 = vsel %vm455, %v511, %v512
        %v514 = vrot.slane %v275, 2
        %v515 = vsel %vm455, %v512, %v514
        %v516 = vrot.slane %v276, 2
        %v517 = vrot.slane %v277, 2
        %v518 = vsel %vm455, %v516, %v517
        %v519 = vrot.slane %v278, 2
        %v520 = vsel %vm455, %v517, %v519
        %v521 = vrot.slane %v279, 2
        %v522 = vrot.slane %v280, 2
        %v523 = vsel %vm455, %v521, %v522
        %v524 = vrot.slane %v281, 2
        %v525 = vsel %vm455, %v522, %v524
        %v526 = vrot.slane %v282, 2
        %v527 = vrot.slane %v283, 2
        %v528 = vsel %vm455, %v526, %v527
        %v529 = vrot.slane %v284, 2
        %v530 = vsel %vm455, %v527, %v529
        %v531 = vrot.slane %v285, 2
        %v532 = vrot.slane %v286, 2
        %v533 = vsel %vm455, %v531, %v532
        %v534 = vrot.slane %v287, 2
        %v535 = vsel %vm455, %v532, %v534
        %v571 = vrot.slane %v288, 1
        %v572 = vrot.slane %v289, 1
        %v573 = vsel %vm342, %v571, %v572
        %v574 = vrot.slane %v290, 1
        %v575 = vsel %vm342, %v572, %v574
        %v578 = vrot.slane %v288, 2
        %v579 = vrot.slane %v289, 2
        %v580 = vsel %vm455, %v578, %v579
        %v581 = vrot.slane %v290, 2
        %v582 = vsel %vm455, %v579, %v581
        %v588 = vrot.slane %v291, 1
        %v589 = vrot.slane %v292, 1
        %v590 = vsel %vm342, %v588, %v589
        %v591 = vrot.slane %v293, 1
        %v592 = vsel %vm342, %v589, %v591
        %v595 = vrot.slane %v291, 2
        %v596 = vrot.slane %v292, 2
        %v597 = vsel %vm455, %v595, %v596
        %v598 = vrot.slane %v293, 2
        %v599 = vsel %vm455, %v596, %v598
        %v602 = vld [vmem:[#allocation2] sm:$0xff]
        %v603 = vld [vmem:[#allocation2 + $0x8] sm:$0xff]
        %v604 = vld [vmem:[#allocation2 + $0x10] sm:$0xff]
        %v605 = vld [vmem:[#allocation2 + $0x18] sm:$0xff]
        %v606 = vld [vmem:[#allocation2 + $0x20] sm:$0xff]
        %v607 = vld [vmem:[#allocation2 + $0x28] sm:$0xff]
        %v608 = vld [vmem:[#allocation2 + $0x30] sm:$0xff]
        %v609 = vld [vmem:[#allocation2 + $0x38] sm:$0xff]
        %v610 = vld [vmem:[#allocation2 + $0x40] sm:$0xff]
        %v611 = vld [vmem:[#allocation2 + $0x48] sm:$0xff]
        %v612 = vld [vmem:[#allocation2 + $0x50] sm:$0xff]
        %v613 = vld [vmem:[#allocation2 + $0x58] sm:$0xff]
        %v614 = vld [vmem:[#allocation2 + $0x60] sm:$0xff]
        %v615 = vld [vmem:[#allocation2 + $0x68] sm:$0xff]
        %v616 = vld [vmem:[#allocation2 + $0x70] sm:$0xff]
        %v617 = vld [vmem:[#allocation2 + $0x78] sm:$0xff]
        %v618 = vld [vmem:[#allocation2 + $0x80] sm:$0xff]
        %v619 = vld [vmem:[#allocation2 + $0x88] sm:$0xff]
        %v620 = vld [vmem:[#allocation2 + $0x90] sm:$0xff]
        %v621 = vld [vmem:[#allocation2 + $0x98] sm:$0xff]
        %v622 = vld [vmem:[#allocation2 + $0xa0] sm:$0xff]
        %v623 = vld [vmem:[#allocation2 + $0xa8] sm:$0xff]
        %v624 = vld [vmem:[#allocation2 + $0xb0] sm:$0xff]
        %v625 = vld [vmem:[#allocation2 + $0xb8] sm:$0xff]
        %v626 = vld [vmem:[#allocation2 + $0xc0] sm:$0xff]
        %v627 = vld [vmem:[#allocation2 + $0xc8] sm:$0xff]
        %v628 = vld [vmem:[#allocation2 + $0xd0] sm:$0xff]
        %v629 = vld [vmem:[#allocation2 + $0xd8] sm:$0xff]
        %v630 = vld [vmem:[#allocation2 + $0xe0] sm:$0xff]
        %v631 = vld [vmem:[#allocation2 + $0xe8] sm:$0xff]
        %v632 = vld [vmem:[#allocation2 + $0xf0] sm:$0xff]
        %v633 = vld [vmem:[#allocation2 + $0xf8] sm:$0xff]
        %v634 = vld [vmem:[#allocation2 + $0x100] sm:$0xff]
        %v635 = vld [vmem:[#allocation2 + $0x108] sm:$0xff]
        %v636 = vld [vmem:[#allocation2 + $0x110] sm:$0xff]
        %v637 = vld [vmem:[#allocation2 + $0x118] sm:$0xff]
        %v638 = vld [vmem:[#allocation2 + $0x120] sm:$0xff]
        %v639 = vld [vmem:[#allocation2 + $0x128] sm:$0xff]
        %v640 = vld [vmem:[#allocation2 + $0x130] sm:$0xff]
        %v641 = vld [vmem:[#allocation2 + $0x138] sm:$0xff]
        %v642 = vld [vmem:[#allocation2 + $0x140] sm:$0xff]
        %v643 = vld [vmem:[#allocation2 + $0x148] sm:$0xff]
        %v644 = vld [vmem:[#allocation2 + $0x150] sm:$0xff]
        %v645 = vld [vmem:[#allocation2 + $0x158] sm:$0xff]
        %v646 = vld [vmem:[#allocation2 + $0x160] sm:$0xff]
        %v647 = vld [vmem:[#allocation2 + $0x168] sm:$0xff]
        %v648 = vld [vmem:[#allocation2 + $0x170] sm:$0xff]
        %v649 = vld [vmem:[#allocation2 + $0x178] sm:$0xff]
        %v650 = vld [vmem:[#allocation2 + $0x180] sm:$0xff]
        %v651 = vld [vmem:[#allocation2 + $0x188] sm:$0xff]
        %v652 = vld [vmem:[#allocation2 + $0x190] sm:$0xff]
        %v653 = vld [vmem:[#allocation2 + $0x198] sm:$0xff]
        %v654 = vld [vmem:[#allocation2 + $0x1a0] sm:$0xff]
        %v655 = vld [vmem:[#allocation2 + $0x1a8] sm:$0xff]
        %v656 = vld [vmem:[#allocation2 + $0x1b0] sm:$0xff]
        %v657 = vld [vmem:[#allocation2 + $0x1b8] sm:$0xff]
        %v658 = vld [vmem:[#allocation2 + $0x1c0] sm:$0xff]
        %v659 = vld [vmem:[#allocation2 + $0x1c8] sm:$0xff]
        %v660 = vld [vmem:[#allocation2 + $0x1d0] sm:$0xff]
        %v661 = vld [vmem:[#allocation2 + $0x1d8] sm:$0xff]
        %v662 = vld [vmem:[#allocation2 + $0x1e0] sm:$0xff]
        %v663 = vld [vmem:[#allocation2 + $0x1e8] sm:$0xff]
        %v664 = vld [vmem:[#allocation2 + $0x1f0] sm:$0xff]
        %v665 = vld [vmem:[#allocation2 + $0x1f8] sm:$0xff]
        %v666 = vld [vmem:[#allocation2 + $0x200] sm:$0xff]
        %v667 = vld [vmem:[#allocation2 + $0x208] sm:$0xff]
        %v668 = vld [vmem:[#allocation2 + $0x210] sm:$0xff]
        %v669 = vld [vmem:[#allocation2 + $0x218] sm:$0xff]
        %v670 = vld [vmem:[#allocation2 + $0x220] sm:$0xff]
        %v671 = vld [vmem:[#allocation2 + $0x228] sm:$0xff]
        %v672 = vld [vmem:[#allocation2 + $0x230] sm:$0xff]
        %v673 = vld [vmem:[#allocation2 + $0x238] sm:$0xff]
        %v674 = vld [vmem:[#allocation2 + $0x240] sm:$0xff]
        %v675 = vld [vmem:[#allocation2 + $0x248] sm:$0xff]
        %v676 = vld [vmem:[#allocation2 + $0x250] sm:$0xff]
        %v677 = vld [vmem:[#allocation2 + $0x258] sm:$0xff]
        %v678 = vld [vmem:[#allocation2 + $0x260] sm:$0xff]
        %v679 = vld [vmem:[#allocation2 + $0x268] sm:$0xff]
        %v680 = vld [vmem:[#allocation2 + $0x270] sm:$0xff]
        %v681 = vld [vmem:[#allocation2 + $0x278] sm:$0xff]
        %v682 = vld [vmem:[#allocation2 + $0x280] sm:$0xff]
        %v683 = vld [vmem:[#allocation2 + $0x288] sm:$0xff]
        %v684 = vld [vmem:[#allocation2 + $0x290] sm:$0xff]
        %v685 = vld [vmem:[#allocation2 + $0x298] sm:$0xff]
        %v686 = vld [vmem:[#allocation2 + $0x2a0] sm:$0xff]
        %v687 = vld [vmem:[#allocation2 + $0x2a8] sm:$0xff]
        %v688 = vld [vmem:[#allocation2 + $0x2b0] sm:$0xff]
        %v689 = vld [vmem:[#allocation2 + $0x2b8] sm:$0xff]
        %v690 = vld [vmem:[#allocation2 + $0x2c0] sm:$0xff]
        %v691 = vld [vmem:[#allocation2 + $0x2c8] sm:$0xff]
        %v692 = vld [vmem:[#allocation2 + $0x2d0] sm:$0xff]
        %v693 = vld [vmem:[#allocation2 + $0x2d8] sm:$0xff]
        %v694 = vld [vmem:[#allocation2 + $0x2e0] sm:$0xff]
        %v695 = vld [vmem:[#allocation2 + $0x2e8] sm:$0xff]
        %v696 = vld [vmem:[#allocation2 + $0x2f0] sm:$0xff]
        %v697 = vld [vmem:[#allocation2 + $0x2f8] sm:$0xff]
        %v698 = vld [vmem:[#allocation2 + $0x300] sm:$0xff]
        %v699 = vld [vmem:[#allocation2 + $0x308] sm:$0xff]
        %v700 = vld [vmem:[#allocation2 + $0x310] sm:$0xff]
        %v701 = vld [vmem:[#allocation2 + $0x318] sm:$0xff]
        %v702 = vld [vmem:[#allocation2 + $0x320] sm:$0xff]
        %v703 = vld [vmem:[#allocation2 + $0x328] sm:$0xff]
        %v704 = vld [vmem:[#allocation2 + $0x330] sm:$0xff]
        %v705 = vld [vmem:[#allocation2 + $0x338] sm:$0xff]
        %v706 = vld [vmem:[#allocation2 + $0x340] sm:$0xff]
        %v707 = vld [vmem:[#allocation2 + $0x348] sm:$0xff]
        %v708 = vld [vmem:[#allocation2 + $0x350] sm:$0xff]
        %v709 = vld [vmem:[#allocation2 + $0x358] sm:$0xff]
        %v710 = vld [vmem:[#allocation2 + $0x360] sm:$0xff]
        %v711 = vld [vmem:[#allocation2 + $0x368] sm:$0xff]
        %v712 = vld [vmem:[#allocation2 + $0x370] sm:$0xff]
        %v713 = vld [vmem:[#allocation2 + $0x378] sm:$0xff]
        %v714 = vld [vmem:[#allocation2 + $0x380] sm:$0xff]
        %v715 = vld [vmem:[#allocation2 + $0x388] sm:$0xff]
        %v716 = vld [vmem:[#allocation2 + $0x390] sm:$0xff]
        %v717 = vld [vmem:[#allocation2 + $0x398] sm:$0xff]
        %v718 = vld [vmem:[#allocation2 + $0x3a0] sm:$0xff]
        %v719 = vld [vmem:[#allocation2 + $0x3a8] sm:$0xff]
        %v720 = vld [vmem:[#allocation2 + $0x3b0] sm:$0xff]
        %v721 = vld [vmem:[#allocation2 + $0x3b8] sm:$0xff]
        %v722 = vld [vmem:[#allocation2 + $0x3c0] sm:$0xff]
        %v723 = vld [vmem:[#allocation2 + $0x3c8] sm:$0xff]
        %v724 = vld [vmem:[#allocation2 + $0x3d0] sm:$0xff]
        %v725 = vld [vmem:[#allocation2 + $0x3d8] sm:$0xff]
        %v726 = vld [vmem:[#allocation2 + $0x3e0] sm:$0xff]
        %v727 = vld [vmem:[#allocation2 + $0x3e8] sm:$0xff]
        %v728 = vld [vmem:[#allocation2 + $0x3f0] sm:$0xff]
        %v729 = vld [vmem:[#allocation2 + $0x3f8] sm:$0xff]
        %v730 = vld [vmem:[#allocation2 + $0x400] sm:$0xff]
        %v731 = vld [vmem:[#allocation2 + $0x408] sm:$0xff]
        %v732 = vld [vmem:[#allocation2 + $0x410] sm:$0xff]
        %v733 = vld [vmem:[#allocation2 + $0x418] sm:$0xff]
        %v734 = vld [vmem:[#allocation2 + $0x420] sm:$0xff]
        %v735 = vld [vmem:[#allocation2 + $0x428] sm:$0xff]
        %v736 = vld [vmem:[#allocation2 + $0x430] sm:$0xff]
        %v737 = vld [vmem:[#allocation2 + $0x438] sm:$0xff]
        %v738 = vld [vmem:[#allocation2 + $0x440] sm:$0xff]
        %v739 = vld [vmem:[#allocation2 + $0x448] sm:$0xff]
        %v740 = vld [vmem:[#allocation2 + $0x450] sm:$0xff]
        %v741 = vld [vmem:[#allocation2 + $0x458] sm:$0xff]
        %v742 = vld [vmem:[#allocation2 + $0x460] sm:$0xff]
        %v743 = vld [vmem:[#allocation2 + $0x468] sm:$0xff]
        %v744 = vld [vmem:[#allocation2 + $0x470] sm:$0xff]
        %v745 = vld [vmem:[#allocation2 + $0x478] sm:$0xff]
        %v746 = vld [vmem:[%s2] sm:$0x1]
        %v748 = vlaneseq
        %v749 = vshrl.u32 %v748, 7
        %v750 = vsub.s32 0, %v749
        %v751 = vrot.slane %v746, %v750
        %753 = vmatprep.subr.mxu0 0.0
        %754 = vmatpush1.msra.mxu0 %v602
        %755 = vmatprep.subr.mxu0 0.0
        %756 = vmatpush1.msra.mxu0 %v603
        %757 = vmatprep.subr.mxu0 0.0
        %758 = vmatpush1.msra.mxu0 %v604
        %759 = vmatprep.subr.mxu0 0.0
        %760 = vmatpush1.msra.mxu0 %v605
        %761 = vmatprep.subr.mxu0 0.0
        %762 = vmatpush1.msra.mxu0 %v606
        %763 = vmatprep.subr.mxu0 0.0
        %764 = vmatpush1.msra.mxu0 %v607
        %765 = vmatprep.subr.mxu0 0.0
        %766 = vmatpush1.msra.mxu0 %v608
        %767 = vmatprep.subr.mxu0 0.0
        %768 = vmatpush1.msra.mxu0 %v609
        %769 = vmatprep.subr.mxu0 0.0
        %770 = vmatpush1.msra.mxu0 %v610
        %771 = vmatprep.subr.mxu0 0.0
        %772 = vmatpush1.msra.mxu0 %v611
        %773 = vmatprep.subr.mxu0 0.0
        %774 = vmatpush1.msra.mxu0 %v612
        %775 = vmatprep.subr.mxu0 0.0
        %776 = vmatpush1.msra.mxu0 %v613
        %777 = vmatprep.subr.mxu0 0.0
        %778 = vmatpush1.msra.mxu0 %v614
        %779 = vmatprep.subr.mxu0 0.0
        %780 = vmatpush1.msra.mxu0 %v615
        %781 = vmatprep.subr.mxu0 0.0
        %782 = vmatpush1.msra.mxu0 %v616
        %783 = vmatprep.subr.mxu0 0.0
        %784 = vmatpush1.msra.mxu0 %v617
        %785 = vmatprep.subr.mxu0 0.0
        %786 = vmatpush1.msra.mxu0 %v618
        %787 = vmatprep.subr.mxu0 0.0
        %788 = vmatpush1.msra.mxu0 %v619
        %789 = vmatprep.subr.mxu0 0.0
        %790 = vmatpush1.msra.mxu0 %v620
        %791 = vmatprep.subr.mxu0 0.0
        %792 = vmatpush1.msra.mxu0 %v621
        %793 = vmatprep.subr.mxu0 0.0
        %794 = vmatpush1.msra.mxu0 %v622
        %795 = vmatprep.subr.mxu0 0.0
        %796 = vmatpush1.msra.mxu0 %v623
        %797 = vmatprep.subr.mxu0 0.0
        %798 = vmatpush1.msra.mxu0 %v624
        %799 = vmatprep.subr.mxu0 0.0
        %800 = vmatpush1.msra.mxu0 %v625
        %801 = vmatprep.subr.mxu0 0.0
        %802 = vmatpush1.msra.mxu0 %v626
        %803 = vmatprep.subr.mxu0 0.0
        %804 = vmatpush1.msra.mxu0 %v627
        %805 = vmatprep.subr.mxu0 0.0
        %806 = vmatpush1.msra.mxu0 %v628
        %807 = vmatprep.subr.mxu0 0.0
        %808 = vmatpush1.msra.mxu0 %v629
        %809 = vmatprep.subr.mxu0 0.0
        %810 = vmatpush1.msra.mxu0 %v630
        %811 = vmatprep.subr.mxu0 0.0
        %812 = vmatpush1.msra.mxu0 %v631
        %813 = vmatprep.subr.mxu0 0.0
        %814 = vmatpush1.msra.mxu0 %v632
        %815 = vmatprep.subr.mxu0 0.0
        %816 = vmatpush1.msra.mxu0 %v633
        %817 = vmatprep.mubr.f32.mxu0 %v345
        %818 = vmatmul.mubr.f32.gmra.mrb[0].mxu0 %v240
        %v819 = vpop.f32.mrb[0].mxu0
        %v820 = vadd.f32 %v751, %v819
        %v821 = vpop.f32.mrb[0].mxu0
        %822 = vmatprep.mubr.f32.mxu0 %v347
        %823 = vmatmul.mubr.f32.gmra.mrb[0].mxu0 %v241
        %v824 = vpop.f32.mrb[0].mxu0
        %v825 = vadd.f32 %v751, %v824
        %v826 = vpop.f32.mrb[0].mxu0
        %827 = vmatprep.mubr.f32.mxu0 %v350
        %828 = vmatmul.mubr.f32.gmra.mrb[0].mxu0 %v243
        %v829 = vpop.f32.mrb[0].mxu0
        %v830 = vadd.f32 %v751, %v829
        %v831 = vpop.f32.mrb[0].mxu0
        %832 = vmatprep.mubr.f32.mxu0 %v352
        %833 = vmatmul.mubr.f32.gmra.mrb[0].mxu0 %v244
        %v834 = vpop.f32.mrb[0].mxu0
        %v835 = vadd.f32 %v751, %v834
        %v836 = vpop.f32.mrb[0].mxu0
        %837 = vmatprep.mubr.f32.mxu0 %v355
        %838 = vmatmul.mubr.f32.gmra.mrb[0].mxu0 %v246
        %v839 = vpop.f32.mrb[0].mxu0
        %v840 = vadd.f32 %v751, %v839
        %v841 = vpop.f32.mrb[0].mxu0
        %842 = vmatprep.mubr.f32.mxu0 %v357
        %843 = vmatmul.mubr.f32.gmra.mrb[0].mxu0 %v247
        %v844 = vpop.f32.mrb[0].mxu0
        %v845 = vadd.f32 %v751, %v844
        %v846 = vpop.f32.mrb[0].mxu0
        %847 = vmatprep.mubr.f32.mxu0 %v360
        %848 = vmatmul.mubr.f32.gmra.mrb[0].mxu0 %v249
        %v849 = vpop.f32.mrb[0].mxu0
        %v850 = vadd.f32 %v751, %v849
        %v851 = vpop.f32.mrb[0].mxu0
        %852 = vmatprep.mubr.f32.mxu0 %v362
        %853 = vmatmul.mubr.f32.gmra.mrb[0].mxu0 %v250
        %v854 = vpop.f32.mrb[0].mxu0
        %v855 = vadd.f32 %v751, %v854
        %v856 = vpop.f32.mrb[0].mxu0
        %857 = vmatprep.mubr.f32.mxu0 %v365
        %858 = vmatmul.mubr.f32.gmra.mrb[0].mxu0 %v252
        %v859 = vpop.f32.mrb[0].mxu0
        %v860 = vadd.f32 %v751, %v859
        %v861 = vpop.f32.mrb[0].mxu0
        %862 = vmatprep.mubr.f32.mxu0 %v367
        %863 = vmatmul.mubr.f32.gmra.mrb[0].mxu0 %v253
        %v864 = vpop.f32.mrb[0].mxu0
        %v865 = vadd.f32 %v751, %v864
        %v866 = vpop.f32.mrb[0].mxu0
        %867 = vmatprep.mubr.f32.mxu0 %v370
        %868 = vmatmul.mubr.f32.gmra.mrb[0].mxu0 %v255
        %v869 = vpop.f32.mrb[0].mxu0
        %v870 = vadd.f32 %v751, %v869
        %v871 = vpop.f32.mrb[0].mxu0
        %872 = vmatprep.mubr.f32.mxu0 %v372
        %873 = vmatmul.mubr.f32.gmra.mrb[0].mxu0 %v256
        %v874 = vpop.f32.mrb[0].mxu0
        %v875 = vadd.f32 %v751, %v874
        %v876 = vpop.f32.mrb[0].mxu0
        %877 = vmatprep.mubr.f32.mxu0 %v375
        %878 = vmatmul.mubr.f32.gmra.mrb[0].mxu0 %v258
        %v879 = vpop.f32.mrb[0].mxu0
        %v880 = vadd.f32 %v751, %v879
        %v881 = vpop.f32.mrb[0].mxu0
        %882 = vmatprep.mubr.f32.mxu0 %v377
        %883 = vmatmul.mubr.f32.gmra.mrb[0].mxu0 %v259
        %v884 = vpop.f32.mrb[0].mxu0
        %v885 = vadd.f32 %v751, %v884
        %v886 = vpop.f32.mrb[0].mxu0
        %887 = vmatprep.mubr.f32.mxu0 %v380
        %888 = vmatmul.mubr.f32.gmra.mrb[0].mxu0 %v261
        %v889 = vpop.f32.mrb[0].mxu0
        %v890 = vadd.f32 %v751, %v889
        %v891 = vpop.f32.mrb[0].mxu0
        %892 = vmatprep.mubr.f32.mxu0 %v382
        %893 = vmatmul.mubr.f32.gmra.mrb[0].mxu0 %v262
        %v894 = vpop.f32.mrb[0].mxu0
        %v895 = vadd.f32 %v751, %v894
        %v896 = vpop.f32.mrb[0].mxu0
        %897 = vmatprep.mubr.f32.mxu0 %v385
        %898 = vmatmul.mubr.f32.gmra.mrb[0].mxu0 %v264
        %v899 = vpop.f32.mrb[0].mxu0
        %v900 = vadd.f32 %v751, %v899
        %v901 = vpop.f32.mrb[0].mxu0
        %902 = vmatprep.mubr.f32.mxu0 %v387
        %903 = vmatmul.mubr.f32.gmra.mrb[0].mxu0 %v265
        %v904 = vpop.f32.mrb[0].mxu0
        %v905 = vadd.f32 %v751, %v904
        %v906 = vpop.f32.mrb[0].mxu0
        %907 = vmatprep.mubr.f32.mxu0 %v390
        %908 = vmatmul.mubr.f32.gmra.mrb[0].mxu0 %v267
        %v909 = vpop.f32.mrb[0].mxu0
        %v910 = vadd.f32 %v751, %v909
        %v911 = vpop.f32.mrb[0].mxu0
        %912 = vmatprep.mubr.f32.mxu0 %v392
        %913 = vmatmul.mubr.f32.gmra.mrb[0].mxu0 %v268
        %v914 = vpop.f32.mrb[0].mxu0
        %v915 = vadd.f32 %v751, %v914
        %v916 = vpop.f32.mrb[0].mxu0
        %917 = vmatprep.mubr.f32.mxu0 %v395
        %918 = vmatmul.mubr.f32.gmra.mrb[0].mxu0 %v270
        %v919 = vpop.f32.mrb[0].mxu0
        %v920 = vadd.f32 %v751, %v919
        %v921 = vpop.f32.mrb[0].mxu0
        %922 = vmatprep.mubr.f32.mxu0 %v397
        %923 = vmatmul.mubr.f32.gmra.mrb[0].mxu0 %v271
        %v924 = vpop.f32.mrb[0].mxu0
        %v925 = vadd.f32 %v751, %v924
        %v926 = vpop.f32.mrb[0].mxu0
        %927 = vmatprep.mubr.f32.mxu0 %v400
        %928 = vmatmul.mubr.f32.gmra.mrb[0].mxu0 %v273
        %v929 = vpop.f32.mrb[0].mxu0
        %v930 = vadd.f32 %v751, %v929
        %v931 = vpop.f32.mrb[0].mxu0
        %932 = vmatprep.mubr.f32.mxu0 %v402
        %933 = vmatmul.mubr.f32.gmra.mrb[0].mxu0 %v274
        %v934 = vpop.f32.mrb[0].mxu0
        %v935 = vadd.f32 %v751, %v934
        %v936 = vpop.f32.mrb[0].mxu0
        %937 = vmatprep.mubr.f32.mxu0 %v405
        %938 = vmatmul.mubr.f32.gmra.mrb[0].mxu0 %v276
        %v939 = vpop.f32.mrb[0].mxu0
        %v940 = vadd.f32 %v751, %v939
        %v941 = vpop.f32.mrb[0].mxu0
        %942 = vmatprep.mubr.f32.mxu0 %v407
        %943 = vmatmul.mubr.f32.gmra.mrb[0].mxu0 %v277
        %v944 = vpop.f32.mrb[0].mxu0
        %v945 = vadd.f32 %v751, %v944
        %v946 = vpop.f32.mrb[0].mxu0
        %947 = vmatprep.mubr.f32.mxu0 %v410
        %948 = vmatmul.mubr.f32.gmra.mrb[0].mxu0 %v279
        %v949 = vpop.f32.mrb[0].mxu0
        %v950 = vadd.f32 %v751, %v949
        %v951 = vpop.f32.mrb[0].mxu0
        %952 = vmatprep.mubr.f32.mxu0 %v412
        %953 = vmatmul.mubr.f32.gmra.mrb[0].mxu0 %v280
        %v954 = vpop.f32.mrb[0].mxu0
        %v955 = vadd.f32 %v751, %v954
        %v956 = vpop.f32.mrb[0].mxu0
        %957 = vmatprep.mubr.f32.mxu0 %v415
        %958 = vmatmul.mubr.f32.gmra.mrb[0].mxu0 %v282
        %v959 = vpop.f32.mrb[0].mxu0
        %v960 = vadd.f32 %v751, %v959
        %v961 = vpop.f32.mrb[0].mxu0
        %962 = vmatprep.mubr.f32.mxu0 %v417
        %963 = vmatmul.mubr.f32.gmra.mrb[0].mxu0 %v283
        %v964 = vpop.f32.mrb[0].mxu0
        %v965 = vadd.f32 %v751, %v964
        %v966 = vpop.f32.mrb[0].mxu0
        %967 = vmatprep.mubr.f32.mxu0 %v420
        %968 = vmatmul.mubr.f32.gmra.mrb[0].mxu0 %v285
        %v969 = vpop.f32.mrb[0].mxu0
        %v970 = vadd.f32 %v751, %v969
        %v971 = vpop.f32.mrb[0].mxu0
        %972 = vmatprep.mubr.f32.mxu0 %v422
        %973 = vmatmul.mubr.f32.gmra.mrb[0].mxu0 %v286
        %v974 = vpop.f32.mrb[0].mxu0
        %v975 = vadd.f32 %v751, %v974
        %v976 = vpop.f32.mrb[0].mxu0
        %977 = vdwg.mxu0
        %978 = vmatprep.subr.mxu0 0.0
        %979 = vmatpush1.msra.mxu0 %v634
        %980 = vmatprep.subr.mxu0 0.0
        %981 = vmatpush1.msra.mxu0 %v635
        %982 = vmatprep.subr.mxu0 0.0
        %983 = vmatpush1.msra.mxu0 %v636
        %984 = vmatprep.subr.mxu0 0.0
        %985 = vmatpush1.msra.mxu0 %v637
        %986 = vmatprep.subr.mxu0 0.0
        %987 = vmatpush1.msra.mxu0 %v638
        %988 = vmatprep.subr.mxu0 0.0
        %989 = vmatpush1.msra.mxu0 %v639
        %990 = vmatprep.subr.mxu0 0.0
        %991 = vmatpush1.msra.mxu0 %v640
        %992 = vmatprep.subr.mxu0 0.0
        %993 = vmatpush1.msra.mxu0 %v641
        %994 = vmatprep.subr.mxu0 0.0
        %995 = vmatpush1.msra.mxu0 %v642
        %996 = vmatprep.subr.mxu0 0.0
        %997 = vmatpush1.msra.mxu0 %v643
        %998 = vmatprep.subr.mxu0 0.0
        %999 = vmatpush1.msra.mxu0 %v644
        %1000 = vmatprep.subr.mxu0 0.0
        %1001 = vmatpush1.msra.mxu0 %v645
        %1002 = vmatprep.subr.mxu0 0.0
        %1003 = vmatpush1.msra.mxu0 %v646
        %1004 = vmatprep.subr.mxu0 0.0
        %1005 = vmatpush1.msra.mxu0 %v647
        %1006 = vmatprep.subr.mxu0 0.0
        %1007 = vmatpush1.msra.mxu0 %v648
        %1008 = vmatprep.subr.mxu0 0.0
        %1009 = vmatpush1.msra.mxu0 %v649
        %1010 = vmatprep.subr.mxu0 0.0
        %1011 = vmatpush1.msra.mxu0 %v650
        %1012 = vmatprep.subr.mxu0 0.0
        %1013 = vmatpush1.msra.mxu0 %v651
        %1014 = vmatprep.subr.mxu0 0.0
        %1015 = vmatpush1.msra.mxu0 %v652
        %1016 = vmatprep.subr.mxu0 0.0
        %1017 = vmatpush1.msra.mxu0 %v653
        %1018 = vmatprep.subr.mxu0 0.0
        %1019 = vmatpush1.msra.mxu0 %v654
        %1020 = vmatprep.subr.mxu0 0.0
        %1021 = vmatpush1.msra.mxu0 %v655
        %1022 = vmatprep.subr.mxu0 0.0
        %1023 = vmatpush1.msra.mxu0 %v656
        %1024 = vmatprep.subr.mxu0 0.0
        %1025 = vmatpush1.msra.mxu0 %v657
        %1026 = vmatprep.subr.mxu0 0.0
        %1027 = vmatpush1.msra.mxu0 %v658
        %1028 = vmatprep.subr.mxu0 0.0
        %1029 = vmatpush1.msra.mxu0 %v659
        %1030 = vmatprep.subr.mxu0 0.0
        %1031 = vmatpush1.msra.mxu0 %v660
        %1032 = vmatprep.subr.mxu0 0.0
        %1033 = vmatpush1.msra.mxu0 %v661
        %1034 = vmatprep.subr.mxu0 0.0
        %1035 = vmatpush1.msra.mxu0 %v662
        %1036 = vmatprep.subr.mxu0 0.0
        %1037 = vmatpush1.msra.mxu0 %v663
        %1038 = vmatprep.subr.mxu0 0.0
        %1039 = vmatpush1.msra.mxu0 %v664
        %1040 = vmatprep.subr.mxu0 0.0
        %1041 = vmatpush1.msra.mxu0 %v665
        %1042 = vmatprep.mubr.f32.mxu0 %v243
        %1043 = vmatmul.mubr.f32.gmra.mrb[0].mxu0 %v458
        %v1044 = vpop.f32.mrb[0].mxu0
        %v1045 = vadd.f32 %v820, %v1044
        %v1046 = vpop.f32.mrb[0].mxu0
        %1047 = vmatprep.mubr.f32.mxu0 %v244
        %1048 = vmatmul.mubr.f32.gmra.mrb[0].mxu0 %v460
        %v1049 = vpop.f32.mrb[0].mxu0
        %v1050 = vadd.f32 %v825, %v1049
        %v1051 = vpop.f32.mrb[0].mxu0
        %1052 = vmatprep.mubr.f32.mxu0 %v246
        %1053 = vmatmul.mubr.f32.gmra.mrb[0].mxu0 %v463
        %v1054 = vpop.f32.mrb[0].mxu0
        %v1055 = vadd.f32 %v830, %v1054
        %v1056 = vpop.f32.mrb[0].mxu0
        %1057 = vmatprep.mubr.f32.mxu0 %v247
        %1058 = vmatmul.mubr.f32.gmra.mrb[0].mxu0 %v465
        %v1059 = vpop.f32.mrb[0].mxu0
        %v1060 = vadd.f32 %v835, %v1059
        %v1061 = vpop.f32.mrb[0].mxu0
        %1062 = vmatprep.mubr.f32.mxu0 %v249
        %1063 = vmatmul.mubr.f32.gmra.mrb[0].mxu0 %v468
        %v1064 = vpop.f32.mrb[0].mxu0
        %v1065 = vadd.f32 %v840, %v1064
        %v1066 = vpop.f32.mrb[0].mxu0
        %1067 = vmatprep.mubr.f32.mxu0 %v250
        %1068 = vmatmul.mubr.f32.gmra.mrb[0].mxu0 %v470
        %v1069 = vpop.f32.mrb[0].mxu0
        %v1070 = vadd.f32 %v845, %v1069
        %v1071 = vpop.f32.mrb[0].mxu0
        %1072 = vmatprep.mubr.f32.mxu0 %v252
        %1073 = vmatmul.mubr.f32.gmra.mrb[0].mxu0 %v473
        %v1074 = vpop.f32.mrb[0].mxu0
        %v1075 = vadd.f32 %v850, %v1074
        %v1076 = vpop.f32.mrb[0].mxu0
        %1077 = vmatprep.mubr.f32.mxu0 %v253
        %1078 = vmatmul.mubr.f32.gmra.mrb[0].mxu0 %v475
        %v1079 = vpop.f32.mrb[0].mxu0
        %v1080 = vadd.f32 %v855, %v1079
        %v1081 = vpop.f32.mrb[0].mxu0
        %1082 = vmatprep.mubr.f32.mxu0 %v255
        %1083 = vmatmul.mubr.f32.gmra.mrb[0].mxu0 %v478
        %v1084 = vpop.f32.mrb[0].mxu0
        %v1085 = vadd.f32 %v860, %v1084
        %v1086 = vpop.f32.mrb[0].mxu0
        %1087 = vmatprep.mubr.f32.mxu0 %v256
        %1088 = vmatmul.mubr.f32.gmra.mrb[0].mxu0 %v480
        %v1089 = vpop.f32.mrb[0].mxu0
        %v1090 = vadd.f32 %v865, %v1089
        %v1091 = vpop.f32.mrb[0].mxu0
        %1092 = vmatprep.mubr.f32.mxu0 %v258
        %1093 = vmatmul.mubr.f32.gmra.mrb[0].mxu0 %v483
        %v1094 = vpop.f32.mrb[0].mxu0
        %v1095 = vadd.f32 %v870, %v1094
        %v1096 = vpop.f32.mrb[0].mxu0
        %1097 = vmatprep.mubr.f32.mxu0 %v259
        %1098 = vmatmul.mubr.f32.gmra.mrb[0].mxu0 %v485
        %v1099 = vpop.f32.mrb[0].mxu0
        %v1100 = vadd.f32 %v875, %v1099
        %v1101 = vpop.f32.mrb[0].mxu0
        %1102 = vmatprep.mubr.f32.mxu0 %v261
        %1103 = vmatmul.mubr.f32.gmra.mrb[0].mxu0 %v488
        %v1104 = vpop.f32.mrb[0].mxu0
        %v1105 = vadd.f32 %v880, %v1104
        %v1106 = vpop.f32.mrb[0].mxu0
        %1107 = vmatprep.mubr.f32.mxu0 %v262
        %1108 = vmatmul.mubr.f32.gmra.mrb[0].mxu0 %v490
        %v1109 = vpop.f32.mrb[0].mxu0
        %v1110 = vadd.f32 %v885, %v1109
        %v1111 = vpop.f32.mrb[0].mxu0
        %1112 = vmatprep.mubr.f32.mxu0 %v264
        %1113 = vmatmul.mubr.f32.gmra.mrb[0].mxu0 %v493
        %v1114 = vpop.f32.mrb[0].mxu0
        %v1115 = vadd.f32 %v890, %v1114
        %v1116 = vpop.f32.mrb[0].mxu0
        %1117 = vmatprep.mubr.f32.mxu0 %v265
        %1118 = vmatmul.mubr.f32.gmra.mrb[0].mxu0 %v495
        %v1119 = vpop.f32.mrb[0].mxu0
        %v1120 = vadd.f32 %v895, %v1119
        %v1121 = vpop.f32.mrb[0].mxu0
        %1122 = vmatprep.mubr.f32.mxu0 %v267
        %1123 = vmatmul.mubr.f32.gmra.mrb[0].mxu0 %v498
        %v1124 = vpop.f32.mrb[0].mxu0
        %v1125 = vadd.f32 %v900, %v1124
        %v1126 = vpop.f32.mrb[0].mxu0
        %1127 = vmatprep.mubr.f32.mxu0 %v268
        %1128 = vmatmul.mubr.f32.gmra.mrb[0].mxu0 %v500
        %v1129 = vpop.f32.mrb[0].mxu0
        %v1130 = vadd.f32 %v905, %v1129
        %v1131 = vpop.f32.mrb[0].mxu0
        %1132 = vmatprep.mubr.f32.mxu0 %v270
        %1133 = vmatmul.mubr.f32.gmra.mrb[0].mxu0 %v503
        %v1134 = vpop.f32.mrb[0].mxu0
        %v1135 = vadd.f32 %v910, %v1134
        %v1136 = vpop.f32.mrb[0].mxu0
        %1137 = vmatprep.mubr.f32.mxu0 %v271
        %1138 = vmatmul.mubr.f32.gmra.mrb[0].mxu0 %v505
        %v1139 = vpop.f32.mrb[0].mxu0
        %v1140 = vadd.f32 %v915, %v1139
        %v1141 = vpop.f32.mrb[0].mxu0
        %1142 = vmatprep.mubr.f32.mxu0 %v273
        %1143 = vmatmul.mubr.f32.gmra.mrb[0].mxu0 %v508
        %v1144 = vpop.f32.mrb[0].mxu0
        %v1145 = vadd.f32 %v920, %v1144
        %v1146 = vpop.f32.mrb[0].mxu0
        %1147 = vmatprep.mubr.f32.mxu0 %v274
        %1148 = vmatmul.mubr.f32.gmra.mrb[0].mxu0 %v510
        %v1149 = vpop.f32.mrb[0].mxu0
        %v1150 = vadd.f32 %v925, %v1149
        %v1151 = vpop.f32.mrb[0].mxu0
        %1152 = vmatprep.mubr.f32.mxu0 %v276
        %1153 = vmatmul.mubr.f32.gmra.mrb[0].mxu0 %v513
        %v1154 = vpop.f32.mrb[0].mxu0
        %v1155 = vadd.f32 %v930, %v1154
        %v1156 = vpop.f32.mrb[0].mxu0
        %1157 = vmatprep.mubr.f32.mxu0 %v277
        %1158 = vmatmul.mubr.f32.gmra.mrb[0].mxu0 %v515
        %v1159 = vpop.f32.mrb[0].mxu0
        %v1160 = vadd.f32 %v935, %v1159
        %v1161 = vpop.f32.mrb[0].mxu0
        %1162 = vmatprep.mubr.f32.mxu0 %v279
        %1163 = vmatmul.mubr.f32.gmra.mrb[0].mxu0 %v518
        %v1164 = vpop.f32.mrb[0].mxu0
        %v1165 = vadd.f32 %v940, %v1164
        %v1166 = vpop.f32.mrb[0].mxu0
        %1167 = vmatprep.mubr.f32.mxu0 %v280
        %1168 = vmatmul.mubr.f32.gmra.mrb[0].mxu0 %v520
        %v1169 = vpop.f32.mrb[0].mxu0
        %v1170 = vadd.f32 %v945, %v1169
        %v1171 = vpop.f32.mrb[0].mxu0
        %1172 = vmatprep.mubr.f32.mxu0 %v282
        %1173 = vmatmul.mubr.f32.gmra.mrb[0].mxu0 %v523
        %v1174 = vpop.f32.mrb[0].mxu0
        %v1175 = vadd.f32 %v950, %v1174
        %v1176 = vpop.f32.mrb[0].mxu0
        %1177 = vmatprep.mubr.f32.mxu0 %v283
        %1178 = vmatmul.mubr.f32.gmra.mrb[0].mxu0 %v525
        %v1179 = vpop.f32.mrb[0].mxu0
        %v1180 = vadd.f32 %v955, %v1179
        %v1181 = vpop.f32.mrb[0].mxu0
        %1182 = vmatprep.mubr.f32.mxu0 %v285
        %1183 = vmatmul.mubr.f32.gmra.mrb[0].mxu0 %v528
        %v1184 = vpop.f32.mrb[0].mxu0
        %v1185 = vadd.f32 %v960, %v1184
        %v1186 = vpop.f32.mrb[0].mxu0
        %1187 = vmatprep.mubr.f32.mxu0 %v286
        %1188 = vmatmul.mubr.f32.gmra.mrb[0].mxu0 %v530
        %v1189 = vpop.f32.mrb[0].mxu0
        %v1190 = vadd.f32 %v965, %v1189
        %v1191 = vpop.f32.mrb[0].mxu0
        %1192 = vmatprep.mubr.f32.mxu0 %v288
        %1193 = vmatmul.mubr.f32.gmra.mrb[0].mxu0 %v533
        %v1194 = vpop.f32.mrb[0].mxu0
        %v1195 = vadd.f32 %v970, %v1194
        %v1196 = vpop.f32.mrb[0].mxu0
        %1197 = vmatprep.mubr.f32.mxu0 %v289
        %1198 = vmatmul.mubr.f32.gmra.mrb[0].mxu0 %v535
        %v1199 = vpop.f32.mrb[0].mxu0
        %v1200 = vadd.f32 %v975, %v1199
        %v1201 = vpop.f32.mrb[0].mxu0
        %1202 = vdwg.mxu0
        %1203 = vmatprep.subr.mxu0 0.0
        %1204 = vmatpush1.msra.mxu0 %v666
        %1205 = vmatprep.subr.mxu0 0.0
        %1206 = vmatpush1.msra.mxu0 %v667
        %1207 = vmatprep.subr.mxu0 0.0
        %1208 = vmatpush1.msra.mxu0 %v668
        %1209 = vmatprep.subr.mxu0 0.0
        %1210 = vmatpush1.msra.mxu0 %v669
        %1211 = vmatprep.subr.mxu0 0.0
        %1212 = vmatpush1.msra.mxu0 %v670
        %1213 = vmatprep.subr.mxu0 0.0
        %1214 = vmatpush1.msra.mxu0 %v671
        %1215 = vmatprep.subr.mxu0 0.0
        %1216 = vmatpush1.msra.mxu0 %v672
        %1217 = vmatprep.subr.mxu0 0.0
        %1218 = vmatpush1.msra.mxu0 %v673
        %1219 = vmatprep.subr.mxu0 0.0
        %1220 = vmatpush1.msra.mxu0 %v674
        %1221 = vmatprep.subr.mxu0 0.0
        %1222 = vmatpush1.msra.mxu0 %v675
        %1223 = vmatprep.subr.mxu0 0.0
        %1224 = vmatpush1.msra.mxu0 %v676
        %1225 = vmatprep.subr.mxu0 0.0
        %1226 = vmatpush1.msra.mxu0 %v677
        %1227 = vmatprep.subr.mxu0 0.0
        %1228 = vmatpush1.msra.mxu0 %v678
        %1229 = vmatprep.subr.mxu0 0.0
        %1230 = vmatpush1.msra.mxu0 %v679
        %1231 = vmatprep.subr.mxu0 0.0
        %1232 = vmatpush1.msra.mxu0 %v680
        %1233 = vmatprep.subr.mxu0 0.0
        %1234 = vmatpush1.msra.mxu0 %v681
        %1235 = vmatprep.subr.mxu0 0.0
        %1236 = vmatpush1.msra.mxu0 %v682
        %1237 = vmatprep.subr.mxu0 0.0
        %1238 = vmatpush1.msra.mxu0 %v683
        %1239 = vmatprep.subr.mxu0 0.0
        %1240 = vmatpush1.msra.mxu0 %v684
        %1241 = vmatprep.subr.mxu0 0.0
        %1242 = vmatpush1.msra.mxu0 %v685
        %1243 = vmatprep.subr.mxu0 0.0
        %1244 = vmatpush1.msra.mxu0 %v686
        %1245 = vmatprep.subr.mxu0 0.0
        %1246 = vmatpush1.msra.mxu0 %v687
        %1247 = vmatprep.subr.mxu0 0.0
        %1248 = vmatpush1.msra.mxu0 %v688
        %1249 = vmatprep.subr.mxu0 0.0
        %1250 = vmatpush1.msra.mxu0 %v689
        %1251 = vmatprep.subr.mxu0 0.0
        %1252 = vmatpush1.msra.mxu0 %v690
        %1253 = vmatprep.subr.mxu0 0.0
        %1254 = vmatpush1.msra.mxu0 %v691
        %1255 = vmatprep.subr.mxu0 0.0
        %1256 = vmatpush1.msra.mxu0 %v692
        %1257 = vmatprep.subr.mxu0 0.0
        %1258 = vmatpush1.msra.mxu0 %v693
        %1259 = vmatprep.subr.mxu0 0.0
        %1260 = vmatpush1.msra.mxu0 %v694
        %1261 = vmatprep.subr.mxu0 0.0
        %1262 = vmatpush1.msra.mxu0 %v695
        %1263 = vmatprep.subr.mxu0 0.0
        %1264 = vmatpush1.msra.mxu0 %v696
        %1265 = vmatprep.subr.mxu0 0.0
        %1266 = vmatpush1.msra.mxu0 %v697
        %1267 = vmatprep.mubr.f32.mxu0 %v463
        %1268 = vmatmul.mubr.f32.gmra.mrb[0].mxu0 %v350
        %v1269 = vpop.f32.mrb[0].mxu0
        %v1270 = vadd.f32 %v1045, %v1269
        %v1271 = vpop.f32.mrb[0].mxu0
        %1272 = vmatprep.mubr.f32.mxu0 %v465
        %1273 = vmatmul.mubr.f32.gmra.mrb[0].mxu0 %v352
        %v1274 = vpop.f32.mrb[0].mxu0
        %v1275 = vadd.f32 %v1050, %v1274
        %v1276 = vpop.f32.mrb[0].mxu0
        %1277 = vmatprep.mubr.f32.mxu0 %v468
        %1278 = vmatmul.mubr.f32.gmra.mrb[0].mxu0 %v355
        %v1279 = vpop.f32.mrb[0].mxu0
        %v1280 = vadd.f32 %v1055, %v1279
        %v1281 = vpop.f32.mrb[0].mxu0
        %1282 = vmatprep.mubr.f32.mxu0 %v470
        %1283 = vmatmul.mubr.f32.gmra.mrb[0].mxu0 %v357
        %v1284 = vpop.f32.mrb[0].mxu0
        %v1285 = vadd.f32 %v1060, %v1284
        %v1286 = vpop.f32.mrb[0].mxu0
        %1287 = vmatprep.mubr.f32.mxu0 %v473
        %1288 = vmatmul.mubr.f32.gmra.mrb[0].mxu0 %v360
        %v1289 = vpop.f32.mrb[0].mxu0
        %v1290 = vadd.f32 %v1065, %v1289
        %v1291 = vpop.f32.mrb[0].mxu0
        %1292 = vmatprep.mubr.f32.mxu0 %v475
        %1293 = vmatmul.mubr.f32.gmra.mrb[0].mxu0 %v362
        %v1294 = vpop.f32.mrb[0].mxu0
        %v1295 = vadd.f32 %v1070, %v1294
        %v1296 = vpop.f32.mrb[0].mxu0
        %1297 = vmatprep.mubr.f32.mxu0 %v478
        %1298 = vmatmul.mubr.f32.gmra.mrb[0].mxu0 %v365
        %v1299 = vpop.f32.mrb[0].mxu0
        %v1300 = vadd.f32 %v1075, %v1299
        %v1301 = vpop.f32.mrb[0].mxu0
        %1302 = vmatprep.mubr.f32.mxu0 %v480
        %1303 = vmatmul.mubr.f32.gmra.mrb[0].mxu0 %v367
        %v1304 = vpop.f32.mrb[0].mxu0
        %v1305 = vadd.f32 %v1080, %v1304
        %v1306 = vpop.f32.mrb[0].mxu0
        %1307 = vmatprep.mubr.f32.mxu0 %v483
        %1308 = vmatmul.mubr.f32.gmra.mrb[0].mxu0 %v370
        %v1309 = vpop.f32.mrb[0].mxu0
        %v1310 = vadd.f32 %v1085, %v1309
        %v1311 = vpop.f32.mrb[0].mxu0
        %1312 = vmatprep.mubr.f32.mxu0 %v485
        %1313 = vmatmul.mubr.f32.gmra.mrb[0].mxu0 %v372
        %v1314 = vpop.f32.mrb[0].mxu0
        %v1315 = vadd.f32 %v1090, %v1314
        %v1316 = vpop.f32.mrb[0].mxu0
        %1317 = vmatprep.mubr.f32.mxu0 %v488
        %1318 = vmatmul.mubr.f32.gmra.mrb[0].mxu0 %v375
        %v1319 = vpop.f32.mrb[0].mxu0
        %v1320 = vadd.f32 %v1095, %v1319
        %v1321 = vpop.f32.mrb[0].mxu0
        %1322 = vmatprep.mubr.f32.mxu0 %v490
        %1323 = vmatmul.mubr.f32.gmra.mrb[0].mxu0 %v377
        %v1324 = vpop.f32.mrb[0].mxu0
        %v1325 = vadd.f32 %v1100, %v1324
        %v1326 = vpop.f32.mrb[0].mxu0
        %1327 = vmatprep.mubr.f32.mxu0 %v493
        %1328 = vmatmul.mubr.f32.gmra.mrb[0].mxu0 %v380
        %v1329 = vpop.f32.mrb[0].mxu0
        %v1330 = vadd.f32 %v1105, %v1329
        %v1331 = vpop.f32.mrb[0].mxu0
        %1332 = vmatprep.mubr.f32.mxu0 %v495
        %1333 = vmatmul.mubr.f32.gmra.mrb[0].mxu0 %v382
        %v1334 = vpop.f32.mrb[0].mxu0
        %v1335 = vadd.f32 %v1110, %v1334
        %v1336 = vpop.f32.mrb[0].mxu0
        %1337 = vmatprep.mubr.f32.mxu0 %v498
        %1338 = vmatmul.mubr.f32.gmra.mrb[0].mxu0 %v385
        %v1339 = vpop.f32.mrb[0].mxu0
        %v1340 = vadd.f32 %v1115, %v1339
        %v1341 = vpop.f32.mrb[0].mxu0
        %1342 = vmatprep.mubr.f32.mxu0 %v500
        %1343 = vmatmul.mubr.f32.gmra.mrb[0].mxu0 %v387
        %v1344 = vpop.f32.mrb[0].mxu0
        %v1345 = vadd.f32 %v1120, %v1344
        %v1346 = vpop.f32.mrb[0].mxu0
        %1347 = vmatprep.mubr.f32.mxu0 %v503
        %1348 = vmatmul.mubr.f32.gmra.mrb[0].mxu0 %v390
        %v1349 = vpop.f32.mrb[0].mxu0
        %v1350 = vadd.f32 %v1125, %v1349
        %v1351 = vpop.f32.mrb[0].mxu0
        %1352 = vmatprep.mubr.f32.mxu0 %v505
        %1353 = vmatmul.mubr.f32.gmra.mrb[0].mxu0 %v392
        %v1354 = vpop.f32.mrb[0].mxu0
        %v1355 = vadd.f32 %v1130, %v1354
        %v1356 = vpop.f32.mrb[0].mxu0
        %1357 = vmatprep.mubr.f32.mxu0 %v508
        %1358 = vmatmul.mubr.f32.gmra.mrb[0].mxu0 %v395
        %v1359 = vpop.f32.mrb[0].mxu0
        %v1360 = vadd.f32 %v1135, %v1359
        %v1361 = vpop.f32.mrb[0].mxu0
        %1362 = vmatprep.mubr.f32.mxu0 %v510
        %1363 = vmatmul.mubr.f32.gmra.mrb[0].mxu0 %v397
        %v1364 = vpop.f32.mrb[0].mxu0
        %v1365 = vadd.f32 %v1140, %v1364
        %v1366 = vpop.f32.mrb[0].mxu0
        %1367 = vmatprep.mubr.f32.mxu0 %v513
        %1368 = vmatmul.mubr.f32.gmra.mrb[0].mxu0 %v400
        %v1369 = vpop.f32.mrb[0].mxu0
        %v1370 = vadd.f32 %v1145, %v1369
        %v1371 = vpop.f32.mrb[0].mxu0
        %1372 = vmatprep.mubr.f32.mxu0 %v515
        %1373 = vmatmul.mubr.f32.gmra.mrb[0].mxu0 %v402
        %v1374 = vpop.f32.mrb[0].mxu0
        %v1375 = vadd.f32 %v1150, %v1374
        %v1376 = vpop.f32.mrb[0].mxu0
        %1377 = vmatprep.mubr.f32.mxu0 %v518
        %1378 = vmatmul.mubr.f32.gmra.mrb[0].mxu0 %v405
        %v1379 = vpop.f32.mrb[0].mxu0
        %v1380 = vadd.f32 %v1155, %v1379
        %v1381 = vpop.f32.mrb[0].mxu0
        %1382 = vmatprep.mubr.f32.mxu0 %v520
        %1383 = vmatmul.mubr.f32.gmra.mrb[0].mxu0 %v407
        %v1384 = vpop.f32.mrb[0].mxu0
        %v1385 = vadd.f32 %v1160, %v1384
        %v1386 = vpop.f32.mrb[0].mxu0
        %1387 = vmatprep.mubr.f32.mxu0 %v523
        %1388 = vmatmul.mubr.f32.gmra.mrb[0].mxu0 %v410
        %v1389 = vpop.f32.mrb[0].mxu0
        %v1390 = vadd.f32 %v1165, %v1389
        %v1391 = vpop.f32.mrb[0].mxu0
        %1392 = vmatprep.mubr.f32.mxu0 %v525
        %1393 = vmatmul.mubr.f32.gmra.mrb[0].mxu0 %v412
        %v1394 = vpop.f32.mrb[0].mxu0
        %v1395 = vadd.f32 %v1170, %v1394
        %v1396 = vpop.f32.mrb[0].mxu0
        %1397 = vmatprep.mubr.f32.mxu0 %v528
        %1398 = vmatmul.mubr.f32.gmra.mrb[0].mxu0 %v415
        %v1399 = vpop.f32.mrb[0].mxu0
        %v1400 = vadd.f32 %v1175, %v1399
        %v1401 = vpop.f32.mrb[0].mxu0
        %1402 = vmatprep.mubr.f32.mxu0 %v530
        %1403 = vmatmul.mubr.f32.gmra.mrb[0].mxu0 %v417
        %v1404 = vpop.f32.mrb[0].mxu0
        %v1405 = vadd.f32 %v1180, %v1404
        %v1406 = vpop.f32.mrb[0].mxu0
        %1407 = vmatprep.mubr.f32.mxu0 %v533
        %1408 = vmatmul.mubr.f32.gmra.mrb[0].mxu0 %v420
        %v1409 = vpop.f32.mrb[0].mxu0
        %v1410 = vadd.f32 %v1185, %v1409
        %v1411 = vpop.f32.mrb[0].mxu0
        %1412 = vmatprep.mubr.f32.mxu0 %v535
        %1413 = vmatmul.mubr.f32.gmra.mrb[0].mxu0 %v422
        %v1414 = vpop.f32.mrb[0].mxu0
        %v1415 = vadd.f32 %v1190, %v1414
        %v1416 = vpop.f32.mrb[0].mxu0
        %1417 = vmatprep.mubr.f32.mxu0 %v580
        %1418 = vmatmul.mubr.f32.gmra.mrb[0].mxu0 %v573
        %v1419 = vpop.f32.mrb[0].mxu0
        %v1420 = vadd.f32 %v1195, %v1419
        %v1421 = vpop.f32.mrb[0].mxu0
        %1422 = vmatprep.mubr.f32.mxu0 %v582
        %1423 = vmatmul.mubr.f32.gmra.mrb[0].mxu0 %v575
        %v1424 = vpop.f32.mrb[0].mxu0
        %v1425 = vadd.f32 %v1200, %v1424
        %v1426 = vpop.f32.mrb[0].mxu0
        %1427 = vdwg.mxu0
        %1428 = vmatprep.subr.mxu0 0.0
        %1429 = vmatpush1.msra.mxu0 %v698
        %1430 = vmatprep.subr.mxu0 0.0
        %1431 = vmatpush1.msra.mxu0 %v699
        %1432 = vmatprep.subr.mxu0 0.0
        %1433 = vmatpush1.msra.mxu0 %v700
        %1434 = vmatprep.subr.mxu0 0.0
        %1435 = vmatpush1.msra.mxu0 %v701
        %1436 = vmatprep.subr.mxu0 0.0
        %1437 = vmatpush1.msra.mxu0 %v702
        %1438 = vmatprep.subr.mxu0 0.0
        %1439 = vmatpush1.msra.mxu0 %v703
        %1440 = vmatprep.subr.mxu0 0.0
        %1441 = vmatpush1.msra.mxu0 %v704
        %1442 = vmatprep.subr.mxu0 0.0
        %1443 = vmatpush1.msra.mxu0 %v705
        %1444 = vmatprep.subr.mxu0 0.0
        %1445 = vmatpush1.msra.mxu0 %v706
        %1446 = vmatprep.subr.mxu0 0.0
        %1447 = vmatpush1.msra.mxu0 %v707
        %1448 = vmatprep.subr.mxu0 0.0
        %1449 = vmatpush1.msra.mxu0 %v708
        %1450 = vmatprep.subr.mxu0 0.0
        %1451 = vmatpush1.msra.mxu0 %v709
        %1452 = vmatprep.subr.mxu0 0.0
        %1453 = vmatpush1.msra.mxu0 %v710
        %1454 = vmatprep.subr.mxu0 0.0
        %1455 = vmatpush1.msra.mxu0 %v711
        %1456 = vmatprep.subr.mxu0 0.0
        %1457 = vmatpush1.msra.mxu0 %v712
        %1458 = vmatprep.subr.mxu0 0.0
        %1459 = vmatpush1.msra.mxu0 %v713
        %1460 = vmatprep.subr.mxu0 0.0
        %1461 = vmatpush1.msra.mxu0 %v714
        %1462 = vmatprep.subr.mxu0 0.0
        %1463 = vmatpush1.msra.mxu0 %v715
        %1464 = vmatprep.subr.mxu0 0.0
        %1465 = vmatpush1.msra.mxu0 %v716
        %1466 = vmatprep.subr.mxu0 0.0
        %1467 = vmatpush1.msra.mxu0 %v717
        %1468 = vmatprep.subr.mxu0 0.0
        %1469 = vmatpush1.msra.mxu0 %v718
        %1470 = vmatprep.subr.mxu0 0.0
        %1471 = vmatpush1.msra.mxu0 %v719
        %1472 = vmatprep.subr.mxu0 0.0
        %1473 = vmatpush1.msra.mxu0 %v720
        %1474 = vmatprep.subr.mxu0 0.0
        %1475 = vmatpush1.msra.mxu0 %v721
        %1476 = vmatprep.subr.mxu0 0.0
        %1477 = vmatpush1.msra.mxu0 %v722
        %1478 = vmatprep.subr.mxu0 0.0
        %1479 = vmatpush1.msra.mxu0 %v723
        %1480 = vmatprep.subr.mxu0 0.0
        %1481 = vmatpush1.msra.mxu0 %v724
        %1482 = vmatprep.subr.mxu0 0.0
        %1483 = vmatpush1.msra.mxu0 %v725
        %1484 = vmatprep.subr.mxu0 0.0
        %1485 = vmatpush1.msra.mxu0 %v726
        %1486 = vmatprep.subr.mxu0 0.0
        %1487 = vmatpush1.msra.mxu0 %v727
        %1488 = vmatprep.subr.mxu0 0.0
        %1489 = vmatpush1.msra.mxu0 %v728
        %1490 = vmatprep.subr.mxu0 0.0
        %1491 = vmatpush1.msra.mxu0 %v729
        %1492 = vmatprep.mubr.f32.mxu0 %v355
        %1493 = vmatmul.mubr.f32.gmra.mrb[0].mxu0 %v246
        %v1494 = vpop.f32.mrb[0].mxu0
        %v1495 = vadd.f32 %v1270, %v1494
        %v1496 = vpop.f32.mrb[0].mxu0
        %1497 = vmatprep.mubr.f32.mxu0 %v357
        %1498 = vmatmul.mubr.f32.gmra.mrb[0].mxu0 %v247
        %v1499 = vpop.f32.mrb[0].mxu0
        %v1500 = vadd.f32 %v1275, %v1499
        %v1501 = vpop.f32.mrb[0].mxu0
        %1502 = vmatprep.mubr.f32.mxu0 %v360
        %1503 = vmatmul.mubr.f32.gmra.mrb[0].mxu0 %v249
        %v1504 = vpop.f32.mrb[0].mxu0
        %v1505 = vadd.f32 %v1280, %v1504
        %v1506 = vpop.f32.mrb[0].mxu0
        %1507 = vmatprep.mubr.f32.mxu0 %v362
        %1508 = vmatmul.mubr.f32.gmra.mrb[0].mxu0 %v250
        %v1509 = vpop.f32.mrb[0].mxu0
        %v1510 = vadd.f32 %v1285, %v1509
        %v1511 = vpop.f32.mrb[0].mxu0
        %1512 = vmatprep.mubr.f32.mxu0 %v365
        %1513 = vmatmul.mubr.f32.gmra.mrb[0].mxu0 %v252
        %v1514 = vpop.f32.mrb[0].mxu0
        %v1515 = vadd.f32 %v1290, %v1514
        %v1516 = vpop.f32.mrb[0].mxu0
        %1517 = vmatprep.mubr.f32.mxu0 %v367
        %1518 = vmatmul.mubr.f32.gmra.mrb[0].mxu0 %v253
        %v1519 = vpop.f32.mrb[0].mxu0
        %v1520 = vadd.f32 %v1295, %v1519
        %v1521 = vpop.f32.mrb[0].mxu0
        %1522 = vmatprep.mubr.f32.mxu0 %v370
        %1523 = vmatmul.mubr.f32.gmra.mrb[0].mxu0 %v255
        %v1524 = vpop.f32.mrb[0].mxu0
        %v1525 = vadd.f32 %v1300, %v1524
        %v1526 = vpop.f32.mrb[0].mxu0
        %1527 = vmatprep.mubr.f32.mxu0 %v372
        %1528 = vmatmul.mubr.f32.gmra.mrb[0].mxu0 %v256
        %v1529 = vpop.f32.mrb[0].mxu0
        %v1530 = vadd.f32 %v1305, %v1529
        %v1531 = vpop.f32.mrb[0].mxu0
        %1532 = vmatprep.mubr.f32.mxu0 %v375
        %1533 = vmatmul.mubr.f32.gmra.mrb[0].mxu0 %v258
        %v1534 = vpop.f32.mrb[0].mxu0
        %v1535 = vadd.f32 %v1310, %v1534
        %v1536 = vpop.f32.mrb[0].mxu0
        %1537 = vmatprep.mubr.f32.mxu0 %v377
        %1538 = vmatmul.mubr.f32.gmra.mrb[0].mxu0 %v259
        %v1539 = vpop.f32.mrb[0].mxu0
        %v1540 = vadd.f32 %v1315, %v1539
        %v1541 = vpop.f32.mrb[0].mxu0
        %1542 = vmatprep.mubr.f32.mxu0 %v380
        %1543 = vmatmul.mubr.f32.gmra.mrb[0].mxu0 %v261
        %v1544 = vpop.f32.mrb[0].mxu0
        %v1545 = vadd.f32 %v1320, %v1544
        %v1546 = vpop.f32.mrb[0].mxu0
        %1547 = vmatprep.mubr.f32.mxu0 %v382
        %1548 = vmatmul.mubr.f32.gmra.mrb[0].mxu0 %v262
        %v1549 = vpop.f32.mrb[0].mxu0
        %v1550 = vadd.f32 %v1325, %v1549
        %v1551 = vpop.f32.mrb[0].mxu0
        %1552 = vmatprep.mubr.f32.mxu0 %v385
        %1553 = vmatmul.mubr.f32.gmra.mrb[0].mxu0 %v264
        %v1554 = vpop.f32.mrb[0].mxu0
        %v1555 = vadd.f32 %v1330, %v1554
        %v1556 = vpop.f32.mrb[0].mxu0
        %1557 = vmatprep.mubr.f32.mxu0 %v387
        %1558 = vmatmul.mubr.f32.gmra.mrb[0].mxu0 %v265
        %v1559 = vpop.f32.mrb[0].mxu0
        %v1560 = vadd.f32 %v1335, %v1559
        %v1561 = vpop.f32.mrb[0].mxu0
        %1562 = vmatprep.mubr.f32.mxu0 %v390
        %1563 = vmatmul.mubr.f32.gmra.mrb[0].mxu0 %v267
        %v1564 = vpop.f32.mrb[0].mxu0
        %v1565 = vadd.f32 %v1340, %v1564
        %v1566 = vpop.f32.mrb[0].mxu0
        %1567 = vmatprep.mubr.f32.mxu0 %v392
        %1568 = vmatmul.mubr.f32.gmra.mrb[0].mxu0 %v268
        %v1569 = vpop.f32.mrb[0].mxu0
        %v1570 = vadd.f32 %v1345, %v1569
        %v1571 = vpop.f32.mrb[0].mxu0
        %1572 = vmatprep.mubr.f32.mxu0 %v395
        %1573 = vmatmul.mubr.f32.gmra.mrb[0].mxu0 %v270
        %v1574 = vpop.f32.mrb[0].mxu0
        %v1575 = vadd.f32 %v1350, %v1574
        %v1576 = vpop.f32.mrb[0].mxu0
        %1577 = vmatprep.mubr.f32.mxu0 %v397
        %1578 = vmatmul.mubr.f32.gmra.mrb[0].mxu0 %v271
        %v1579 = vpop.f32.mrb[0].mxu0
        %v1580 = vadd.f32 %v1355, %v1579
        %v1581 = vpop.f32.mrb[0].mxu0
        %1582 = vmatprep.mubr.f32.mxu0 %v400
        %1583 = vmatmul.mubr.f32.gmra.mrb[0].mxu0 %v273
        %v1584 = vpop.f32.mrb[0].mxu0
        %v1585 = vadd.f32 %v1360, %v1584
        %v1586 = vpop.f32.mrb[0].mxu0
        %1587 = vmatprep.mubr.f32.mxu0 %v402
        %1588 = vmatmul.mubr.f32.gmra.mrb[0].mxu0 %v274
        %v1589 = vpop.f32.mrb[0].mxu0
        %v1590 = vadd.f32 %v1365, %v1589
        %v1591 = vpop.f32.mrb[0].mxu0
        %1592 = vmatprep.mubr.f32.mxu0 %v405
        %1593 = vmatmul.mubr.f32.gmra.mrb[0].mxu0 %v276
        %v1594 = vpop.f32.mrb[0].mxu0
        %v1595 = vadd.f32 %v1370, %v1594
        %v1596 = vpop.f32.mrb[0].mxu0
        %1597 = vmatprep.mubr.f32.mxu0 %v407
        %1598 = vmatmul.mubr.f32.gmra.mrb[0].mxu0 %v277
        %v1599 = vpop.f32.mrb[0].mxu0
        %v1600 = vadd.f32 %v1375, %v1599
        %v1601 = vpop.f32.mrb[0].mxu0
        %1602 = vmatprep.mubr.f32.mxu0 %v410
        %1603 = vmatmul.mubr.f32.gmra.mrb[0].mxu0 %v279
        %v1604 = vpop.f32.mrb[0].mxu0
        %v1605 = vadd.f32 %v1380, %v1604
        %v1606 = vpop.f32.mrb[0].mxu0
        %1607 = vmatprep.mubr.f32.mxu0 %v412
        %1608 = vmatmul.mubr.f32.gmra.mrb[0].mxu0 %v280
        %v1609 = vpop.f32.mrb[0].mxu0
        %v1610 = vadd.f32 %v1385, %v1609
        %v1611 = vpop.f32.mrb[0].mxu0
        %1612 = vmatprep.mubr.f32.mxu0 %v415
        %1613 = vmatmul.mubr.f32.gmra.mrb[0].mxu0 %v282
        %v1614 = vpop.f32.mrb[0].mxu0
        %v1615 = vadd.f32 %v1390, %v1614
        %v1616 = vpop.f32.mrb[0].mxu0
        %1617 = vmatprep.mubr.f32.mxu0 %v417
        %1618 = vmatmul.mubr.f32.gmra.mrb[0].mxu0 %v283
        %v1619 = vpop.f32.mrb[0].mxu0
        %v1620 = vadd.f32 %v1395, %v1619
        %v1621 = vpop.f32.mrb[0].mxu0
        %1622 = vmatprep.mubr.f32.mxu0 %v420
        %1623 = vmatmul.mubr.f32.gmra.mrb[0].mxu0 %v285
        %v1624 = vpop.f32.mrb[0].mxu0
        %v1625 = vadd.f32 %v1400, %v1624
        %v1626 = vpop.f32.mrb[0].mxu0
        %1627 = vmatprep.mubr.f32.mxu0 %v422
        %1628 = vmatmul.mubr.f32.gmra.mrb[0].mxu0 %v286
        %v1629 = vpop.f32.mrb[0].mxu0
        %v1630 = vadd.f32 %v1405, %v1629
        %v1631 = vpop.f32.mrb[0].mxu0
        %1632 = vmatprep.mubr.f32.mxu0 %v573
        %1633 = vmatmul.mubr.f32.gmra.mrb[0].mxu0 %v288
        %v1634 = vpop.f32.mrb[0].mxu0
        %v1635 = vadd.f32 %v1410, %v1634
        %v1636 = vpop.f32.mrb[0].mxu0
        %1637 = vmatprep.mubr.f32.mxu0 %v575
        %1638 = vmatmul.mubr.f32.gmra.mrb[0].mxu0 %v289
        %v1639 = vpop.f32.mrb[0].mxu0
        %v1640 = vadd.f32 %v1415, %v1639
        %v1641 = vpop.f32.mrb[0].mxu0
        %1642 = vmatprep.mubr.f32.mxu0 %v590
        %1643 = vmatmul.mubr.f32.gmra.mrb[0].mxu0 %v291
        %v1644 = vpop.f32.mrb[0].mxu0
        %v1645 = vadd.f32 %v1420, %v1644
        %v1646 = vpop.f32.mrb[0].mxu0
        %1647 = vmatprep.mubr.f32.mxu0 %v592
        %1648 = vmatmul.mubr.f32.gmra.mrb[0].mxu0 %v292
        %v1649 = vpop.f32.mrb[0].mxu0
        %v1650 = vadd.f32 %v1425, %v1649
        %v1651 = vpop.f32.mrb[0].mxu0
        %1652 = vdwg.mxu0
        %1653 = vmatprep.subr.mxu0 0.0
        %1654 = vmatpush1.msra.mxu0 %v730
        %1655 = vmatprep.subr.mxu0 0.0
        %1656 = vmatpush1.msra.mxu0 %v731
        %1657 = vmatprep.subr.mxu0 0.0
        %1658 = vmatpush1.msra.mxu0 %v732
        %1659 = vmatprep.subr.mxu0 0.0
        %1660 = vmatpush1.msra.mxu0 %v733
        %1661 = vmatprep.subr.mxu0 0.0
        %1662 = vmatpush1.msra.mxu0 %v734
        %1663 = vmatprep.subr.mxu0 0.0
        %1664 = vmatpush1.msra.mxu0 %v735
        %1665 = vmatprep.subr.mxu0 0.0
        %1666 = vmatpush1.msra.mxu0 %v736
        %1667 = vmatprep.subr.mxu0 0.0
        %1668 = vmatpush1.msra.mxu0 %v737
        %1669 = vmatprep.subr.mxu0 0.0
        %1670 = vmatpush1.msra.mxu0 %v738
        %1671 = vmatprep.subr.mxu0 0.0
        %1672 = vmatpush1.msra.mxu0 %v739
        %1673 = vmatprep.subr.mxu0 0.0
        %1674 = vmatpush1.msra.mxu0 %v740
        %1675 = vmatprep.subr.mxu0 0.0
        %1676 = vmatpush1.msra.mxu0 %v741
        %1677 = vmatprep.subr.mxu0 0.0
        %1678 = vmatpush1.msra.mxu0 %v742
        %1679 = vmatprep.subr.mxu0 0.0
        %1680 = vmatpush1.msra.mxu0 %v743
        %1681 = vmatprep.subr.mxu0 0.0
        %1682 = vmatpush1.msra.mxu0 %v744
        %1683 = vmatprep.subr.mxu0 0.0
        %1684 = vmatpush1.msra.mxu0 %v745
        %1685 = vmatprep.subr.mxu0 0.0
        %1686 = vmatpush1.msra.mxu0 0.0
        %1687 = vmatprep.subr.mxu0 0.0
        %1688 = vmatpush1.msra.mxu0 0.0
        %1689 = vmatprep.subr.mxu0 0.0
        %1690 = vmatpush1.msra.mxu0 0.0
        %1691 = vmatprep.subr.mxu0 0.0
        %1692 = vmatpush1.msra.mxu0 0.0
        %1693 = vmatprep.subr.mxu0 0.0
        %1694 = vmatpush1.msra.mxu0 0.0
        %1695 = vmatprep.subr.mxu0 0.0
        %1696 = vmatpush1.msra.mxu0 0.0
        %1697 = vmatprep.subr.mxu0 0.0
        %1698 = vmatpush1.msra.mxu0 0.0
        %1699 = vmatprep.subr.mxu0 0.0
        %1700 = vmatpush1.msra.mxu0 0.0
        %1701 = vmatprep.subr.mxu0 0.0
        %1702 = vmatpush1.msra.mxu0 0.0
        %1703 = vmatprep.subr.mxu0 0.0
        %1704 = vmatpush1.msra.mxu0 0.0
        %1705 = vmatprep.subr.mxu0 0.0
        %1706 = vmatpush1.msra.mxu0 0.0
        %1707 = vmatprep.subr.mxu0 0.0
        %1708 = vmatpush1.msra.mxu0 0.0
        %1709 = vmatprep.subr.mxu0 0.0
        %1710 = vmatpush1.msra.mxu0 0.0
        %1711 = vmatprep.subr.mxu0 0.0
        %1712 = vmatpush1.msra.mxu0 0.0
        %1713 = vmatprep.subr.mxu0 0.0
        %1714 = vmatpush1.msra.mxu0 0.0
        %1715 = vmatprep.subr.mxu0 0.0
        %1716 = vmatpush1.msra.mxu0 0.0
        %1717 = vmatprep.mubr.f32.mxu0 0.0
        %1718 = vmatmul.mubr.f32.gmra.mrb[0].mxu0 %v468
        %v1719 = vpop.f32.mrb[0].mxu0
        %v1720 = vadd.f32 %v1495, %v1719
        %v1721 = vpop.f32.mrb[0].mxu0
        %1722 = vmatprep.mubr.f32.mxu0 0.0
        %1723 = vmatmul.mubr.f32.gmra.mrb[0].mxu0 %v470
        %v1724 = vpop.f32.mrb[0].mxu0
        %v1725 = vadd.f32 %v1500, %v1724
        %v1726 = vpop.f32.mrb[0].mxu0
        %1727 = vmatprep.mubr.f32.mxu0 0.0
        %1728 = vmatmul.mubr.f32.gmra.mrb[0].mxu0 %v473
        %v1729 = vpop.f32.mrb[0].mxu0
        %v1730 = vadd.f32 %v1505, %v1729
        %v1731 = vpop.f32.mrb[0].mxu0
        %1732 = vmatprep.mubr.f32.mxu0 0.0
        %1733 = vmatmul.mubr.f32.gmra.mrb[0].mxu0 %v475
        %v1734 = vpop.f32.mrb[0].mxu0
        %v1735 = vadd.f32 %v1510, %v1734
        %v1736 = vpop.f32.mrb[0].mxu0
        %1737 = vmatprep.mubr.f32.mxu0 0.0
        %1738 = vmatmul.mubr.f32.gmra.mrb[0].mxu0 %v478
        %v1739 = vpop.f32.mrb[0].mxu0
        %v1740 = vadd.f32 %v1515, %v1739
        %v1741 = vpop.f32.mrb[0].mxu0
        %1742 = vmatprep.mubr.f32.mxu0 0.0
        %1743 = vmatmul.mubr.f32.gmra.mrb[0].mxu0 %v480
        %v1744 = vpop.f32.mrb[0].mxu0
        %v1745 = vadd.f32 %v1520, %v1744
        %v1746 = vpop.f32.mrb[0].mxu0
        %1747 = vmatprep.mubr.f32.mxu0 0.0
        %1748 = vmatmul.mubr.f32.gmra.mrb[0].mxu0 %v483
        %v1749 = vpop.f32.mrb[0].mxu0
        %v1750 = vadd.f32 %v1525, %v1749
        %v1751 = vpop.f32.mrb[0].mxu0
        %1752 = vmatprep.mubr.f32.mxu0 0.0
        %1753 = vmatmul.mubr.f32.gmra.mrb[0].mxu0 %v485
        %v1754 = vpop.f32.mrb[0].mxu0
        %v1755 = vadd.f32 %v1530, %v1754
        %v1756 = vpop.f32.mrb[0].mxu0
        %1757 = vmatprep.mubr.f32.mxu0 0.0
        %1758 = vmatmul.mubr.f32.gmra.mrb[0].mxu0 %v488
        %v1759 = vpop.f32.mrb[0].mxu0
        %v1760 = vadd.f32 %v1535, %v1759
        %v1761 = vpop.f32.mrb[0].mxu0
        %1762 = vmatprep.mubr.f32.mxu0 0.0
        %1763 = vmatmul.mubr.f32.gmra.mrb[0].mxu0 %v490
        %v1764 = vpop.f32.mrb[0].mxu0
        %v1765 = vadd.f32 %v1540, %v1764
        %v1766 = vpop.f32.mrb[0].mxu0
        %1767 = vmatprep.mubr.f32.mxu0 0.0
        %1768 = vmatmul.mubr.f32.gmra.mrb[0].mxu0 %v493
        %v1769 = vpop.f32.mrb[0].mxu0
        %v1770 = vadd.f32 %v1545, %v1769
        %v1771 = vpop.f32.mrb[0].mxu0
        %1772 = vmatprep.mubr.f32.mxu0 0.0
        %1773 = vmatmul.mubr.f32.gmra.mrb[0].mxu0 %v495
        %v1774 = vpop.f32.mrb[0].mxu0
        %v1775 = vadd.f32 %v1550, %v1774
        %v1776 = vpop.f32.mrb[0].mxu0
        %1777 = vmatprep.mubr.f32.mxu0 0.0
        %1778 = vmatmul.mubr.f32.gmra.mrb[0].mxu0 %v498
        %v1779 = vpop.f32.mrb[0].mxu0
        %v1780 = vadd.f32 %v1555, %v1779
        %v1781 = vpop.f32.mrb[0].mxu0
        %1782 = vmatprep.mubr.f32.mxu0 0.0
        %1783 = vmatmul.mubr.f32.gmra.mrb[0].mxu0 %v500
        %v1784 = vpop.f32.mrb[0].mxu0
        %v1785 = vadd.f32 %v1560, %v1784
        %v1786 = vpop.f32.mrb[0].mxu0
        %1787 = vmatprep.mubr.f32.mxu0 0.0
        %1788 = vmatmul.mubr.f32.gmra.mrb[0].mxu0 %v503
        %v1789 = vpop.f32.mrb[0].mxu0
        %v1790 = vadd.f32 %v1565, %v1789
        %v1791 = vpop.f32.mrb[0].mxu0
        %1792 = vmatprep.mubr.f32.mxu0 0.0
        %1793 = vmatmul.mubr.f32.gmra.mrb[0].mxu0 %v505
        %v1794 = vpop.f32.mrb[0].mxu0
        %v1795 = vadd.f32 %v1570, %v1794
        %v1796 = vpop.f32.mrb[0].mxu0
        %1797 = vmatprep.mubr.f32.mxu0 0.0
        %1798 = vmatmul.mubr.f32.gmra.mrb[0].mxu0 %v508
        %v1799 = vpop.f32.mrb[0].mxu0
        %v1800 = vadd.f32 %v1575, %v1799
        %v1801 = vpop.f32.mrb[0].mxu0
        %1802 = vmatprep.mubr.f32.mxu0 0.0
        %1803 = vmatmul.mubr.f32.gmra.mrb[0].mxu0 %v510
        %v1804 = vpop.f32.mrb[0].mxu0
        %v1805 = vadd.f32 %v1580, %v1804
        %v1806 = vpop.f32.mrb[0].mxu0
        %1807 = vmatprep.mubr.f32.mxu0 0.0
        %1808 = vmatmul.mubr.f32.gmra.mrb[0].mxu0 %v513
        %v1809 = vpop.f32.mrb[0].mxu0
        %v1810 = vadd.f32 %v1585, %v1809
        %v1811 = vpop.f32.mrb[0].mxu0
        %1812 = vmatprep.mubr.f32.mxu0 0.0
        %1813 = vmatmul.mubr.f32.gmra.mrb[0].mxu0 %v515
        %v1814 = vpop.f32.mrb[0].mxu0
        %v1815 = vadd.f32 %v1590, %v1814
        %v1816 = vpop.f32.mrb[0].mxu0
        %1817 = vmatprep.mubr.f32.mxu0 0.0
        %1818 = vmatmul.mubr.f32.gmra.mrb[0].mxu0 %v518
        %v1819 = vpop.f32.mrb[0].mxu0
        %v1820 = vadd.f32 %v1595, %v1819
        %v1821 = vpop.f32.mrb[0].mxu0
        %1822 = vmatprep.mubr.f32.mxu0 0.0
        %1823 = vmatmul.mubr.f32.gmra.mrb[0].mxu0 %v520
        %v1824 = vpop.f32.mrb[0].mxu0
        %v1825 = vadd.f32 %v1600, %v1824
        %v1826 = vpop.f32.mrb[0].mxu0
        %1827 = vmatprep.mubr.f32.mxu0 0.0
        %1828 = vmatmul.mubr.f32.gmra.mrb[0].mxu0 %v523
        %v1829 = vpop.f32.mrb[0].mxu0
        %v1830 = vadd.f32 %v1605, %v1829
        %v1831 = vpop.f32.mrb[0].mxu0
        %1832 = vmatprep.mubr.f32.mxu0 0.0
        %1833 = vmatmul.mubr.f32.gmra.mrb[0].mxu0 %v525
        %v1834 = vpop.f32.mrb[0].mxu0
        %v1835 = vadd.f32 %v1610, %v1834
        %v1836 = vpop.f32.mrb[0].mxu0
        %1837 = vmatprep.mubr.f32.mxu0 0.0
        %1838 = vmatmul.mubr.f32.gmra.mrb[0].mxu0 %v528
        %v1839 = vpop.f32.mrb[0].mxu0
        %v1840 = vadd.f32 %v1615, %v1839
        %v1841 = vpop.f32.mrb[0].mxu0
        %1842 = vmatprep.mubr.f32.mxu0 0.0
        %1843 = vmatmul.mubr.f32.gmra.mrb[0].mxu0 %v530
        %v1844 = vpop.f32.mrb[0].mxu0
        %v1845 = vadd.f32 %v1620, %v1844
        %v1846 = vpop.f32.mrb[0].mxu0
        %1847 = vmatprep.mubr.f32.mxu0 0.0
        %1848 = vmatmul.mubr.f32.gmra.mrb[0].mxu0 %v533
        %v1849 = vpop.f32.mrb[0].mxu0
        %v1850 = vadd.f32 %v1625, %v1849
        %v1851 = vpop.f32.mrb[0].mxu0
        %1852 = vmatprep.mubr.f32.mxu0 0.0
        %1853 = vmatmul.mubr.f32.gmra.mrb[0].mxu0 %v535
        %v1854 = vpop.f32.mrb[0].mxu0
        %v1855 = vadd.f32 %v1630, %v1854
        %v1856 = vpop.f32.mrb[0].mxu0
        %1857 = vmatprep.mubr.f32.mxu0 0.0
        %1858 = vmatmul.mubr.f32.gmra.mrb[0].mxu0 %v580
        %v1859 = vpop.f32.mrb[0].mxu0
        %v1860 = vadd.f32 %v1635, %v1859
        %v1861 = vpop.f32.mrb[0].mxu0
        %1862 = vmatprep.mubr.f32.mxu0 0.0
        %1863 = vmatmul.mubr.f32.gmra.mrb[0].mxu0 %v582
        %v1864 = vpop.f32.mrb[0].mxu0
        %v1865 = vadd.f32 %v1640, %v1864
        %v1866 = vpop.f32.mrb[0].mxu0
        %1867 = vmatprep.mubr.f32.mxu0 0.0
        %1868 = vmatmul.mubr.f32.gmra.mrb[0].mxu0 %v597
        %v1869 = vpop.f32.mrb[0].mxu0
        %v1870 = vadd.f32 %v1645, %v1869
        %v1871 = vpop.f32.mrb[0].mxu0
        %1872 = vmatprep.mubr.f32.mxu0 0.0
        %1873 = vmatmul.mubr.f32.gmra.mrb[0].mxu0 %v599
        %v1874 = vpop.f32.mrb[0].mxu0
        %v1875 = vadd.f32 %v1650, %v1874
        %v1876 = vpop.f32.mrb[0].mxu0
        %1877 = vdwg.mxu0
        %v1878 = vsub.f32 0.0, %v1720
        %v1879 = vsub.f32 0.0, %v1725
        %v1880 = vsub.f32 0.0, %v1730
        %v1881 = vsub.f32 0.0, %v1735
        %v1882 = vsub.f32 0.0, %v1740
        %v1883 = vsub.f32 0.0, %v1745
        %v1884 = vsub.f32 0.0, %v1750
        %v1885 = vsub.f32 0.0, %v1755
        %v1886 = vsub.f32 0.0, %v1760
        %v1887 = vsub.f32 0.0, %v1765
        %v1888 = vsub.f32 0.0, %v1770
        %v1889 = vsub.f32 0.0, %v1775
        %v1890 = vsub.f32 0.0, %v1780
        %v1891 = vsub.f32 0.0, %v1785
        %v1892 = vsub.f32 0.0, %v1790
        %v1893 = vsub.f32 0.0, %v1795
        %v1894 = vsub.f32 0.0, %v1800
        %v1895 = vsub.f32 0.0, %v1805
        %v1896 = vsub.f32 0.0, %v1810
        %v1897 = vsub.f32 0.0, %v1815
        %v1898 = vsub.f32 0.0, %v1820
        %v1899 = vsub.f32 0.0, %v1825
        %v1900 = vsub.f32 0.0, %v1830
        %v1901 = vsub.f32 0.0, %v1835
        %v1902 = vsub.f32 0.0, %v1840
        %v1903 = vsub.f32 0.0, %v1845
        %v1904 = vsub.f32 0.0, %v1850
        %v1905 = vsub.f32 0.0, %v1855
        %v1906 = vsub.f32 0.0, %v1860
        %v1907 = vsub.f32 0.0, %v1865
        %v1908 = vsub.f32 0.0, %v1870
        %v1909 = vsub.f32 0.0, %v1875
        %v1910 = vmul.f32 %v1878, 1.442695
        %v1911 = vpow.pop %v1910
        %v1912 = vmul.f32 %v1879, 1.442695
        %v1913 = vpow.pop %v1912
        %v1914 = vmul.f32 %v1880, 1.442695
        %v1915 = vpow.pop %v1914
        %v1916 = vmul.f32 %v1881, 1.442695
        %v1917 = vpow.pop %v1916
        %v1918 = vmul.f32 %v1882, 1.442695
        %v1919 = vpow.pop %v1918
        %v1920 = vmul.f32 %v1883, 1.442695
        %v1921 = vpow.pop %v1920
        %v1922 = vmul.f32 %v1884, 1.442695
        %v1923 = vpow.pop %v1922
        %v1924 = vmul.f32 %v1885, 1.442695
        %v1925 = vpow.pop %v1924
        %v1926 = vmul.f32 %v1886, 1.442695
        %v1927 = vpow.pop %v1926
        %v1928 = vmul.f32 %v1887, 1.442695
        %v1929 = vpow.pop %v1928
        %v1930 = vmul.f32 %v1888, 1.442695
        %v1931 = vpow.pop %v1930
        %v1932 = vmul.f32 %v1889, 1.442695
        %v1933 = vpow.pop %v1932
        %v1934 = vmul.f32 %v1890, 1.442695
        %v1935 = vpow.pop %v1934
        %v1936 = vmul.f32 %v1891, 1.442695
        %v1937 = vpow.pop %v1936
        %v1938 = vmul.f32 %v1892, 1.442695
        %v1939 = vpow.pop %v1938
        %v1940 = vmul.f32 %v1893, 1.442695
        %v1941 = vpow.pop %v1940
        %v1942 = vmul.f32 %v1894, 1.442695
        %v1943 = vpow.pop %v1942
        %v1944 = vmul.f32 %v1895, 1.442695
        %v1945 = vpow.pop %v1944
        %v1946 = vmul.f32 %v1896, 1.442695
        %v1947 = vpow.pop %v1946
        %v1948 = vmul.f32 %v1897, 1.442695
        %v1949 = vpow.pop %v1948
        %v1950 = vmul.f32 %v1898, 1.442695
        %v1951 = vpow.pop %v1950
        %v1952 = vmul.f32 %v1899, 1.442695
        %v1953 = vpow.pop %v1952
        %v1954 = vmul.f32 %v1900, 1.442695
        %v1955 = vpow.pop %v1954
        %v1956 = vmul.f32 %v1901, 1.442695
        %v1957 = vpow.pop %v1956
        %v1958 = vmul.f32 %v1902, 1.442695
        %v1959 = vpow.pop %v1958
        %v1960 = vmul.f32 %v1903, 1.442695
        %v1961 = vpow.pop %v1960
        %v1962 = vmul.f32 %v1904, 1.442695
        %v1963 = vpow.pop %v1962
        %v1964 = vmul.f32 %v1905, 1.442695
        %v1965 = vpow.pop %v1964
        %v1966 = vmul.f32 %v1906, 1.442695
        %v1967 = vpow.pop %v1966
        %v1968 = vmul.f32 %v1907, 1.442695
        %v1969 = vpow.pop %v1968
        %v1970 = vmul.f32 %v1908, 1.442695
        %v1971 = vpow.pop %v1970
        %v1972 = vmul.f32 %v1909, 1.442695
        %v1973 = vpow.pop %v1972
        %v1974 = vadd.f32 %v1911, 1.0
        %v1975 = vadd.f32 %v1913, 1.0
        %v1976 = vadd.f32 %v1915, 1.0
        %v1977 = vadd.f32 %v1917, 1.0
        %v1978 = vadd.f32 %v1919, 1.0
        %v1979 = vadd.f32 %v1921, 1.0
        %v1980 = vadd.f32 %v1923, 1.0
        %v1981 = vadd.f32 %v1925, 1.0
        %v1982 = vadd.f32 %v1927, 1.0
        %v1983 = vadd.f32 %v1929, 1.0
        %v1984 = vadd.f32 %v1931, 1.0
        %v1985 = vadd.f32 %v1933, 1.0
        %v1986 = vadd.f32 %v1935, 1.0
        %v1987 = vadd.f32 %v1937, 1.0
        %v1988 = vadd.f32 %v1939, 1.0
        %v1989 = vadd.f32 %v1941, 1.0
        %v1990 = vadd.f32 %v1943, 1.0
        %v1991 = vadd.f32 %v1945, 1.0
        %v1992 = vadd.f32 %v1947, 1.0
        %v1993 = vadd.f32 %v1949, 1.0
        %v1994 = vadd.f32 %v1951, 1.0
        %v1995 = vadd.f32 %v1953, 1.0
        %v1996 = vadd.f32 %v1955, 1.0
        %v1997 = vadd.f32 %v1957, 1.0
        %v1998 = vadd.f32 %v1959, 1.0
        %v1999 = vadd.f32 %v1961, 1.0
        %v2000 = vadd.f32 %v1963, 1.0
        %v2001 = vadd.f32 %v1965, 1.0
        %v2002 = vadd.f32 %v1967, 1.0
        %v2003 = vadd.f32 %v1969, 1.0
        %v2004 = vadd.f32 %v1971, 1.0
        %v2005 = vadd.f32 %v1973, 1.0
        %v2006 = vrcp.pop %v1974
        %v2007 = vrcp.pop %v1975
        %v2008 = vrcp.pop %v1976
        %v2009 = vrcp.pop %v1977
        %v2010 = vrcp.pop %v1978
        %v2011 = vrcp.pop %v1979
        %v2012 = vrcp.pop %v1980
        %v2013 = vrcp.pop %v1981
        %v2014 = vrcp.pop %v1982
        %v2015 = vrcp.pop %v1983
        %v2016 = vrcp.pop %v1984
        %v2017 = vrcp.pop %v1985
        %v2018 = vrcp.pop %v1986
        %v2019 = vrcp.pop %v1987
        %v2020 = vrcp.pop %v1988
        %v2021 = vrcp.pop %v1989
        %v2022 = vrcp.pop %v1990
        %v2023 = vrcp.pop %v1991
        %v2024 = vrcp.pop %v1992
        %v2025 = vrcp.pop %v1993
        %v2026 = vrcp.pop %v1994
        %v2027 = vrcp.pop %v1995
        %v2028 = vrcp.pop %v1996
        %v2029 = vrcp.pop %v1997
        %v2030 = vrcp.pop %v1998
        %v2031 = vrcp.pop %v1999
        %v2032 = vrcp.pop %v2000
        %v2033 = vrcp.pop %v2001
        %v2034 = vrcp.pop %v2002
        %v2035 = vrcp.pop %v2003
        %v2036 = vrcp.pop %v2004
        %v2037 = vrcp.pop %v2005
        %v2038 = vmul.f32 %v1720, %v2006
        %v2039 = vmul.f32 %v1725, %v2007
        %v2040 = vmul.f32 %v1730, %v2008
        %v2041 = vmul.f32 %v1735, %v2009
        %v2042 = vmul.f32 %v1740, %v2010
        %v2043 = vmul.f32 %v1745, %v2011
        %v2044 = vmul.f32 %v1750, %v2012
        %v2045 = vmul.f32 %v1755, %v2013
        %v2046 = vmul.f32 %v1760, %v2014
        %v2047 = vmul.f32 %v1765, %v2015
        %v2048 = vmul.f32 %v1770, %v2016
        %v2049 = vmul.f32 %v1775, %v2017
        %v2050 = vmul.f32 %v1780, %v2018
        %v2051 = vmul.f32 %v1785, %v2019
        %v2052 = vmul.f32 %v1790, %v2020
        %v2053 = vmul.f32 %v1795, %v2021
        %v2054 = vmul.f32 %v1800, %v2022
        %v2055 = vmul.f32 %v1805, %v2023
        %v2056 = vmul.f32 %v1810, %v2024
        %v2057 = vmul.f32 %v1815, %v2025
        %v2058 = vmul.f32 %v1820, %v2026
        %v2059 = vmul.f32 %v1825, %v2027
        %v2060 = vmul.f32 %v1830, %v2028
        %v2061 = vmul.f32 %v1835, %v2029
        %v2062 = vmul.f32 %v1840, %v2030
        %v2063 = vmul.f32 %v1845, %v2031
        %v2064 = vmul.f32 %v1850, %v2032
        %v2065 = vmul.f32 %v1855, %v2033
        %v2066 = vmul.f32 %v1860, %v2034
        %v2067 = vmul.f32 %v1865, %v2035
        %v2068 = vmul.f32 %v1870, %v2036
        %v2069 = vmul.f32 %v1875, %v2037
        %vm2103 = vcmask 1040384
        %v2104 = vrot.slane 0.0, 7
        %v2105 = vsel %vm2103, %v2104, %v2104
        %v2106 = vrot.slane %v2038, 7
        %v2107 = vrot.slane %v2039, 7
        %v2108 = vsel %vm2103, %v2106, %v2107
        %v2109 = vrot.slane %v2040, 7
        %v2110 = vrot.slane %v2041, 7
        %v2111 = vsel %vm2103, %v2109, %v2110
        %v2112 = vrot.slane %v2042, 7
        %v2113 = vrot.slane %v2043, 7
        %v2114 = vsel %vm2103, %v2112, %v2113
        %v2115 = vrot.slane %v2044, 7
        %v2116 = vrot.slane %v2045, 7
        %v2117 = vsel %vm2103, %v2115, %v2116
        %v2118 = vrot.slane %v2046, 7
        %v2119 = vrot.slane %v2047, 7
        %v2120 = vsel %vm2103, %v2118, %v2119
        %v2121 = vrot.slane %v2048, 7
        %v2122 = vrot.slane %v2049, 7
        %v2123 = vsel %vm2103, %v2121, %v2122
        %v2124 = vrot.slane %v2050, 7
        %v2125 = vrot.slane %v2051, 7
        %v2126 = vsel %vm2103, %v2124, %v2125
        %v2127 = vrot.slane %v2052, 7
        %v2128 = vrot.slane %v2053, 7
        %v2129 = vsel %vm2103, %v2127, %v2128
        %v2130 = vrot.slane %v2054, 7
        %v2131 = vrot.slane %v2055, 7
        %v2132 = vsel %vm2103, %v2130, %v2131
        %v2133 = vrot.slane %v2056, 7
        %v2134 = vrot.slane %v2057, 7
        %v2135 = vsel %vm2103, %v2133, %v2134
        %v2136 = vrot.slane %v2058, 7
        %v2137 = vrot.slane %v2059, 7
        %v2138 = vsel %vm2103, %v2136, %v2137
        %v2139 = vrot.slane %v2060, 7
        %v2140 = vrot.slane %v2061, 7
        %v2141 = vsel %vm2103, %v2139, %v2140
        %v2142 = vrot.slane %v2062, 7
        %v2143 = vrot.slane %v2063, 7
        %v2144 = vsel %vm2103, %v2142, %v2143
        %v2145 = vrot.slane %v2064, 7
        %v2146 = vrot.slane %v2065, 7
        %v2147 = vsel %vm2103, %v2145, %v2146
        %v2148 = vrot.slane %v2066, 7
        %v2149 = vrot.slane %v2067, 7
        %v2150 = vsel %vm2103, %v2148, %v2149
        %v2151 = vrot.slane %v2068, 7
        %v2152 = vrot.slane %v2069, 7
        %v2153 = vsel %vm2103, %v2151, %v2152
        %v2204 = vsel %vm2103, 0.0, %v2104
        %v2205 = vsel %vm2103, 0.0, %v2106
        %v2206 = vsel %vm2103, 0.0, %v2109
        %v2207 = vsel %vm2103, 0.0, %v2112
        %v2208 = vsel %vm2103, 0.0, %v2115
        %v2209 = vsel %vm2103, 0.0, %v2118
        %v2210 = vsel %vm2103, 0.0, %v2121
        %v2211 = vsel %vm2103, 0.0, %v2124
        %v2212 = vsel %vm2103, 0.0, %v2127
        %v2213 = vsel %vm2103, 0.0, %v2130
        %v2214 = vsel %vm2103, 0.0, %v2133
        %v2215 = vsel %vm2103, 0.0, %v2136
        %v2216 = vsel %vm2103, 0.0, %v2139
        %v2217 = vsel %vm2103, 0.0, %v2142
        %v2218 = vsel %vm2103, 0.0, %v2145
        %v2219 = vsel %vm2103, 0.0, %v2148
        %v2220 = vsel %vm2103, 0.0, %v2151
        %v2221 = vsel %vm2103, %v2104, 0.0
        %v2222 = vsel %vm2103, %v2107, 0.0
        %v2223 = vsel %vm2103, %v2110, 0.0
        %v2224 = vsel %vm2103, %v2113, 0.0
        %v2225 = vsel %vm2103, %v2116, 0.0
        %v2226 = vsel %vm2103, %v2119, 0.0
        %v2227 = vsel %vm2103, %v2122, 0.0
        %v2228 = vsel %vm2103, %v2125, 0.0
        %v2229 = vsel %vm2103, %v2128, 0.0
        %v2230 = vsel %vm2103, %v2131, 0.0
        %v2231 = vsel %vm2103, %v2134, 0.0
        %v2232 = vsel %vm2103, %v2137, 0.0
        %v2233 = vsel %vm2103, %v2140, 0.0
        %v2234 = vsel %vm2103, %v2143, 0.0
        %v2235 = vsel %vm2103, %v2146, 0.0
        %v2236 = vsel %vm2103, %v2149, 0.0
        %v2237 = vsel %vm2103, %v2152, 0.0
        %v2270 = vrot.slane %v2204, 1
        %v2271 = vrot.slane %v2105, 1
        %v2272 = vsel %vm342, %v2270, %v2271
        %v2273 = vrot.slane %v2221, 1
        %v2274 = vsel %vm342, %v2271, %v2273
        %v2275 = vrot.slane %v2205, 1
        %v2276 = vrot.slane %v2108, 1
        %v2277 = vsel %vm342, %v2275, %v2276
        %v2278 = vrot.slane %v2222, 1
        %v2279 = vsel %vm342, %v2276, %v2278
        %v2280 = vrot.slane %v2206, 1
        %v2281 = vrot.slane %v2111, 1
        %v2282 = vsel %vm342, %v2280, %v2281
        %v2283 = vrot.slane %v2223, 1
        %v2284 = vsel %vm342, %v2281, %v2283
        %v2285 = vrot.slane %v2207, 1
        %v2286 = vrot.slane %v2114, 1
        %v2287 = vsel %vm342, %v2285, %v2286
        %v2288 = vrot.slane %v2224, 1
        %v2289 = vsel %vm342, %v2286, %v2288
        %v2290 = vrot.slane %v2208, 1
        %v2291 = vrot.slane %v2117, 1
        %v2292 = vsel %vm342, %v2290, %v2291
        %v2293 = vrot.slane %v2225, 1
        %v2294 = vsel %vm342, %v2291, %v2293
        %v2295 = vrot.slane %v2209, 1
        %v2296 = vrot.slane %v2120, 1
        %v2297 = vsel %vm342, %v2295, %v2296
        %v2298 = vrot.slane %v2226, 1
        %v2299 = vsel %vm342, %v2296, %v2298
        %v2300 = vrot.slane %v2210, 1
        %v2301 = vrot.slane %v2123, 1
        %v2302 = vsel %vm342, %v2300, %v2301
        %v2303 = vrot.slane %v2227, 1
        %v2304 = vsel %vm342, %v2301, %v2303
        %v2305 = vrot.slane %v2211, 1
        %v2306 = vrot.slane %v2126, 1
        %v2307 = vsel %vm342, %v2305, %v2306
        %v2308 = vrot.slane %v2228, 1
        %v2309 = vsel %vm342, %v2306, %v2308
        %v2310 = vrot.slane %v2212, 1
        %v2311 = vrot.slane %v2129, 1
        %v2312 = vsel %vm342, %v2310, %v2311
        %v2313 = vrot.slane %v2229, 1
        %v2314 = vsel %vm342, %v2311, %v2313
        %v2315 = vrot.slane %v2213, 1
        %v2316 = vrot.slane %v2132, 1
        %v2317 = vsel %vm342, %v2315, %v2316
        %v2318 = vrot.slane %v2230, 1
        %v2319 = vsel %vm342, %v2316, %v2318
        %v2320 = vrot.slane %v2214, 1
        %v2321 = vrot.slane %v2135, 1
        %v2322 = vsel %vm342, %v2320, %v2321
        %v2323 = vrot.slane %v2231, 1
        %v2324 = vsel %vm342, %v2321, %v2323
        %v2325 = vrot.slane %v2215, 1
        %v2326 = vrot.slane %v2138, 1
        %v2327 = vsel %vm342, %v2325, %v2326
        %v2328 = vrot.slane %v2232, 1
        %v2329 = vsel %vm342, %v2326, %v2328
        %v2330 = vrot.slane %v2216, 1
        %v2331 = vrot.slane %v2141, 1
        %v2332 = vsel %vm342, %v2330, %v2331
        %v2333 = vrot.slane %v2233, 1
        %v2334 = vsel %vm342, %v2331, %v2333
        %v2335 = vrot.slane %v2217, 1
        %v2336 = vrot.slane %v2144, 1
        %v2337 = vsel %vm342, %v2335, %v2336
        %v2338 = vrot.slane %v2234, 1
        %v2339 = vsel %vm342, %v2336, %v2338
        %v2340 = vrot.slane %v2218, 1
        %v2341 = vrot.slane %v2147, 1
        %v2342 = vsel %vm342, %v2340, %v2341
        %v2343 = vrot.slane %v2235, 1
        %v2344 = vsel %vm342, %v2341, %v2343
        %v2345 = vrot.slane %v2219, 1
        %v2346 = vrot.slane %v2150, 1
        %v2347 = vsel %vm342, %v2345, %v2346
        %v2348 = vrot.slane %v2236, 1
        %v2349 = vsel %vm342, %v2346, %v2348
        %v2382 = vrot.slane %v2204, 2
        %v2383 = vrot.slane %v2105, 2
        %v2384 = vsel %vm455, %v2382, %v2383
        %v2385 = vrot.slane %v2221, 2
        %v2386 = vsel %vm455, %v2383, %v2385
        %v2387 = vrot.slane %v2205, 2
        %v2388 = vrot.slane %v2108, 2
        %v2389 = vsel %vm455, %v2387, %v2388
        %v2390 = vrot.slane %v2222, 2
        %v2391 = vsel %vm455, %v2388, %v2390
        %v2392 = vrot.slane %v2206, 2
        %v2393 = vrot.slane %v2111, 2
        %v2394 = vsel %vm455, %v2392, %v2393
        %v2395 = vrot.slane %v2223, 2
        %v2396 = vsel %vm455, %v2393, %v2395
        %v2397 = vrot.slane %v2207, 2
        %v2398 = vrot.slane %v2114, 2
        %v2399 = vsel %vm455, %v2397, %v2398
        %v2400 = vrot.slane %v2224, 2
        %v2401 = vsel %vm455, %v2398, %v2400
        %v2402 = vrot.slane %v2208, 2
        %v2403 = vrot.slane %v2117, 2
        %v2404 = vsel %vm455, %v2402, %v2403
        %v2405 = vrot.slane %v2225, 2
        %v2406 = vsel %vm455, %v2403, %v2405
        %v2407 = vrot.slane %v2209, 2
        %v2408 = vrot.slane %v2120, 2
        %v2409 = vsel %vm455, %v2407, %v2408
        %v2410 = vrot.slane %v2226, 2
        %v2411 = vsel %vm455, %v2408, %v2410
        %v2412 = vrot.slane %v2210, 2
        %v2413 = vrot.slane %v2123, 2
        %v2414 = vsel %vm455, %v2412, %v2413
        %v2415 = vrot.slane %v2227, 2
        %v2416 = vsel %vm455, %v2413, %v2415
        %v2417 = vrot.slane %v2211, 2
        %v2418 = vrot.slane %v2126, 2
        %v2419 = vsel %vm455, %v2417, %v2418
        %v2420 = vrot.slane %v2228, 2
        %v2421 = vsel %vm455, %v2418, %v2420
        %v2422 = vrot.slane %v2212, 2
        %v2423 = vrot.slane %v2129, 2
        %v2424 = vsel %vm455, %v2422, %v2423
        %v2425 = vrot.slane %v2229, 2
        %v2426 = vsel %vm455, %v2423, %v2425
        %v2427 = vrot.slane %v2213, 2
        %v2428 = vrot.slane %v2132, 2
        %v2429 = vsel %vm455, %v2427, %v2428
        %v2430 = vrot.slane %v2230, 2
        %v2431 = vsel %vm455, %v2428, %v2430
        %v2432 = vrot.slane %v2214, 2
        %v2433 = vrot.slane %v2135, 2
        %v2434 = vsel %vm455, %v2432, %v2433
        %v2435 = vrot.slane %v2231, 2
        %v2436 = vsel %vm455, %v2433, %v2435
        %v2437 = vrot.slane %v2215, 2
        %v2438 = vrot.slane %v2138, 2
        %v2439 = vsel %vm455, %v2437, %v2438
        %v2440 = vrot.slane %v2232, 2
        %v2441 = vsel %vm455, %v2438, %v2440
        %v2442 = vrot.slane %v2216, 2
        %v2443 = vrot.slane %v2141, 2
        %v2444 = vsel %vm455, %v2442, %v2443
        %v2445 = vrot.slane %v2233, 2
        %v2446 = vsel %vm455, %v2443, %v2445
        %v2447 = vrot.slane %v2217, 2
        %v2448 = vrot.slane %v2144, 2
        %v2449 = vsel %vm455, %v2447, %v2448
        %v2450 = vrot.slane %v2234, 2
        %v2451 = vsel %vm455, %v2448, %v2450
        %v2452 = vrot.slane %v2218, 2
        %v2453 = vrot.slane %v2147, 2
        %v2454 = vsel %vm455, %v2452, %v2453
        %v2455 = vrot.slane %v2235, 2
        %v2456 = vsel %vm455, %v2453, %v2455
        %v2457 = vrot.slane %v2219, 2
        %v2458 = vrot.slane %v2150, 2
        %v2459 = vsel %vm455, %v2457, %v2458
        %v2460 = vrot.slane %v2236, 2
        %v2461 = vsel %vm455, %v2458, %v2460
        %v2496 = vrot.slane %v2220, 1
        %v2497 = vrot.slane %v2153, 1
        %v2498 = vsel %vm342, %v2496, %v2497
        %v2499 = vrot.slane %v2237, 1
        %v2500 = vsel %vm342, %v2497, %v2499
        %v2503 = vrot.slane %v2220, 2
        %v2504 = vrot.slane %v2153, 2
        %v2505 = vsel %vm455, %v2503, %v2504
        %v2506 = vrot.slane %v2237, 2
        %v2507 = vsel %vm455, %v2504, %v2506
        %v2510 = vld [vmem:[%s3] sm:$0xff]
        %v2511 = vld [vmem:[%s3 + $0x8] sm:$0xff]
        %v2512 = vld [vmem:[%s3 + $0x10] sm:$0xff]
        %v2513 = vld [vmem:[%s3 + $0x18] sm:$0xff]
        %v2514 = vld [vmem:[%s3 + $0x20] sm:$0xff]
        %v2515 = vld [vmem:[%s3 + $0x28] sm:$0xff]
        %v2516 = vld [vmem:[%s3 + $0x30] sm:$0xff]
        %v2517 = vld [vmem:[%s3 + $0x38] sm:$0xff]
        %v2518 = vld [vmem:[%s3 + $0x40] sm:$0xff]
        %v2519 = vld [vmem:[%s3 + $0x48] sm:$0xff]
        %v2520 = vld [vmem:[%s3 + $0x50] sm:$0xff]
        %v2521 = vld [vmem:[%s3 + $0x58] sm:$0xff]
        %v2522 = vld [vmem:[%s3 + $0x60] sm:$0xff]
        %v2523 = vld [vmem:[%s3 + $0x68] sm:$0xff]
        %v2524 = vld [vmem:[%s3 + $0x70] sm:$0xff]
        %v2525 = vld [vmem:[%s3 + $0x78] sm:$0xff]
        %v2526 = vld [vmem:[%s3 + $0x80] sm:$0xff]
        %v2527 = vld [vmem:[%s3 + $0x88] sm:$0xff]
        %v2528 = vld [vmem:[%s3 + $0x90] sm:$0xff]
        %v2529 = vld [vmem:[%s3 + $0x98] sm:$0xff]
        %v2530 = vld [vmem:[%s3 + $0xa0] sm:$0xff]
        %v2531 = vld [vmem:[%s3 + $0xa8] sm:$0xff]
        %v2532 = vld [vmem:[%s3 + $0xb0] sm:$0xff]
        %v2533 = vld [vmem:[%s3 + $0xb8] sm:$0xff]
        %v2534 = vld [vmem:[%s3 + $0xc0] sm:$0xff]
        %v2535 = vld [vmem:[%s3 + $0xc8] sm:$0xff]
        %v2536 = vld [vmem:[%s3 + $0xd0] sm:$0xff]
        %v2537 = vld [vmem:[%s3 + $0xd8] sm:$0xff]
        %v2538 = vld [vmem:[%s3 + $0xe0] sm:$0xff]
        %v2539 = vld [vmem:[%s3 + $0xe8] sm:$0xff]
        %v2540 = vld [vmem:[%s3 + $0xf0] sm:$0xff]
        %v2541 = vld [vmem:[%s3 + $0xf8] sm:$0xff]
        %v2542 = vld [vmem:[%s3 + $0x100] sm:$0xff]
        %v2543 = vld [vmem:[%s3 + $0x108] sm:$0xff]
        %v2544 = vld [vmem:[%s3 + $0x110] sm:$0xff]
        %v2545 = vld [vmem:[%s3 + $0x118] sm:$0xff]
        %v2546 = vld [vmem:[%s3 + $0x120] sm:$0xff]
        %v2547 = vld [vmem:[%s3 + $0x128] sm:$0xff]
        %v2548 = vld [vmem:[%s3 + $0x130] sm:$0xff]
        %v2549 = vld [vmem:[%s3 + $0x138] sm:$0xff]
        %v2550 = vld [vmem:[%s3 + $0x140] sm:$0xff]
        %v2551 = vld [vmem:[%s3 + $0x148] sm:$0xff]
        %v2552 = vld [vmem:[%s3 + $0x150] sm:$0xff]
        %v2553 = vld [vmem:[%s3 + $0x158] sm:$0xff]
        %v2554 = vld [vmem:[%s3 + $0x160] sm:$0xff]
        %v2555 = vld [vmem:[%s3 + $0x168] sm:$0xff]
        %v2556 = vld [vmem:[%s3 + $0x170] sm:$0xff]
        %v2557 = vld [vmem:[%s3 + $0x178] sm:$0xff]
        %v2558 = vld [vmem:[%s3 + $0x180] sm:$0xff]
        %v2559 = vld [vmem:[%s3 + $0x188] sm:$0xff]
        %v2560 = vld [vmem:[%s3 + $0x190] sm:$0xff]
        %v2561 = vld [vmem:[%s3 + $0x198] sm:$0xff]
        %v2562 = vld [vmem:[%s3 + $0x1a0] sm:$0xff]
        %v2563 = vld [vmem:[%s3 + $0x1a8] sm:$0xff]
        %v2564 = vld [vmem:[%s3 + $0x1b0] sm:$0xff]
        %v2565 = vld [vmem:[%s3 + $0x1b8] sm:$0xff]
        %v2566 = vld [vmem:[%s3 + $0x1c0] sm:$0xff]
        %v2567 = vld [vmem:[%s3 + $0x1c8] sm:$0xff]
        %v2568 = vld [vmem:[%s3 + $0x1d0] sm:$0xff]
        %v2569 = vld [vmem:[%s3 + $0x1d8] sm:$0xff]
        %v2570 = vld [vmem:[%s3 + $0x1e0] sm:$0xff]
        %v2571 = vld [vmem:[%s3 + $0x1e8] sm:$0xff]
        %v2572 = vld [vmem:[%s3 + $0x1f0] sm:$0xff]
        %v2573 = vld [vmem:[%s3 + $0x1f8] sm:$0xff]
        %v2574 = vld [vmem:[%s3 + $0x200] sm:$0xff]
        %v2575 = vld [vmem:[%s3 + $0x208] sm:$0xff]
        %v2576 = vld [vmem:[%s3 + $0x210] sm:$0xff]
        %v2577 = vld [vmem:[%s3 + $0x218] sm:$0xff]
        %v2578 = vld [vmem:[%s3 + $0x220] sm:$0xff]
        %v2579 = vld [vmem:[%s3 + $0x228] sm:$0xff]
        %v2580 = vld [vmem:[%s3 + $0x230] sm:$0xff]
        %v2581 = vld [vmem:[%s3 + $0x238] sm:$0xff]
        %v2582 = vld [vmem:[%s3 + $0x240] sm:$0xff]
        %v2583 = vld [vmem:[%s3 + $0x248] sm:$0xff]
        %v2584 = vld [vmem:[%s3 + $0x250] sm:$0xff]
        %v2585 = vld [vmem:[%s3 + $0x258] sm:$0xff]
        %v2586 = vld [vmem:[%s3 + $0x260] sm:$0xff]
        %v2587 = vld [vmem:[%s3 + $0x268] sm:$0xff]
        %v2588 = vld [vmem:[%s3 + $0x270] sm:$0xff]
        %v2589 = vld [vmem:[%s3 + $0x278] sm:$0xff]
        %v2590 = vld [vmem:[%s3 + $0x280] sm:$0xff]
        %v2591 = vld [vmem:[%s3 + $0x288] sm:$0xff]
        %v2592 = vld [vmem:[%s3 + $0x290] sm:$0xff]
        %v2593 = vld [vmem:[%s3 + $0x298] sm:$0xff]
        %v2594 = vld [vmem:[%s3 + $0x2a0] sm:$0xff]
        %v2595 = vld [vmem:[%s3 + $0x2a8] sm:$0xff]
        %v2596 = vld [vmem:[%s3 + $0x2b0] sm:$0xff]
        %v2597 = vld [vmem:[%s3 + $0x2b8] sm:$0xff]
        %v2598 = vld [vmem:[%s3 + $0x2c0] sm:$0xff]
        %v2599 = vld [vmem:[%s3 + $0x2c8] sm:$0xff]
        %v2600 = vld [vmem:[%s3 + $0x2d0] sm:$0xff]
        %v2601 = vld [vmem:[%s3 + $0x2d8] sm:$0xff]
        %v2602 = vld [vmem:[%s3 + $0x2e0] sm:$0xff]
        %v2603 = vld [vmem:[%s3 + $0x2e8] sm:$0xff]
        %v2604 = vld [vmem:[%s3 + $0x2f0] sm:$0xff]
        %v2605 = vld [vmem:[%s3 + $0x2f8] sm:$0xff]
        %v2606 = vld [vmem:[%s3 + $0x300] sm:$0xff]
        %v2607 = vld [vmem:[%s3 + $0x308] sm:$0xff]
        %v2608 = vld [vmem:[%s3 + $0x310] sm:$0xff]
        %v2609 = vld [vmem:[%s3 + $0x318] sm:$0xff]
        %v2610 = vld [vmem:[%s3 + $0x320] sm:$0xff]
        %v2611 = vld [vmem:[%s3 + $0x328] sm:$0xff]
        %v2612 = vld [vmem:[%s3 + $0x330] sm:$0xff]
        %v2613 = vld [vmem:[%s3 + $0x338] sm:$0xff]
        %v2614 = vld [vmem:[%s3 + $0x340] sm:$0xff]
        %v2615 = vld [vmem:[%s3 + $0x348] sm:$0xff]
        %v2616 = vld [vmem:[%s3 + $0x350] sm:$0xff]
        %v2617 = vld [vmem:[%s3 + $0x358] sm:$0xff]
        %v2618 = vld [vmem:[%s3 + $0x360] sm:$0xff]
        %v2619 = vld [vmem:[%s3 + $0x368] sm:$0xff]
        %v2620 = vld [vmem:[%s3 + $0x370] sm:$0xff]
        %v2621 = vld [vmem:[%s3 + $0x378] sm:$0xff]
        %v2622 = vld [vmem:[%s3 + $0x380] sm:$0xff]
        %v2623 = vld [vmem:[%s3 + $0x388] sm:$0xff]
        %v2624 = vld [vmem:[%s3 + $0x390] sm:$0xff]
        %v2625 = vld [vmem:[%s3 + $0x398] sm:$0xff]
        %v2626 = vld [vmem:[%s3 + $0x3a0] sm:$0xff]
        %v2627 = vld [vmem:[%s3 + $0x3a8] sm:$0xff]
        %v2628 = vld [vmem:[%s3 + $0x3b0] sm:$0xff]
        %v2629 = vld [vmem:[%s3 + $0x3b8] sm:$0xff]
        %v2630 = vld [vmem:[%s3 + $0x3c0] sm:$0xff]
        %v2631 = vld [vmem:[%s3 + $0x3c8] sm:$0xff]
        %v2632 = vld [vmem:[%s3 + $0x3d0] sm:$0xff]
        %v2633 = vld [vmem:[%s3 + $0x3d8] sm:$0xff]
        %v2634 = vld [vmem:[%s3 + $0x3e0] sm:$0xff]
        %v2635 = vld [vmem:[%s3 + $0x3e8] sm:$0xff]
        %v2636 = vld [vmem:[%s3 + $0x3f0] sm:$0xff]
        %v2637 = vld [vmem:[%s3 + $0x3f8] sm:$0xff]
        %v2638 = vld [vmem:[%s3 + $0x400] sm:$0xff]
        %v2639 = vld [vmem:[%s3 + $0x408] sm:$0xff]
        %v2640 = vld [vmem:[%s3 + $0x410] sm:$0xff]
        %v2641 = vld [vmem:[%s3 + $0x418] sm:$0xff]
        %v2642 = vld [vmem:[%s3 + $0x420] sm:$0xff]
        %v2643 = vld [vmem:[%s3 + $0x428] sm:$0xff]
        %v2644 = vld [vmem:[%s3 + $0x430] sm:$0xff]
        %v2645 = vld [vmem:[%s3 + $0x438] sm:$0xff]
        %v2646 = vld [vmem:[%s3 + $0x440] sm:$0xff]
        %v2647 = vld [vmem:[%s3 + $0x448] sm:$0xff]
        %v2648 = vld [vmem:[%s3 + $0x450] sm:$0xff]
        %v2649 = vld [vmem:[%s3 + $0x458] sm:$0xff]
        %v2650 = vld [vmem:[%s3 + $0x460] sm:$0xff]
        %v2651 = vld [vmem:[%s3 + $0x468] sm:$0xff]
        %v2652 = vld [vmem:[%s3 + $0x470] sm:$0xff]
        %v2653 = vld [vmem:[%s3 + $0x478] sm:$0xff]
        %v2654 = vld [vmem:[%s4] sm:$0x1]
        %v2656 = vlaneseq
        %v2657 = vshrl.u32 %v2656, 7
        %v2658 = vsub.s32 0, %v2657
        %v2659 = vrot.slane %v2654, %v2658
        %2661 = vmatprep.subr.mxu0 0.0
        %2662 = vmatpush1.msra.mxu0 %v2510
        %2663 = vmatprep.subr.mxu0 0.0
        %2664 = vmatpush1.msra.mxu0 %v2511
        %2665 = vmatprep.subr.mxu0 0.0
        %2666 = vmatpush1.msra.mxu0 %v2512
        %2667 = vmatprep.subr.mxu0 0.0
        %2668 = vmatpush1.msra.mxu0 %v2513
        %2669 = vmatprep.subr.mxu0 0.0
        %2670 = vmatpush1.msra.mxu0 %v2514
        %2671 = vmatprep.subr.mxu0 0.0
        %2672 = vmatpush1.msra.mxu0 %v2515
        %2673 = vmatprep.subr.mxu0 0.0
        %2674 = vmatpush1.msra.mxu0 %v2516
        %2675 = vmatprep.subr.mxu0 0.0
        %2676 = vmatpush1.msra.mxu0 %v2517
        %2677 = vmatprep.subr.mxu0 0.0
        %2678 = vmatpush1.msra.mxu0 %v2518
        %2679 = vmatprep.subr.mxu0 0.0
        %2680 = vmatpush1.msra.mxu0 %v2519
        %2681 = vmatprep.subr.mxu0 0.0
        %2682 = vmatpush1.msra.mxu0 %v2520
        %2683 = vmatprep.subr.mxu0 0.0
        %2684 = vmatpush1.msra.mxu0 %v2521
        %2685 = vmatprep.subr.mxu0 0.0
        %2686 = vmatpush1.msra.mxu0 %v2522
        %2687 = vmatprep.subr.mxu0 0.0
        %2688 = vmatpush1.msra.mxu0 %v2523
        %2689 = vmatprep.subr.mxu0 0.0
        %2690 = vmatpush1.msra.mxu0 %v2524
        %2691 = vmatprep.subr.mxu0 0.0
        %2692 = vmatpush1.msra.mxu0 %v2525
        %2693 = vmatprep.subr.mxu0 0.0
        %2694 = vmatpush1.msra.mxu0 %v2526
        %2695 = vmatprep.subr.mxu0 0.0
        %2696 = vmatpush1.msra.mxu0 %v2527
        %2697 = vmatprep.subr.mxu0 0.0
        %2698 = vmatpush1.msra.mxu0 %v2528
        %2699 = vmatprep.subr.mxu0 0.0
        %2700 = vmatpush1.msra.mxu0 %v2529
        %2701 = vmatprep.subr.mxu0 0.0
        %2702 = vmatpush1.msra.mxu0 %v2530
        %2703 = vmatprep.subr.mxu0 0.0
        %2704 = vmatpush1.msra.mxu0 %v2531
        %2705 = vmatprep.subr.mxu0 0.0
        %2706 = vmatpush1.msra.mxu0 %v2532
        %2707 = vmatprep.subr.mxu0 0.0
        %2708 = vmatpush1.msra.mxu0 %v2533
        %2709 = vmatprep.subr.mxu0 0.0
        %2710 = vmatpush1.msra.mxu0 %v2534
        %2711 = vmatprep.subr.mxu0 0.0
        %2712 = vmatpush1.msra.mxu0 %v2535
        %2713 = vmatprep.subr.mxu0 0.0
        %2714 = vmatpush1.msra.mxu0 %v2536
        %2715 = vmatprep.subr.mxu0 0.0
        %2716 = vmatpush1.msra.mxu0 %v2537
        %2717 = vmatprep.subr.mxu0 0.0
        %2718 = vmatpush1.msra.mxu0 %v2538
        %2719 = vmatprep.subr.mxu0 0.0
        %2720 = vmatpush1.msra.mxu0 %v2539
        %2721 = vmatprep.subr.mxu0 0.0
        %2722 = vmatpush1.msra.mxu0 %v2540
        %2723 = vmatprep.subr.mxu0 0.0
        %2724 = vmatpush1.msra.mxu0 %v2541
        %2725 = vmatprep.mubr.f32.mxu0 %v2272
        %2726 = vmatmul.mubr.f32.gmra.mrb[0].mxu0 %v2204
        %v2727 = vpop.f32.mrb[0].mxu0
        %v2728 = vadd.f32 %v2659, %v2727
        %v2729 = vpop.f32.mrb[0].mxu0
        %2730 = vmatprep.mubr.f32.mxu0 %v2274
        %2731 = vmatmul.mubr.f32.gmra.mrb[0].mxu0 %v2105
        %v2732 = vpop.f32.mrb[0].mxu0
        %v2733 = vadd.f32 %v2659, %v2732
        %v2734 = vpop.f32.mrb[0].mxu0
        %2735 = vmatprep.mubr.f32.mxu0 %v2277
        %2736 = vmatmul.mubr.f32.gmra.mrb[0].mxu0 %v2205
        %v2737 = vpop.f32.mrb[0].mxu0
        %v2738 = vadd.f32 %v2659, %v2737
        %v2739 = vpop.f32.mrb[0].mxu0
        %2740 = vmatprep.mubr.f32.mxu0 %v2279
        %2741 = vmatmul.mubr.f32.gmra.mrb[0].mxu0 %v2108
        %v2742 = vpop.f32.mrb[0].mxu0
        %v2743 = vadd.f32 %v2659, %v2742
        %v2744 = vpop.f32.mrb[0].mxu0
        %2745 = vmatprep.mubr.f32.mxu0 %v2282
        %2746 = vmatmul.mubr.f32.gmra.mrb[0].mxu0 %v2206
        %v2747 = vpop.f32.mrb[0].mxu0
        %v2748 = vadd.f32 %v2659, %v2747
        %v2749 = vpop.f32.mrb[0].mxu0
        %2750 = vmatprep.mubr.f32.mxu0 %v2284
        %2751 = vmatmul.mubr.f32.gmra.mrb[0].mxu0 %v2111
        %v2752 = vpop.f32.mrb[0].mxu0
        %v2753 = vadd.f32 %v2659, %v2752
        %v2754 = vpop.f32.mrb[0].mxu0
        %2755 = vmatprep.mubr.f32.mxu0 %v2287
        %2756 = vmatmul.mubr.f32.gmra.mrb[0].mxu0 %v2207
        %v2757 = vpop.f32.mrb[0].mxu0
        %v2758 = vadd.f32 %v2659, %v2757
        %v2759 = vpop.f32.mrb[0].mxu0
        %2760 = vmatprep.mubr.f32.mxu0 %v2289
        %2761 = vmatmul.mubr.f32.gmra.mrb[0].mxu0 %v2114
        %v2762 = vpop.f32.mrb[0].mxu0
        %v2763 = vadd.f32 %v2659, %v2762
        %v2764 = vpop.f32.mrb[0].mxu0
        %2765 = vmatprep.mubr.f32.mxu0 %v2292
        %2766 = vmatmul.mubr.f32.gmra.mrb[0].mxu0 %v2208
        %v2767 = vpop.f32.mrb[0].mxu0
        %v2768 = vadd.f32 %v2659, %v2767
        %v2769 = vpop.f32.mrb[0].mxu0
        %2770 = vmatprep.mubr.f32.mxu0 %v2294
        %2771 = vmatmul.mubr.f32.gmra.mrb[0].mxu0 %v2117
        %v2772 = vpop.f32.mrb[0].mxu0
        %v2773 = vadd.f32 %v2659, %v2772
        %v2774 = vpop.f32.mrb[0].mxu0
        %2775 = vmatprep.mubr.f32.mxu0 %v2297
        %2776 = vmatmul.mubr.f32.gmra.mrb[0].mxu0 %v2209
        %v2777 = vpop.f32.mrb[0].mxu0
        %v2778 = vadd.f32 %v2659, %v2777
        %v2779 = vpop.f32.mrb[0].mxu0
        %2780 = vmatprep.mubr.f32.mxu0 %v2299
        %2781 = vmatmul.mubr.f32.gmra.mrb[0].mxu0 %v2120
        %v2782 = vpop.f32.mrb[0].mxu0
        %v2783 = vadd.f32 %v2659, %v2782
        %v2784 = vpop.f32.mrb[0].mxu0
        %2785 = vmatprep.mubr.f32.mxu0 %v2302
        %2786 = vmatmul.mubr.f32.gmra.mrb[0].mxu0 %v2210
        %v2787 = vpop.f32.mrb[0].mxu0
        %v2788 = vadd.f32 %v2659, %v2787
        %v2789 = vpop.f32.mrb[0].mxu0
        %2790 = vmatprep.mubr.f32.mxu0 %v2304
        %2791 = vmatmul.mubr.f32.gmra.mrb[0].mxu0 %v2123
        %v2792 = vpop.f32.mrb[0].mxu0
        %v2793 = vadd.f32 %v2659, %v2792
        %v2794 = vpop.f32.mrb[0].mxu0
        %2795 = vmatprep.mubr.f32.mxu0 %v2307
        %2796 = vmatmul.mubr.f32.gmra.mrb[0].mxu0 %v2211
        %v2797 = vpop.f32.mrb[0].mxu0
        %v2798 = vadd.f32 %v2659, %v2797
        %v2799 = vpop.f32.mrb[0].mxu0
        %2800 = vmatprep.mubr.f32.mxu0 %v2309
        %2801 = vmatmul.mubr.f32.gmra.mrb[0].mxu0 %v2126
        %v2802 = vpop.f32.mrb[0].mxu0
        %v2803 = vadd.f32 %v2659, %v2802
        %v2804 = vpop.f32.mrb[0].mxu0
        %2805 = vmatprep.mubr.f32.mxu0 %v2312
        %2806 = vmatmul.mubr.f32.gmra.mrb[0].mxu0 %v2212
        %v2807 = vpop.f32.mrb[0].mxu0
        %v2808 = vadd.f32 %v2659, %v2807
        %v2809 = vpop.f32.mrb[0].mxu0
        %2810 = vmatprep.mubr.f32.mxu0 %v2314
        %2811 = vmatmul.mubr.f32.gmra.mrb[0].mxu0 %v2129
        %v2812 = vpop.f32.mrb[0].mxu0
        %v2813 = vadd.f32 %v2659, %v2812
        %v2814 = vpop.f32.mrb[0].mxu0
        %2815 = vmatprep.mubr.f32.mxu0 %v2317
        %2816 = vmatmul.mubr.f32.gmra.mrb[0].mxu0 %v2213
        %v2817 = vpop.f32.mrb[0].mxu0
        %v2818 = vadd.f32 %v2659, %v2817
        %v2819 = vpop.f32.mrb[0].mxu0
        %2820 = vmatprep.mubr.f32.mxu0 %v2319
        %2821 = vmatmul.mubr.f32.gmra.mrb[0].mxu0 %v2132
        %v2822 = vpop.f32.mrb[0].mxu0
        %v2823 = vadd.f32 %v2659, %v2822
        %v2824 = vpop.f32.mrb[0].mxu0
        %2825 = vmatprep.mubr.f32.mxu0 %v2322
        %2826 = vmatmul.mubr.f32.gmra.mrb[0].mxu0 %v2214
        %v2827 = vpop.f32.mrb[0].mxu0
        %v2828 = vadd.f32 %v2659, %v2827
        %v2829 = vpop.f32.mrb[0].mxu0
        %2830 = vmatprep.mubr.f32.mxu0 %v2324
        %2831 = vmatmul.mubr.f32.gmra.mrb[0].mxu0 %v2135
        %v2832 = vpop.f32.mrb[0].mxu0
        %v2833 = vadd.f32 %v2659, %v2832
        %v2834 = vpop.f32.mrb[0].mxu0
        %2835 = vmatprep.mubr.f32.mxu0 %v2327
        %2836 = vmatmul.mubr.f32.gmra.mrb[0].mxu0 %v2215
        %v2837 = vpop.f32.mrb[0].mxu0
        %v2838 = vadd.f32 %v2659, %v2837
        %v2839 = vpop.f32.mrb[0].mxu0
        %2840 = vmatprep.mubr.f32.mxu0 %v2329
        %2841 = vmatmul.mubr.f32.gmra.mrb[0].mxu0 %v2138
        %v2842 = vpop.f32.mrb[0].mxu0
        %v2843 = vadd.f32 %v2659, %v2842
        %v2844 = vpop.f32.mrb[0].mxu0
        %2845 = vmatprep.mubr.f32.mxu0 %v2332
        %2846 = vmatmul.mubr.f32.gmra.mrb[0].mxu0 %v2216
        %v2847 = vpop.f32.mrb[0].mxu0
        %v2848 = vadd.f32 %v2659, %v2847
        %v2849 = vpop.f32.mrb[0].mxu0
        %2850 = vmatprep.mubr.f32.mxu0 %v2334
        %2851 = vmatmul.mubr.f32.gmra.mrb[0].mxu0 %v2141
        %v2852 = vpop.f32.mrb[0].mxu0
        %v2853 = vadd.f32 %v2659, %v2852
        %v2854 = vpop.f32.mrb[0].mxu0
        %2855 = vmatprep.mubr.f32.mxu0 %v2337
        %2856 = vmatmul.mubr.f32.gmra.mrb[0].mxu0 %v2217
        %v2857 = vpop.f32.mrb[0].mxu0
        %v2858 = vadd.f32 %v2659, %v2857
        %v2859 = vpop.f32.mrb[0].mxu0
        %2860 = vmatprep.mubr.f32.mxu0 %v2339
        %2861 = vmatmul.mubr.f32.gmra.mrb[0].mxu0 %v2144
        %v2862 = vpop.f32.mrb[0].mxu0
        %v2863 = vadd.f32 %v2659, %v2862
        %v2864 = vpop.f32.mrb[0].mxu0
        %2865 = vmatprep.mubr.f32.mxu0 %v2342
        %2866 = vmatmul.mubr.f32.gmra.mrb[0].mxu0 %v2218
        %v2867 = vpop.f32.mrb[0].mxu0
        %v2868 = vadd.f32 %v2659, %v2867
        %v2869 = vpop.f32.mrb[0].mxu0
        %2870 = vmatprep.mubr.f32.mxu0 %v2344
        %2871 = vmatmul.mubr.f32.gmra.mrb[0].mxu0 %v2147
        %v2872 = vpop.f32.mrb[0].mxu0
        %v2873 = vadd.f32 %v2659, %v2872
        %v2874 = vpop.f32.mrb[0].mxu0
        %2875 = vmatprep.mubr.f32.mxu0 %v2347
        %2876 = vmatmul.mubr.f32.gmra.mrb[0].mxu0 %v2219
        %v2877 = vpop.f32.mrb[0].mxu0
        %v2878 = vadd.f32 %v2659, %v2877
        %v2879 = vpop.f32.mrb[0].mxu0
        %2880 = vmatprep.mubr.f32.mxu0 %v2349
        %2881 = vmatmul.mubr.f32.gmra.mrb[0].mxu0 %v2150
        %v2882 = vpop.f32.mrb[0].mxu0
        %v2883 = vadd.f32 %v2659, %v2882
        %v2884 = vpop.f32.mrb[0].mxu0
        %2885 = vdwg.mxu0
        %2886 = vmatprep.subr.mxu0 0.0
        %2887 = vmatpush1.msra.mxu0 %v2542
        %2888 = vmatprep.subr.mxu0 0.0
        %2889 = vmatpush1.msra.mxu0 %v2543
        %2890 = vmatprep.subr.mxu0 0.0
        %2891 = vmatpush1.msra.mxu0 %v2544
        %2892 = vmatprep.subr.mxu0 0.0
        %2893 = vmatpush1.msra.mxu0 %v2545
        %2894 = vmatprep.subr.mxu0 0.0
        %2895 = vmatpush1.msra.mxu0 %v2546
        %2896 = vmatprep.subr.mxu0 0.0
        %2897 = vmatpush1.msra.mxu0 %v2547
        %2898 = vmatprep.subr.mxu0 0.0
        %2899 = vmatpush1.msra.mxu0 %v2548
        %2900 = vmatprep.subr.mxu0 0.0
        %2901 = vmatpush1.msra.mxu0 %v2549
        %2902 = vmatprep.subr.mxu0 0.0
        %2903 = vmatpush1.msra.mxu0 %v2550
        %2904 = vmatprep.subr.mxu0 0.0
        %2905 = vmatpush1.msra.mxu0 %v2551
        %2906 = vmatprep.subr.mxu0 0.0
        %2907 = vmatpush1.msra.mxu0 %v2552
        %2908 = vmatprep.subr.mxu0 0.0
        %2909 = vmatpush1.msra.mxu0 %v2553
        %2910 = vmatprep.subr.mxu0 0.0
        %2911 = vmatpush1.msra.mxu0 %v2554
        %2912 = vmatprep.subr.mxu0 0.0
        %2913 = vmatpush1.msra.mxu0 %v2555
        %2914 = vmatprep.subr.mxu0 0.0
        %2915 = vmatpush1.msra.mxu0 %v2556
        %2916 = vmatprep.subr.mxu0 0.0
        %2917 = vmatpush1.msra.mxu0 %v2557
        %2918 = vmatprep.subr.mxu0 0.0
        %2919 = vmatpush1.msra.mxu0 %v2558
        %2920 = vmatprep.subr.mxu0 0.0
        %2921 = vmatpush1.msra.mxu0 %v2559
        %2922 = vmatprep.subr.mxu0 0.0
        %2923 = vmatpush1.msra.mxu0 %v2560
        %2924 = vmatprep.subr.mxu0 0.0
        %2925 = vmatpush1.msra.mxu0 %v2561
        %2926 = vmatprep.subr.mxu0 0.0
        %2927 = vmatpush1.msra.mxu0 %v2562
        %2928 = vmatprep.subr.mxu0 0.0
        %2929 = vmatpush1.msra.mxu0 %v2563
        %2930 = vmatprep.subr.mxu0 0.0
        %2931 = vmatpush1.msra.mxu0 %v2564
        %2932 = vmatprep.subr.mxu0 0.0
        %2933 = vmatpush1.msra.mxu0 %v2565
        %2934 = vmatprep.subr.mxu0 0.0
        %2935 = vmatpush1.msra.mxu0 %v2566
        %2936 = vmatprep.subr.mxu0 0.0
        %2937 = vmatpush1.msra.mxu0 %v2567
        %2938 = vmatprep.subr.mxu0 0.0
        %2939 = vmatpush1.msra.mxu0 %v2568
        %2940 = vmatprep.subr.mxu0 0.0
        %2941 = vmatpush1.msra.mxu0 %v2569
        %2942 = vmatprep.subr.mxu0 0.0
        %2943 = vmatpush1.msra.mxu0 %v2570
        %2944 = vmatprep.subr.mxu0 0.0
        %2945 = vmatpush1.msra.mxu0 %v2571
        %2946 = vmatprep.subr.mxu0 0.0
        %2947 = vmatpush1.msra.mxu0 %v2572
        %2948 = vmatprep.subr.mxu0 0.0
        %2949 = vmatpush1.msra.mxu0 %v2573
        %2950 = vmatprep.mubr.f32.mxu0 %v2205
        %2951 = vmatmul.mubr.f32.gmra.mrb[0].mxu0 %v2384
        %v2952 = vpop.f32.mrb[0].mxu0
        %v2953 = vadd.f32 %v2728, %v2952
        %v2954 = vpop.f32.mrb[0].mxu0
        %2955 = vmatprep.mubr.f32.mxu0 %v2108
        %2956 = vmatmul.mubr.f32.gmra.mrb[0].mxu0 %v2386
        %v2957 = vpop.f32.mrb[0].mxu0
        %v2958 = vadd.f32 %v2733, %v2957
        %v2959 = vpop.f32.mrb[0].mxu0
        %2960 = vmatprep.mubr.f32.mxu0 %v2206
        %2961 = vmatmul.mubr.f32.gmra.mrb[0].mxu0 %v2389
        %v2962 = vpop.f32.mrb[0].mxu0
        %v2963 = vadd.f32 %v2738, %v2962
        %v2964 = vpop.f32.mrb[0].mxu0
        %2965 = vmatprep.mubr.f32.mxu0 %v2111
        %2966 = vmatmul.mubr.f32.gmra.mrb[0].mxu0 %v2391
        %v2967 = vpop.f32.mrb[0].mxu0
        %v2968 = vadd.f32 %v2743, %v2967
        %v2969 = vpop.f32.mrb[0].mxu0
        %2970 = vmatprep.mubr.f32.mxu0 %v2207
        %2971 = vmatmul.mubr.f32.gmra.mrb[0].mxu0 %v2394
        %v2972 = vpop.f32.mrb[0].mxu0
        %v2973 = vadd.f32 %v2748, %v2972
        %v2974 = vpop.f32.mrb[0].mxu0
        %2975 = vmatprep.mubr.f32.mxu0 %v2114
        %2976 = vmatmul.mubr.f32.gmra.mrb[0].mxu0 %v2396
        %v2977 = vpop.f32.mrb[0].mxu0
        %v2978 = vadd.f32 %v2753, %v2977
        %v2979 = vpop.f32.mrb[0].mxu0
        %2980 = vmatprep.mubr.f32.mxu0 %v2208
        %2981 = vmatmul.mubr.f32.gmra.mrb[0].mxu0 %v2399
        %v2982 = vpop.f32.mrb[0].mxu0
        %v2983 = vadd.f32 %v2758, %v2982
        %v2984 = vpop.f32.mrb[0].mxu0
        %2985 = vmatprep.mubr.f32.mxu0 %v2117
        %2986 = vmatmul.mubr.f32.gmra.mrb[0].mxu0 %v2401
        %v2987 = vpop.f32.mrb[0].mxu0
        %v2988 = vadd.f32 %v2763, %v2987
        %v2989 = vpop.f32.mrb[0].mxu0
        %2990 = vmatprep.mubr.f32.mxu0 %v2209
        %2991 = vmatmul.mubr.f32.gmra.mrb[0].mxu0 %v2404
        %v2992 = vpop.f32.mrb[0].mxu0
        %v2993 = vadd.f32 %v2768, %v2992
        %v2994 = vpop.f32.mrb[0].mxu0
        %2995 = vmatprep.mubr.f32.mxu0 %v2120
        %2996 = vmatmul.mubr.f32.gmra.mrb[0].mxu0 %v2406
        %v2997 = vpop.f32.mrb[0].mxu0
        %v2998 = vadd.f32 %v2773, %v2997
        %v2999 = vpop.f32.mrb[0].mxu0
        %3000 = vmatprep.mubr.f32.mxu0 %v2210
        %3001 = vmatmul.mubr.f32.gmra.mrb[0].mxu0 %v2409
        %v3002 = vpop.f32.mrb[0].mxu0
        %v3003 = vadd.f32 %v2778, %v3002
        %v3004 = vpop.f32.mrb[0].mxu0
        %3005 = vmatprep.mubr.f32.mxu0 %v2123
        %3006 = vmatmul.mubr.f32.gmra.mrb[0].mxu0 %v2411
        %v3007 = vpop.f32.mrb[0].mxu0
        %v3008 = vadd.f32 %v2783, %v3007
        %v3009 = vpop.f32.mrb[0].mxu0
        %3010 = vmatprep.mubr.f32.mxu0 %v2211
        %3011 = vmatmul.mubr.f32.gmra.mrb[0].mxu0 %v2414
        %v3012 = vpop.f32.mrb[0].mxu0
        %v3013 = vadd.f32 %v2788, %v3012
        %v3014 = vpop.f32.mrb[0].mxu0
        %3015 = vmatprep.mubr.f32.mxu0 %v2126
        %3016 = vmatmul.mubr.f32.gmra.mrb[0].mxu0 %v2416
        %v3017 = vpop.f32.mrb[0].mxu0
        %v3018 = vadd.f32 %v2793, %v3017
        %v3019 = vpop.f32.mrb[0].mxu0
        %3020 = vmatprep.mubr.f32.mxu0 %v2212
        %3021 = vmatmul.mubr.f32.gmra.mrb[0].mxu0 %v2419
        %v3022 = vpop.f32.mrb[0].mxu0
        %v3023 = vadd.f32 %v2798, %v3022
        %v3024 = vpop.f32.mrb[0].mxu0
        %3025 = vmatprep.mubr.f32.mxu0 %v2129
        %3026 = vmatmul.mubr.f32.gmra.mrb[0].mxu0 %v2421
        %v3027 = vpop.f32.mrb[0].mxu0
        %v3028 = vadd.f32 %v2803, %v3027
        %v3029 = vpop.f32.mrb[0].mxu0
        %3030 = vmatprep.mubr.f32.mxu0 %v2213
        %3031 = vmatmul.mubr.f32.gmra.mrb[0].mxu0 %v2424
        %v3032 = vpop.f32.mrb[0].mxu0
        %v3033 = vadd.f32 %v2808, %v3032
        %v3034 = vpop.f32.mrb[0].mxu0
        %3035 = vmatprep.mubr.f32.mxu0 %v2132
        %3036 = vmatmul.mubr.f32.gmra.mrb[0].mxu0 %v2426
        %v3037 = vpop.f32.mrb[0].mxu0
        %v3038 = vadd.f32 %v2813, %v3037
        %v3039 = vpop.f32.mrb[0].mxu0
        %3040 = vmatprep.mubr.f32.mxu0 %v2214
        %3041 = vmatmul.mubr.f32.gmra.mrb[0].mxu0 %v2429
        %v3042 = vpop.f32.mrb[0].mxu0
        %v3043 = vadd.f32 %v2818, %v3042
        %v3044 = vpop.f32.mrb[0].mxu0
        %3045 = vmatprep.mubr.f32.mxu0 %v2135
        %3046 = vmatmul.mubr.f32.gmra.mrb[0].mxu0 %v2431
        %v3047 = vpop.f32.mrb[0].mxu0
        %v3048 = vadd.f32 %v2823, %v3047
        %v3049 = vpop.f32.mrb[0].mxu0
        %3050 = vmatprep.mubr.f32.mxu0 %v2215
        %3051 = vmatmul.mubr.f32.gmra.mrb[0].mxu0 %v2434
        %v3052 = vpop.f32.mrb[0].mxu0
        %v3053 = vadd.f32 %v2828, %v3052
        %v3054 = vpop.f32.mrb[0].mxu0
        %3055 = vmatprep.mubr.f32.mxu0 %v2138
        %3056 = vmatmul.mubr.f32.gmra.mrb[0].mxu0 %v2436
        %v3057 = vpop.f32.mrb[0].mxu0
        %v3058 = vadd.f32 %v2833, %v3057
        %v3059 = vpop.f32.mrb[0].mxu0
        %3060 = vmatprep.mubr.f32.mxu0 %v2216
        %3061 = vmatmul.mubr.f32.gmra.mrb[0].mxu0 %v2439
        %v3062 = vpop.f32.mrb[0].mxu0
        %v3063 = vadd.f32 %v2838, %v3062
        %v3064 = vpop.f32.mrb[0].mxu0
        %3065 = vmatprep.mubr.f32.mxu0 %v2141
        %3066 = vmatmul.mubr.f32.gmra.mrb[0].mxu0 %v2441
        %v3067 = vpop.f32.mrb[0].mxu0
        %v3068 = vadd.f32 %v2843, %v3067
        %v3069 = vpop.f32.mrb[0].mxu0
        %3070 = vmatprep.mubr.f32.mxu0 %v2217
        %3071 = vmatmul.mubr.f32.gmra.mrb[0].mxu0 %v2444
        %v3072 = vpop.f32.mrb[0].mxu0
        %v3073 = vadd.f32 %v2848, %v3072
        %v3074 = vpop.f32.mrb[0].mxu0
        %3075 = vmatprep.mubr.f32.mxu0 %v2144
        %3076 = vmatmul.mubr.f32.gmra.mrb[0].mxu0 %v2446
        %v3077 = vpop.f32.mrb[0].mxu0
        %v3078 = vadd.f32 %v2853, %v3077
        %v3079 = vpop.f32.mrb[0].mxu0
        %3080 = vmatprep.mubr.f32.mxu0 %v2218
        %3081 = vmatmul.mubr.f32.gmra.mrb[0].mxu0 %v2449
        %v3082 = vpop.f32.mrb[0].mxu0
        %v3083 = vadd.f32 %v2858, %v3082
        %v3084 = vpop.f32.mrb[0].mxu0
        %3085 = vmatprep.mubr.f32.mxu0 %v2147
        %3086 = vmatmul.mubr.f32.gmra.mrb[0].mxu0 %v2451
        %v3087 = vpop.f32.mrb[0].mxu0
        %v3088 = vadd.f32 %v2863, %v3087
        %v3089 = vpop.f32.mrb[0].mxu0
        %3090 = vmatprep.mubr.f32.mxu0 %v2219
        %3091 = vmatmul.mubr.f32.gmra.mrb[0].mxu0 %v2454
        %v3092 = vpop.f32.mrb[0].mxu0
        %v3093 = vadd.f32 %v2868, %v3092
        %v3094 = vpop.f32.mrb[0].mxu0
        %3095 = vmatprep.mubr.f32.mxu0 %v2150
        %3096 = vmatmul.mubr.f32.gmra.mrb[0].mxu0 %v2456
        %v3097 = vpop.f32.mrb[0].mxu0
        %v3098 = vadd.f32 %v2873, %v3097
        %v3099 = vpop.f32.mrb[0].mxu0
        %3100 = vmatprep.mubr.f32.mxu0 %v2220
        %3101 = vmatmul.mubr.f32.gmra.mrb[0].mxu0 %v2459
        %v3102 = vpop.f32.mrb[0].mxu0
        %v3103 = vadd.f32 %v2878, %v3102
        %v3104 = vpop.f32.mrb[0].mxu0
        %3105 = vmatprep.mubr.f32.mxu0 %v2153
        %3106 = vmatmul.mubr.f32.gmra.mrb[0].mxu0 %v2461
        %v3107 = vpop.f32.mrb[0].mxu0
        %v3108 = vadd.f32 %v2883, %v3107
        %v3109 = vpop.f32.mrb[0].mxu0
        %3110 = vdwg.mxu0
        %3111 = vmatprep.subr.mxu0 0.0
        %3112 = vmatpush1.msra.mxu0 %v2574
        %3113 = vmatprep.subr.mxu0 0.0
        %3114 = vmatpush1.msra.mxu0 %v2575
        %3115 = vmatprep.subr.mxu0 0.0
        %3116 = vmatpush1.msra.mxu0 %v2576
        %3117 = vmatprep.subr.mxu0 0.0
        %3118 = vmatpush1.msra.mxu0 %v2577
        %3119 = vmatprep.subr.mxu0 0.0
        %3120 = vmatpush1.msra.mxu0 %v2578
        %3121 = vmatprep.subr.mxu0 0.0
        %3122 = vmatpush1.msra.mxu0 %v2579
        %3123 = vmatprep.subr.mxu0 0.0
        %3124 = vmatpush1.msra.mxu0 %v2580
        %3125 = vmatprep.subr.mxu0 0.0
        %3126 = vmatpush1.msra.mxu0 %v2581
        %3127 = vmatprep.subr.mxu0 0.0
        %3128 = vmatpush1.msra.mxu0 %v2582
        %3129 = vmatprep.subr.mxu0 0.0
        %3130 = vmatpush1.msra.mxu0 %v2583
        %3131 = vmatprep.subr.mxu0 0.0
        %3132 = vmatpush1.msra.mxu0 %v2584
        %3133 = vmatprep.subr.mxu0 0.0
        %3134 = vmatpush1.msra.mxu0 %v2585
        %3135 = vmatprep.subr.mxu0 0.0
        %3136 = vmatpush1.msra.mxu0 %v2586
        %3137 = vmatprep.subr.mxu0 0.0
        %3138 = vmatpush1.msra.mxu0 %v2587
        %3139 = vmatprep.subr.mxu0 0.0
        %3140 = vmatpush1.msra.mxu0 %v2588
        %3141 = vmatprep.subr.mxu0 0.0
        %3142 = vmatpush1.msra.mxu0 %v2589
        %3143 = vmatprep.subr.mxu0 0.0
        %3144 = vmatpush1.msra.mxu0 %v2590
        %3145 = vmatprep.subr.mxu0 0.0
        %3146 = vmatpush1.msra.mxu0 %v2591
        %3147 = vmatprep.subr.mxu0 0.0
        %3148 = vmatpush1.msra.mxu0 %v2592
        %3149 = vmatprep.subr.mxu0 0.0
        %3150 = vmatpush1.msra.mxu0 %v2593
        %3151 = vmatprep.subr.mxu0 0.0
        %3152 = vmatpush1.msra.mxu0 %v2594
        %3153 = vmatprep.subr.mxu0 0.0
        %3154 = vmatpush1.msra.mxu0 %v2595
        %3155 = vmatprep.subr.mxu0 0.0
        %3156 = vmatpush1.msra.mxu0 %v2596
        %3157 = vmatprep.subr.mxu0 0.0
        %3158 = vmatpush1.msra.mxu0 %v2597
        %3159 = vmatprep.subr.mxu0 0.0
        %3160 = vmatpush1.msra.mxu0 %v2598
        %3161 = vmatprep.subr.mxu0 0.0
        %3162 = vmatpush1.msra.mxu0 %v2599
        %3163 = vmatprep.subr.mxu0 0.0
        %3164 = vmatpush1.msra.mxu0 %v2600
        %3165 = vmatprep.subr.mxu0 0.0
        %3166 = vmatpush1.msra.mxu0 %v2601
        %3167 = vmatprep.subr.mxu0 0.0
        %3168 = vmatpush1.msra.mxu0 %v2602
        %3169 = vmatprep.subr.mxu0 0.0
        %3170 = vmatpush1.msra.mxu0 %v2603
        %3171 = vmatprep.subr.mxu0 0.0
        %3172 = vmatpush1.msra.mxu0 %v2604
        %3173 = vmatprep.subr.mxu0 0.0
        %3174 = vmatpush1.msra.mxu0 %v2605
        %3175 = vmatprep.mubr.f32.mxu0 %v2389
        %3176 = vmatmul.mubr.f32.gmra.mrb[0].mxu0 %v2277
        %v3177 = vpop.f32.mrb[0].mxu0
        %v3178 = vadd.f32 %v2953, %v3177
        %v3179 = vpop.f32.mrb[0].mxu0
        %3180 = vmatprep.mubr.f32.mxu0 %v2391
        %3181 = vmatmul.mubr.f32.gmra.mrb[0].mxu0 %v2279
        %v3182 = vpop.f32.mrb[0].mxu0
        %v3183 = vadd.f32 %v2958, %v3182
        %v3184 = vpop.f32.mrb[0].mxu0
        %3185 = vmatprep.mubr.f32.mxu0 %v2394
        %3186 = vmatmul.mubr.f32.gmra.mrb[0].mxu0 %v2282
        %v3187 = vpop.f32.mrb[0].mxu0
        %v3188 = vadd.f32 %v2963, %v3187
        %v3189 = vpop.f32.mrb[0].mxu0
        %3190 = vmatprep.mubr.f32.mxu0 %v2396
        %3191 = vmatmul.mubr.f32.gmra.mrb[0].mxu0 %v2284
        %v3192 = vpop.f32.mrb[0].mxu0
        %v3193 = vadd.f32 %v2968, %v3192
        %v3194 = vpop.f32.mrb[0].mxu0
        %3195 = vmatprep.mubr.f32.mxu0 %v2399
        %3196 = vmatmul.mubr.f32.gmra.mrb[0].mxu0 %v2287
        %v3197 = vpop.f32.mrb[0].mxu0
        %v3198 = vadd.f32 %v2973, %v3197
        %v3199 = vpop.f32.mrb[0].mxu0
        %3200 = vmatprep.mubr.f32.mxu0 %v2401
        %3201 = vmatmul.mubr.f32.gmra.mrb[0].mxu0 %v2289
        %v3202 = vpop.f32.mrb[0].mxu0
        %v3203 = vadd.f32 %v2978, %v3202
        %v3204 = vpop.f32.mrb[0].mxu0
        %3205 = vmatprep.mubr.f32.mxu0 %v2404
        %3206 = vmatmul.mubr.f32.gmra.mrb[0].mxu0 %v2292
        %v3207 = vpop.f32.mrb[0].mxu0
        %v3208 = vadd.f32 %v2983, %v3207
        %v3209 = vpop.f32.mrb[0].mxu0
        %3210 = vmatprep.mubr.f32.mxu0 %v2406
        %3211 = vmatmul.mubr.f32.gmra.mrb[0].mxu0 %v2294
        %v3212 = vpop.f32.mrb[0].mxu0
        %v3213 = vadd.f32 %v2988, %v3212
        %v3214 = vpop.f32.mrb[0].mxu0
        %3215 = vmatprep.mubr.f32.mxu0 %v2409
        %3216 = vmatmul.mubr.f32.gmra.mrb[0].mxu0 %v2297
        %v3217 = vpop.f32.mrb[0].mxu0
        %v3218 = vadd.f32 %v2993, %v3217
        %v3219 = vpop.f32.mrb[0].mxu0
        %3220 = vmatprep.mubr.f32.mxu0 %v2411
        %3221 = vmatmul.mubr.f32.gmra.mrb[0].mxu0 %v2299
        %v3222 = vpop.f32.mrb[0].mxu0
        %v3223 = vadd.f32 %v2998, %v3222
        %v3224 = vpop.f32.mrb[0].mxu0
        %3225 = vmatprep.mubr.f32.mxu0 %v2414
        %3226 = vmatmul.mubr.f32.gmra.mrb[0].mxu0 %v2302
        %v3227 = vpop.f32.mrb[0].mxu0
        %v3228 = vadd.f32 %v3003, %v3227
        %v3229 = vpop.f32.mrb[0].mxu0
        %3230 = vmatprep.mubr.f32.mxu0 %v2416
        %3231 = vmatmul.mubr.f32.gmra.mrb[0].mxu0 %v2304
        %v3232 = vpop.f32.mrb[0].mxu0
        %v3233 = vadd.f32 %v3008, %v3232
        %v3234 = vpop.f32.mrb[0].mxu0
        %3235 = vmatprep.mubr.f32.mxu0 %v2419
        %3236 = vmatmul.mubr.f32.gmra.mrb[0].mxu0 %v2307
        %v3237 = vpop.f32.mrb[0].mxu0
        %v3238 = vadd.f32 %v3013, %v3237
        %v3239 = vpop.f32.mrb[0].mxu0
        %3240 = vmatprep.mubr.f32.mxu0 %v2421
        %3241 = vmatmul.mubr.f32.gmra.mrb[0].mxu0 %v2309
        %v3242 = vpop.f32.mrb[0].mxu0
        %v3243 = vadd.f32 %v3018, %v3242
        %v3244 = vpop.f32.mrb[0].mxu0
        %3245 = vmatprep.mubr.f32.mxu0 %v2424
        %3246 = vmatmul.mubr.f32.gmra.mrb[0].mxu0 %v2312
        %v3247 = vpop.f32.mrb[0].mxu0
        %v3248 = vadd.f32 %v3023, %v3247
        %v3249 = vpop.f32.mrb[0].mxu0
        %3250 = vmatprep.mubr.f32.mxu0 %v2426
        %3251 = vmatmul.mubr.f32.gmra.mrb[0].mxu0 %v2314
        %v3252 = vpop.f32.mrb[0].mxu0
        %v3253 = vadd.f32 %v3028, %v3252
        %v3254 = vpop.f32.mrb[0].mxu0
        %3255 = vmatprep.mubr.f32.mxu0 %v2429
        %3256 = vmatmul.mubr.f32.gmra.mrb[0].mxu0 %v2317
        %v3257 = vpop.f32.mrb[0].mxu0
        %v3258 = vadd.f32 %v3033, %v3257
        %v3259 = vpop.f32.mrb[0].mxu0
        %3260 = vmatprep.mubr.f32.mxu0 %v2431
        %3261 = vmatmul.mubr.f32.gmra.mrb[0].mxu0 %v2319
        %v3262 = vpop.f32.mrb[0].mxu0
        %v3263 = vadd.f32 %v3038, %v3262
        %v3264 = vpop.f32.mrb[0].mxu0
        %3265 = vmatprep.mubr.f32.mxu0 %v2434
        %3266 = vmatmul.mubr.f32.gmra.mrb[0].mxu0 %v2322
        %v3267 = vpop.f32.mrb[0].mxu0
        %v3268 = vadd.f32 %v3043, %v3267
        %v3269 = vpop.f32.mrb[0].mxu0
        %3270 = vmatprep.mubr.f32.mxu0 %v2436
        %3271 = vmatmul.mubr.f32.gmra.mrb[0].mxu0 %v2324
        %v3272 = vpop.f32.mrb[0].mxu0
        %v3273 = vadd.f32 %v3048, %v3272
        %v3274 = vpop.f32.mrb[0].mxu0
        %3275 = vmatprep.mubr.f32.mxu0 %v2439
        %3276 = vmatmul.mubr.f32.gmra.mrb[0].mxu0 %v2327
        %v3277 = vpop.f32.mrb[0].mxu0
        %v3278 = vadd.f32 %v3053, %v3277
        %v3279 = vpop.f32.mrb[0].mxu0
        %3280 = vmatprep.mubr.f32.mxu0 %v2441
        %3281 = vmatmul.mubr.f32.gmra.mrb[0].mxu0 %v2329
        %v3282 = vpop.f32.mrb[0].mxu0
        %v3283 = vadd.f32 %v3058, %v3282
        %v3284 = vpop.f32.mrb[0].mxu0
        %3285 = vmatprep.mubr.f32.mxu0 %v2444
        %3286 = vmatmul.mubr.f32.gmra.mrb[0].mxu0 %v2332
        %v3287 = vpop.f32.mrb[0].mxu0
        %v3288 = vadd.f32 %v3063, %v3287
        %v3289 = vpop.f32.mrb[0].mxu0
        %3290 = vmatprep.mubr.f32.mxu0 %v2446
        %3291 = vmatmul.mubr.f32.gmra.mrb[0].mxu0 %v2334
        %v3292 = vpop.f32.mrb[0].mxu0
        %v3293 = vadd.f32 %v3068, %v3292
        %v3294 = vpop.f32.mrb[0].mxu0
        %3295 = vmatprep.mubr.f32.mxu0 %v2449
        %3296 = vmatmul.mubr.f32.gmra.mrb[0].mxu0 %v2337
        %v3297 = vpop.f32.mrb[0].mxu0
        %v3298 = vadd.f32 %v3073, %v3297
        %v3299 = vpop.f32.mrb[0].mxu0
        %3300 = vmatprep.mubr.f32.mxu0 %v2451
        %3301 = vmatmul.mubr.f32.gmra.mrb[0].mxu0 %v2339
        %v3302 = vpop.f32.mrb[0].mxu0
        %v3303 = vadd.f32 %v3078, %v3302
        %v3304 = vpop.f32.mrb[0].mxu0
        %3305 = vmatprep.mubr.f32.mxu0 %v2454
        %3306 = vmatmul.mubr.f32.gmra.mrb[0].mxu0 %v2342
        %v3307 = vpop.f32.mrb[0].mxu0
        %v3308 = vadd.f32 %v3083, %v3307
        %v3309 = vpop.f32.mrb[0].mxu0
        %3310 = vmatprep.mubr.f32.mxu0 %v2456
        %3311 = vmatmul.mubr.f32.gmra.mrb[0].mxu0 %v2344
        %v3312 = vpop.f32.mrb[0].mxu0
        %v3313 = vadd.f32 %v3088, %v3312
        %v3314 = vpop.f32.mrb[0].mxu0
        %3315 = vmatprep.mubr.f32.mxu0 %v2459
        %3316 = vmatmul.mubr.f32.gmra.mrb[0].mxu0 %v2347
        %v3317 = vpop.f32.mrb[0].mxu0
        %v3318 = vadd.f32 %v3093, %v3317
        %v3319 = vpop.f32.mrb[0].mxu0
        %3320 = vmatprep.mubr.f32.mxu0 %v2461
        %3321 = vmatmul.mubr.f32.gmra.mrb[0].mxu0 %v2349
        %v3322 = vpop.f32.mrb[0].mxu0
        %v3323 = vadd.f32 %v3098, %v3322
        %v3324 = vpop.f32.mrb[0].mxu0
        %3325 = vmatprep.mubr.f32.mxu0 %v2505
        %3326 = vmatmul.mubr.f32.gmra.mrb[0].mxu0 %v2498
        %v3327 = vpop.f32.mrb[0].mxu0
        %v3328 = vadd.f32 %v3103, %v3327
        %v3329 = vpop.f32.mrb[0].mxu0
        %3330 = vmatprep.mubr.f32.mxu0 %v2507
        %3331 = vmatmul.mubr.f32.gmra.mrb[0].mxu0 %v2500
        %v3332 = vpop.f32.mrb[0].mxu0
        %v3333 = vadd.f32 %v3108, %v3332
        %v3334 = vpop.f32.mrb[0].mxu0
        %3335 = vdwg.mxu0
        %3336 = vmatprep.subr.mxu0 0.0
        %3337 = vmatpush1.msra.mxu0 %v2606
        %3338 = vmatprep.subr.mxu0 0.0
        %3339 = vmatpush1.msra.mxu0 %v2607
        %3340 = vmatprep.subr.mxu0 0.0
        %3341 = vmatpush1.msra.mxu0 %v2608
        %3342 = vmatprep.subr.mxu0 0.0
        %3343 = vmatpush1.msra.mxu0 %v2609
        %3344 = vmatprep.subr.mxu0 0.0
        %3345 = vmatpush1.msra.mxu0 %v2610
        %3346 = vmatprep.subr.mxu0 0.0
        %3347 = vmatpush1.msra.mxu0 %v2611
        %3348 = vmatprep.subr.mxu0 0.0
        %3349 = vmatpush1.msra.mxu0 %v2612
        %3350 = vmatprep.subr.mxu0 0.0
        %3351 = vmatpush1.msra.mxu0 %v2613
        %3352 = vmatprep.subr.mxu0 0.0
        %3353 = vmatpush1.msra.mxu0 %v2614
        %3354 = vmatprep.subr.mxu0 0.0
        %3355 = vmatpush1.msra.mxu0 %v2615
        %3356 = vmatprep.subr.mxu0 0.0
        %3357 = vmatpush1.msra.mxu0 %v2616
        %3358 = vmatprep.subr.mxu0 0.0
        %3359 = vmatpush1.msra.mxu0 %v2617
        %3360 = vmatprep.subr.mxu0 0.0
        %3361 = vmatpush1.msra.mxu0 %v2618
        %3362 = vmatprep.subr.mxu0 0.0
        %3363 = vmatpush1.msra.mxu0 %v2619
        %3364 = vmatprep.subr.mxu0 0.0
        %3365 = vmatpush1.msra.mxu0 %v2620
        %3366 = vmatprep.subr.mxu0 0.0
        %3367 = vmatpush1.msra.mxu0 %v2621
        %3368 = vmatprep.subr.mxu0 0.0
        %3369 = vmatpush1.msra.mxu0 %v2622
        %3370 = vmatprep.subr.mxu0 0.0
        %3371 = vmatpush1.msra.mxu0 %v2623
        %3372 = vmatprep.subr.mxu0 0.0
        %3373 = vmatpush1.msra.mxu0 %v2624
        %3374 = vmatprep.subr.mxu0 0.0
        %3375 = vmatpush1.msra.mxu0 %v2625
        %3376 = vmatprep.subr.mxu0 0.0
        %3377 = vmatpush1.msra.mxu0 %v2626
        %3378 = vmatprep.subr.mxu0 0.0
        %3379 = vmatpush1.msra.mxu0 %v2627
        %3380 = vmatprep.subr.mxu0 0.0
        %3381 = vmatpush1.msra.mxu0 %v2628
        %3382 = vmatprep.subr.mxu0 0.0
        %3383 = vmatpush1.msra.mxu0 %v2629
        %3384 = vmatprep.subr.mxu0 0.0
        %3385 = vmatpush1.msra.mxu0 %v2630
        %3386 = vmatprep.subr.mxu0 0.0
        %3387 = vmatpush1.msra.mxu0 %v2631
        %3388 = vmatprep.subr.mxu0 0.0
        %3389 = vmatpush1.msra.mxu0 %v2632
        %3390 = vmatprep.subr.mxu0 0.0
        %3391 = vmatpush1.msra.mxu0 %v2633
        %3392 = vmatprep.subr.mxu0 0.0
        %3393 = vmatpush1.msra.mxu0 %v2634
        %3394 = vmatprep.subr.mxu0 0.0
        %3395 = vmatpush1.msra.mxu0 %v2635
        %3396 = vmatprep.subr.mxu0 0.0
        %3397 = vmatpush1.msra.mxu0 %v2636
        %3398 = vmatprep.subr.mxu0 0.0
        %3399 = vmatpush1.msra.mxu0 %v2637
        %3400 = vmatprep.mubr.f32.mxu0 %v2282
        %3401 = vmatmul.mubr.f32.gmra.mrb[0].mxu0 %v2206
        %v3402 = vpop.f32.mrb[0].mxu0
        %v3403 = vadd.f32 %v3178, %v3402
        %v3404 = vpop.f32.mrb[0].mxu0
        %3405 = vmatprep.mubr.f32.mxu0 %v2284
        %3406 = vmatmul.mubr.f32.gmra.mrb[0].mxu0 %v2111
        %v3407 = vpop.f32.mrb[0].mxu0
        %v3408 = vadd.f32 %v3183, %v3407
        %v3409 = vpop.f32.mrb[0].mxu0
        %3410 = vmatprep.mubr.f32.mxu0 %v2287
        %3411 = vmatmul.mubr.f32.gmra.mrb[0].mxu0 %v2207
        %v3412 = vpop.f32.mrb[0].mxu0
        %v3413 = vadd.f32 %v3188, %v3412
        %v3414 = vpop.f32.mrb[0].mxu0
        %3415 = vmatprep.mubr.f32.mxu0 %v2289
        %3416 = vmatmul.mubr.f32.gmra.mrb[0].mxu0 %v2114
        %v3417 = vpop.f32.mrb[0].mxu0
        %v3418 = vadd.f32 %v3193, %v3417
        %v3419 = vpop.f32.mrb[0].mxu0
        %3420 = vmatprep.mubr.f32.mxu0 %v2292
        %3421 = vmatmul.mubr.f32.gmra.mrb[0].mxu0 %v2208
        %v3422 = vpop.f32.mrb[0].mxu0
        %v3423 = vadd.f32 %v3198, %v3422
        %v3424 = vpop.f32.mrb[0].mxu0
        %3425 = vmatprep.mubr.f32.mxu0 %v2294
        %3426 = vmatmul.mubr.f32.gmra.mrb[0].mxu0 %v2117
        %v3427 = vpop.f32.mrb[0].mxu0
        %v3428 = vadd.f32 %v3203, %v3427
        %v3429 = vpop.f32.mrb[0].mxu0
        %3430 = vmatprep.mubr.f32.mxu0 %v2297
        %3431 = vmatmul.mubr.f32.gmra.mrb[0].mxu0 %v2209
        %v3432 = vpop.f32.mrb[0].mxu0
        %v3433 = vadd.f32 %v3208, %v3432
        %v3434 = vpop.f32.mrb[0].mxu0
        %3435 = vmatprep.mubr.f32.mxu0 %v2299
        %3436 = vmatmul.mubr.f32.gmra.mrb[0].mxu0 %v2120
        %v3437 = vpop.f32.mrb[0].mxu0
        %v3438 = vadd.f32 %v3213, %v3437
        %v3439 = vpop.f32.mrb[0].mxu0
        %3440 = vmatprep.mubr.f32.mxu0 %v2302
        %3441 = vmatmul.mubr.f32.gmra.mrb[0].mxu0 %v2210
        %v3442 = vpop.f32.mrb[0].mxu0
        %v3443 = vadd.f32 %v3218, %v3442
        %v3444 = vpop.f32.mrb[0].mxu0
        %3445 = vmatprep.mubr.f32.mxu0 %v2304
        %3446 = vmatmul.mubr.f32.gmra.mrb[0].mxu0 %v2123
        %v3447 = vpop.f32.mrb[0].mxu0
        %v3448 = vadd.f32 %v3223, %v3447
        %v3449 = vpop.f32.mrb[0].mxu0
        %3450 = vmatprep.mubr.f32.mxu0 %v2307
        %3451 = vmatmul.mubr.f32.gmra.mrb[0].mxu0 %v2211
        %v3452 = vpop.f32.mrb[0].mxu0
        %v3453 = vadd.f32 %v3228, %v3452
        %v3454 = vpop.f32.mrb[0].mxu0
        %3455 = vmatprep.mubr.f32.mxu0 %v2309
        %3456 = vmatmul.mubr.f32.gmra.mrb[0].mxu0 %v2126
        %v3457 = vpop.f32.mrb[0].mxu0
        %v3458 = vadd.f32 %v3233, %v3457
        %v3459 = vpop.f32.mrb[0].mxu0
        %3460 = vmatprep.mubr.f32.mxu0 %v2312
        %3461 = vmatmul.mubr.f32.gmra.mrb[0].mxu0 %v2212
        %v3462 = vpop.f32.mrb[0].mxu0
        %v3463 = vadd.f32 %v3238, %v3462
        %v3464 = vpop.f32.mrb[0].mxu0
        %3465 = vmatprep.mubr.f32.mxu0 %v2314
        %3466 = vmatmul.mubr.f32.gmra.mrb[0].mxu0 %v2129
        %v3467 = vpop.f32.mrb[0].mxu0
        %v3468 = vadd.f32 %v3243, %v3467
        %v3469 = vpop.f32.mrb[0].mxu0
        %3470 = vmatprep.mubr.f32.mxu0 %v2317
        %3471 = vmatmul.mubr.f32.gmra.mrb[0].mxu0 %v2213
        %v3472 = vpop.f32.mrb[0].mxu0
        %v3473 = vadd.f32 %v3248, %v3472
        %v3474 = vpop.f32.mrb[0].mxu0
        %3475 = vmatprep.mubr.f32.mxu0 %v2319
        %3476 = vmatmul.mubr.f32.gmra.mrb[0].mxu0 %v2132
        %v3477 = vpop.f32.mrb[0].mxu0
        %v3478 = vadd.f32 %v3253, %v3477
        %v3479 = vpop.f32.mrb[0].mxu0
        %3480 = vmatprep.mubr.f32.mxu0 %v2322
        %3481 = vmatmul.mubr.f32.gmra.mrb[0].mxu0 %v2214
        %v3482 = vpop.f32.mrb[0].mxu0
        %v3483 = vadd.f32 %v3258, %v3482
        %v3484 = vpop.f32.mrb[0].mxu0
        %3485 = vmatprep.mubr.f32.mxu0 %v2324
        %3486 = vmatmul.mubr.f32.gmra.mrb[0].mxu0 %v2135
        %v3487 = vpop.f32.mrb[0].mxu0
        %v3488 = vadd.f32 %v3263, %v3487
        %v3489 = vpop.f32.mrb[0].mxu0
        %3490 = vmatprep.mubr.f32.mxu0 %v2327
        %3491 = vmatmul.mubr.f32.gmra.mrb[0].mxu0 %v2215
        %v3492 = vpop.f32.mrb[0].mxu0
        %v3493 = vadd.f32 %v3268, %v3492
        %v3494 = vpop.f32.mrb[0].mxu0
        %3495 = vmatprep.mubr.f32.mxu0 %v2329
        %3496 = vmatmul.mubr.f32.gmra.mrb[0].mxu0 %v2138
        %v3497 = vpop.f32.mrb[0].mxu0
        %v3498 = vadd.f32 %v3273, %v3497
        %v3499 = vpop.f32.mrb[0].mxu0
        %3500 = vmatprep.mubr.f32.mxu0 %v2332
        %3501 = vmatmul.mubr.f32.gmra.mrb[0].mxu0 %v2216
        %v3502 = vpop.f32.mrb[0].mxu0
        %v3503 = vadd.f32 %v3278, %v3502
        %v3504 = vpop.f32.mrb[0].mxu0
        %3505 = vmatprep.mubr.f32.mxu0 %v2334
        %3506 = vmatmul.mubr.f32.gmra.mrb[0].mxu0 %v2141
        %v3507 = vpop.f32.mrb[0].mxu0
        %v3508 = vadd.f32 %v3283, %v3507
        %v3509 = vpop.f32.mrb[0].mxu0
        %3510 = vmatprep.mubr.f32.mxu0 %v2337
        %3511 = vmatmul.mubr.f32.gmra.mrb[0].mxu0 %v2217
        %v3512 = vpop.f32.mrb[0].mxu0
        %v3513 = vadd.f32 %v3288, %v3512
        %v3514 = vpop.f32.mrb[0].mxu0
        %3515 = vmatprep.mubr.f32.mxu0 %v2339
        %3516 = vmatmul.mubr.f32.gmra.mrb[0].mxu0 %v2144
        %v3517 = vpop.f32.mrb[0].mxu0
        %v3518 = vadd.f32 %v3293, %v3517
        %v3519 = vpop.f32.mrb[0].mxu0
        %3520 = vmatprep.mubr.f32.mxu0 %v2342
        %3521 = vmatmul.mubr.f32.gmra.mrb[0].mxu0 %v2218
        %v3522 = vpop.f32.mrb[0].mxu0
        %v3523 = vadd.f32 %v3298, %v3522
        %v3524 = vpop.f32.mrb[0].mxu0
        %3525 = vmatprep.mubr.f32.mxu0 %v2344
        %3526 = vmatmul.mubr.f32.gmra.mrb[0].mxu0 %v2147
        %v3527 = vpop.f32.mrb[0].mxu0
        %v3528 = vadd.f32 %v3303, %v3527
        %v3529 = vpop.f32.mrb[0].mxu0
        %3530 = vmatprep.mubr.f32.mxu0 %v2347
        %3531 = vmatmul.mubr.f32.gmra.mrb[0].mxu0 %v2219
        %v3532 = vpop.f32.mrb[0].mxu0
        %v3533 = vadd.f32 %v3308, %v3532
        %v3534 = vpop.f32.mrb[0].mxu0
        %3535 = vmatprep.mubr.f32.mxu0 %v2349
        %3536 = vmatmul.mubr.f32.gmra.mrb[0].mxu0 %v2150
        %v3537 = vpop.f32.mrb[0].mxu0
        %v3538 = vadd.f32 %v3313, %v3537
        %v3539 = vpop.f32.mrb[0].mxu0
        %3540 = vmatprep.mubr.f32.mxu0 %v2498
        %3541 = vmatmul.mubr.f32.gmra.mrb[0].mxu0 %v2220
        %v3542 = vpop.f32.mrb[0].mxu0
        %v3543 = vadd.f32 %v3318, %v3542
        %v3544 = vpop.f32.mrb[0].mxu0
        %3545 = vmatprep.mubr.f32.mxu0 %v2500
        %3546 = vmatmul.mubr.f32.gmra.mrb[0].mxu0 %v2153
        %v3547 = vpop.f32.mrb[0].mxu0
        %v3548 = vadd.f32 %v3323, %v3547
        %v3549 = vpop.f32.mrb[0].mxu0
        %3550 = vmatprep.mubr.f32.mxu0 %v2272
        %3551 = vmatmul.mubr.f32.gmra.mrb[0].mxu0 %v2204
        %v3552 = vpop.f32.mrb[0].mxu0
        %v3553 = vadd.f32 %v3328, %v3552
        %v3554 = vpop.f32.mrb[0].mxu0
        %3555 = vmatprep.mubr.f32.mxu0 %v2274
        %3556 = vmatmul.mubr.f32.gmra.mrb[0].mxu0 %v2105
        %v3557 = vpop.f32.mrb[0].mxu0
        %v3558 = vadd.f32 %v3333, %v3557
        %v3559 = vpop.f32.mrb[0].mxu0
        %3560 = vdwg.mxu0
        %3561 = vmatprep.subr.mxu0 0.0
        %3562 = vmatpush1.msra.mxu0 %v2638
        %3563 = vmatprep.subr.mxu0 0.0
        %3564 = vmatpush1.msra.mxu0 %v2639
        %3565 = vmatprep.subr.mxu0 0.0
        %3566 = vmatpush1.msra.mxu0 %v2640
        %3567 = vmatprep.subr.mxu0 0.0
        %3568 = vmatpush1.msra.mxu0 %v2641
        %3569 = vmatprep.subr.mxu0 0.0
        %3570 = vmatpush1.msra.mxu0 %v2642
        %3571 = vmatprep.subr.mxu0 0.0
        %3572 = vmatpush1.msra.mxu0 %v2643
        %3573 = vmatprep.subr.mxu0 0.0
        %3574 = vmatpush1.msra.mxu0 %v2644
        %3575 = vmatprep.subr.mxu0 0.0
        %3576 = vmatpush1.msra.mxu0 %v2645
        %3577 = vmatprep.subr.mxu0 0.0
        %3578 = vmatpush1.msra.mxu0 %v2646
        %3579 = vmatprep.subr.mxu0 0.0
        %3580 = vmatpush1.msra.mxu0 %v2647
        %3581 = vmatprep.subr.mxu0 0.0
        %3582 = vmatpush1.msra.mxu0 %v2648
        %3583 = vmatprep.subr.mxu0 0.0
        %3584 = vmatpush1.msra.mxu0 %v2649
        %3585 = vmatprep.subr.mxu0 0.0
        %3586 = vmatpush1.msra.mxu0 %v2650
        %3587 = vmatprep.subr.mxu0 0.0
        %3588 = vmatpush1.msra.mxu0 %v2651
        %3589 = vmatprep.subr.mxu0 0.0
        %3590 = vmatpush1.msra.mxu0 %v2652
        %3591 = vmatprep.subr.mxu0 0.0
        %3592 = vmatpush1.msra.mxu0 %v2653
        %3593 = vmatprep.subr.mxu0 0.0
        %3594 = vmatpush1.msra.mxu0 0.0
        %3595 = vmatprep.subr.mxu0 0.0
        %3596 = vmatpush1.msra.mxu0 0.0
        %3597 = vmatprep.subr.mxu0 0.0
        %3598 = vmatpush1.msra.mxu0 0.0
        %3599 = vmatprep.subr.mxu0 0.0
        %3600 = vmatpush1.msra.mxu0 0.0
        %3601 = vmatprep.subr.mxu0 0.0
        %3602 = vmatpush1.msra.mxu0 0.0
        %3603 = vmatprep.subr.mxu0 0.0
        %3604 = vmatpush1.msra.mxu0 0.0
        %3605 = vmatprep.subr.mxu0 0.0
        %3606 = vmatpush1.msra.mxu0 0.0
        %3607 = vmatprep.subr.mxu0 0.0
        %3608 = vmatpush1.msra.mxu0 0.0
        %3609 = vmatprep.subr.mxu0 0.0
        %3610 = vmatpush1.msra.mxu0 0.0
        %3611 = vmatprep.subr.mxu0 0.0
        %3612 = vmatpush1.msra.mxu0 0.0
        %3613 = vmatprep.subr.mxu0 0.0
        %3614 = vmatpush1.msra.mxu0 0.0
        %3615 = vmatprep.subr.mxu0 0.0
        %3616 = vmatpush1.msra.mxu0 0.0
        %3617 = vmatprep.subr.mxu0 0.0
        %3618 = vmatpush1.msra.mxu0 0.0
        %3619 = vmatprep.subr.mxu0 0.0
        %3620 = vmatpush1.msra.mxu0 0.0
        %3621 = vmatprep.subr.mxu0 0.0
        %3622 = vmatpush1.msra.mxu0 0.0
        %3623 = vmatprep.subr.mxu0 0.0
        %3624 = vmatpush1.msra.mxu0 0.0
        %3625 = vmatprep.mubr.f32.mxu0 0.0
        %3626 = vmatmul.mubr.f32.gmra.mrb[0].mxu0 %v2394
        %v3627 = vpop.f32.mrb[0].mxu0
        %v3628 = vadd.f32 %v3403, %v3627
        %v3629 = vpop.f32.mrb[0].mxu0
        %3630 = vmatprep.mubr.f32.mxu0 0.0
        %3631 = vmatmul.mubr.f32.gmra.mrb[0].mxu0 %v2396
        %v3632 = vpop.f32.mrb[0].mxu0
        %v3633 = vadd.f32 %v3408, %v3632
        %v3634 = vpop.f32.mrb[0].mxu0
        %3635 = vmatprep.mubr.f32.mxu0 0.0
        %3636 = vmatmul.mubr.f32.gmra.mrb[0].mxu0 %v2399
        %v3637 = vpop.f32.mrb[0].mxu0
        %v3638 = vadd.f32 %v3413, %v3637
        %v3639 = vpop.f32.mrb[0].mxu0
        %3640 = vmatprep.mubr.f32.mxu0 0.0
        %3641 = vmatmul.mubr.f32.gmra.mrb[0].mxu0 %v2401
        %v3642 = vpop.f32.mrb[0].mxu0
        %v3643 = vadd.f32 %v3418, %v3642
        %v3644 = vpop.f32.mrb[0].mxu0
        %3645 = vmatprep.mubr.f32.mxu0 0.0
        %3646 = vmatmul.mubr.f32.gmra.mrb[0].mxu0 %v2404
        %v3647 = vpop.f32.mrb[0].mxu0
        %v3648 = vadd.f32 %v3423, %v3647
        %v3649 = vpop.f32.mrb[0].mxu0
        %3650 = vmatprep.mubr.f32.mxu0 0.0
        %3651 = vmatmul.mubr.f32.gmra.mrb[0].mxu0 %v2406
        %v3652 = vpop.f32.mrb[0].mxu0
        %v3653 = vadd.f32 %v3428, %v3652
        %v3654 = vpop.f32.mrb[0].mxu0
        %3655 = vmatprep.mubr.f32.mxu0 0.0
        %3656 = vmatmul.mubr.f32.gmra.mrb[0].mxu0 %v2409
        %v3657 = vpop.f32.mrb[0].mxu0
        %v3658 = vadd.f32 %v3433, %v3657
        %v3659 = vpop.f32.mrb[0].mxu0
        %3660 = vmatprep.mubr.f32.mxu0 0.0
        %3661 = vmatmul.mubr.f32.gmra.mrb[0].mxu0 %v2411
        %v3662 = vpop.f32.mrb[0].mxu0
        %v3663 = vadd.f32 %v3438, %v3662
        %v3664 = vpop.f32.mrb[0].mxu0
        %3665 = vmatprep.mubr.f32.mxu0 0.0
        %3666 = vmatmul.mubr.f32.gmra.mrb[0].mxu0 %v2414
        %v3667 = vpop.f32.mrb[0].mxu0
        %v3668 = vadd.f32 %v3443, %v3667
        %v3669 = vpop.f32.mrb[0].mxu0
        %3670 = vmatprep.mubr.f32.mxu0 0.0
        %3671 = vmatmul.mubr.f32.gmra.mrb[0].mxu0 %v2416
        %v3672 = vpop.f32.mrb[0].mxu0
        %v3673 = vadd.f32 %v3448, %v3672
        %v3674 = vpop.f32.mrb[0].mxu0
        %3675 = vmatprep.mubr.f32.mxu0 0.0
        %3676 = vmatmul.mubr.f32.gmra.mrb[0].mxu0 %v2419
        %v3677 = vpop.f32.mrb[0].mxu0
        %v3678 = vadd.f32 %v3453, %v3677
        %v3679 = vpop.f32.mrb[0].mxu0
        %3680 = vmatprep.mubr.f32.mxu0 0.0
        %3681 = vmatmul.mubr.f32.gmra.mrb[0].mxu0 %v2421
        %v3682 = vpop.f32.mrb[0].mxu0
        %v3683 = vadd.f32 %v3458, %v3682
        %v3684 = vpop.f32.mrb[0].mxu0
        %3685 = vmatprep.mubr.f32.mxu0 0.0
        %3686 = vmatmul.mubr.f32.gmra.mrb[0].mxu0 %v2424
        %v3687 = vpop.f32.mrb[0].mxu0
        %v3688 = vadd.f32 %v3463, %v3687
        %v3689 = vpop.f32.mrb[0].mxu0
        %3690 = vmatprep.mubr.f32.mxu0 0.0
        %3691 = vmatmul.mubr.f32.gmra.mrb[0].mxu0 %v2426
        %v3692 = vpop.f32.mrb[0].mxu0
        %v3693 = vadd.f32 %v3468, %v3692
        %v3694 = vpop.f32.mrb[0].mxu0
        %3695 = vmatprep.mubr.f32.mxu0 0.0
        %3696 = vmatmul.mubr.f32.gmra.mrb[0].mxu0 %v2429
        %v3697 = vpop.f32.mrb[0].mxu0
        %v3698 = vadd.f32 %v3473, %v3697
        %v3699 = vpop.f32.mrb[0].mxu0
        %3700 = vmatprep.mubr.f32.mxu0 0.0
        %3701 = vmatmul.mubr.f32.gmra.mrb[0].mxu0 %v2431
        %v3702 = vpop.f32.mrb[0].mxu0
        %v3703 = vadd.f32 %v3478, %v3702
        %v3704 = vpop.f32.mrb[0].mxu0
        %3705 = vmatprep.mubr.f32.mxu0 0.0
        %3706 = vmatmul.mubr.f32.gmra.mrb[0].mxu0 %v2434
        %v3707 = vpop.f32.mrb[0].mxu0
        %v3708 = vadd.f32 %v3483, %v3707
        %v3709 = vpop.f32.mrb[0].mxu0
        %3710 = vmatprep.mubr.f32.mxu0 0.0
        %3711 = vmatmul.mubr.f32.gmra.mrb[0].mxu0 %v2436
        %v3712 = vpop.f32.mrb[0].mxu0
        %v3713 = vadd.f32 %v3488, %v3712
        %v3714 = vpop.f32.mrb[0].mxu0
        %3715 = vmatprep.mubr.f32.mxu0 0.0
        %3716 = vmatmul.mubr.f32.gmra.mrb[0].mxu0 %v2439
        %v3717 = vpop.f32.mrb[0].mxu0
        %v3718 = vadd.f32 %v3493, %v3717
        %v3719 = vpop.f32.mrb[0].mxu0
        %3720 = vmatprep.mubr.f32.mxu0 0.0
        %3721 = vmatmul.mubr.f32.gmra.mrb[0].mxu0 %v2441
        %v3722 = vpop.f32.mrb[0].mxu0
        %v3723 = vadd.f32 %v3498, %v3722
        %v3724 = vpop.f32.mrb[0].mxu0
        %3725 = vmatprep.mubr.f32.mxu0 0.0
        %3726 = vmatmul.mubr.f32.gmra.mrb[0].mxu0 %v2444
        %v3727 = vpop.f32.mrb[0].mxu0
        %v3728 = vadd.f32 %v3503, %v3727
        %v3729 = vpop.f32.mrb[0].mxu0
        %3730 = vmatprep.mubr.f32.mxu0 0.0
        %3731 = vmatmul.mubr.f32.gmra.mrb[0].mxu0 %v2446
        %v3732 = vpop.f32.mrb[0].mxu0
        %v3733 = vadd.f32 %v3508, %v3732
        %v3734 = vpop.f32.mrb[0].mxu0
        %3735 = vmatprep.mubr.f32.mxu0 0.0
        %3736 = vmatmul.mubr.f32.gmra.mrb[0].mxu0 %v2449
        %v3737 = vpop.f32.mrb[0].mxu0
        %v3738 = vadd.f32 %v3513, %v3737
        %v3739 = vpop.f32.mrb[0].mxu0
        %3740 = vmatprep.mubr.f32.mxu0 0.0
        %3741 = vmatmul.mubr.f32.gmra.mrb[0].mxu0 %v2451
        %v3742 = vpop.f32.mrb[0].mxu0
        %v3743 = vadd.f32 %v3518, %v3742
        %v3744 = vpop.f32.mrb[0].mxu0
        %3745 = vmatprep.mubr.f32.mxu0 0.0
        %3746 = vmatmul.mubr.f32.gmra.mrb[0].mxu0 %v2454
        %v3747 = vpop.f32.mrb[0].mxu0
        %v3748 = vadd.f32 %v3523, %v3747
        %v3749 = vpop.f32.mrb[0].mxu0
        %3750 = vmatprep.mubr.f32.mxu0 0.0
        %3751 = vmatmul.mubr.f32.gmra.mrb[0].mxu0 %v2456
        %v3752 = vpop.f32.mrb[0].mxu0
        %v3753 = vadd.f32 %v3528, %v3752
        %v3754 = vpop.f32.mrb[0].mxu0
        %3755 = vmatprep.mubr.f32.mxu0 0.0
        %3756 = vmatmul.mubr.f32.gmra.mrb[0].mxu0 %v2459
        %v3757 = vpop.f32.mrb[0].mxu0
        %v3758 = vadd.f32 %v3533, %v3757
        %v3759 = vpop.f32.mrb[0].mxu0
        %3760 = vmatprep.mubr.f32.mxu0 0.0
        %3761 = vmatmul.mubr.f32.gmra.mrb[0].mxu0 %v2461
        %v3762 = vpop.f32.mrb[0].mxu0
        %v3763 = vadd.f32 %v3538, %v3762
        %v3764 = vpop.f32.mrb[0].mxu0
        %3765 = vmatprep.mubr.f32.mxu0 0.0
        %3766 = vmatmul.mubr.f32.gmra.mrb[0].mxu0 %v2505
        %v3767 = vpop.f32.mrb[0].mxu0
        %v3768 = vadd.f32 %v3543, %v3767
        %v3769 = vpop.f32.mrb[0].mxu0
        %3770 = vmatprep.mubr.f32.mxu0 0.0
        %3771 = vmatmul.mubr.f32.gmra.mrb[0].mxu0 %v2507
        %v3772 = vpop.f32.mrb[0].mxu0
        %v3773 = vadd.f32 %v3548, %v3772
        %v3774 = vpop.f32.mrb[0].mxu0
        %3775 = vmatprep.mubr.f32.mxu0 0.0
        %3776 = vmatmul.mubr.f32.gmra.mrb[0].mxu0 %v2384
        %v3777 = vpop.f32.mrb[0].mxu0
        %v3778 = vadd.f32 %v3553, %v3777
        %v3779 = vpop.f32.mrb[0].mxu0
        %3780 = vmatprep.mubr.f32.mxu0 0.0
        %3781 = vmatmul.mubr.f32.gmra.mrb[0].mxu0 %v2386
        %v3782 = vpop.f32.mrb[0].mxu0
        %v3783 = vadd.f32 %v3558, %v3782
        %v3784 = vpop.f32.mrb[0].mxu0
        %3785 = vdwg.mxu0
        %v3786 = vsub.f32 0.0, %v3628
        %v3787 = vsub.f32 0.0, %v3633
        %v3788 = vsub.f32 0.0, %v3638
        %v3789 = vsub.f32 0.0, %v3643
        %v3790 = vsub.f32 0.0, %v3648
        %v3791 = vsub.f32 0.0, %v3653
        %v3792 = vsub.f32 0.0, %v3658
        %v3793 = vsub.f32 0.0, %v3663
        %v3794 = vsub.f32 0.0, %v3668
        %v3795 = vsub.f32 0.0, %v3673
        %v3796 = vsub.f32 0.0, %v3678
        %v3797 = vsub.f32 0.0, %v3683
        %v3798 = vsub.f32 0.0, %v3688
        %v3799 = vsub.f32 0.0, %v3693
        %v3800 = vsub.f32 0.0, %v3698
        %v3801 = vsub.f32 0.0, %v3703
        %v3802 = vsub.f32 0.0, %v3708
        %v3803 = vsub.f32 0.0, %v3713
        %v3804 = vsub.f32 0.0, %v3718
        %v3805 = vsub.f32 0.0, %v3723
        %v3806 = vsub.f32 0.0, %v3728
        %v3807 = vsub.f32 0.0, %v3733
        %v3808 = vsub.f32 0.0, %v3738
        %v3809 = vsub.f32 0.0, %v3743
        %v3810 = vsub.f32 0.0, %v3748
        %v3811 = vsub.f32 0.0, %v3753
        %v3812 = vsub.f32 0.0, %v3758
        %v3813 = vsub.f32 0.0, %v3763
        %v3814 = vsub.f32 0.0, %v3768
        %v3815 = vsub.f32 0.0, %v3773
        %v3816 = vsub.f32 0.0, %v3778
        %v3817 = vsub.f32 0.0, %v3783
        %v3818 = vmul.f32 %v3786, 1.442695
        %v3819 = vpow.pop %v3818
        %v3820 = vmul.f32 %v3787, 1.442695
        %v3821 = vpow.pop %v3820
        %v3822 = vmul.f32 %v3788, 1.442695
        %v3823 = vpow.pop %v3822
        %v3824 = vmul.f32 %v3789, 1.442695
        %v3825 = vpow.pop %v3824
        %v3826 = vmul.f32 %v3790, 1.442695
        %v3827 = vpow.pop %v3826
        %v3828 = vmul.f32 %v3791, 1.442695
        %v3829 = vpow.pop %v3828
        %v3830 = vmul.f32 %v3792, 1.442695
        %v3831 = vpow.pop %v3830
        %v3832 = vmul.f32 %v3793, 1.442695
        %v3833 = vpow.pop %v3832
        %v3834 = vmul.f32 %v3794, 1.442695
        %v3835 = vpow.pop %v3834
        %v3836 = vmul.f32 %v3795, 1.442695
        %v3837 = vpow.pop %v3836
        %v3838 = vmul.f32 %v3796, 1.442695
        %v3839 = vpow.pop %v3838
        %v3840 = vmul.f32 %v3797, 1.442695
        %v3841 = vpow.pop %v3840
        %v3842 = vmul.f32 %v3798, 1.442695
        %v3843 = vpow.pop %v3842
        %v3844 = vmul.f32 %v3799, 1.442695
        %v3845 = vpow.pop %v3844
        %v3846 = vmul.f32 %v3800, 1.442695
        %v3847 = vpow.pop %v3846
        %v3848 = vmul.f32 %v3801, 1.442695
        %v3849 = vpow.pop %v3848
        %v3850 = vmul.f32 %v3802, 1.442695
        %v3851 = vpow.pop %v3850
        %v3852 = vmul.f32 %v3803, 1.442695
        %v3853 = vpow.pop %v3852
        %v3854 = vmul.f32 %v3804, 1.442695
        %v3855 = vpow.pop %v3854
        %v3856 = vmul.f32 %v3805, 1.442695
        %v3857 = vpow.pop %v3856
        %v3858 = vmul.f32 %v3806, 1.442695
        %v3859 = vpow.pop %v3858
        %v3860 = vmul.f32 %v3807, 1.442695
        %v3861 = vpow.pop %v3860
        %v3862 = vmul.f32 %v3808, 1.442695
        %v3863 = vpow.pop %v3862
        %v3864 = vmul.f32 %v3809, 1.442695
        %v3865 = vpow.pop %v3864
        %v3866 = vmul.f32 %v3810, 1.442695
        %v3867 = vpow.pop %v3866
        %v3868 = vmul.f32 %v3811, 1.442695
        %v3869 = vpow.pop %v3868
        %v3870 = vmul.f32 %v3812, 1.442695
        %v3871 = vpow.pop %v3870
        %v3872 = vmul.f32 %v3813, 1.442695
        %v3873 = vpow.pop %v3872
        %v3874 = vmul.f32 %v3814, 1.442695
        %v3875 = vpow.pop %v3874
        %v3876 = vmul.f32 %v3815, 1.442695
        %v3877 = vpow.pop %v3876
        %v3878 = vmul.f32 %v3816, 1.442695
        %v3879 = vpow.pop %v3878
        %v3880 = vmul.f32 %v3817, 1.442695
        %v3881 = vpow.pop %v3880
        %v3882 = vadd.f32 %v3819, 1.0
        %v3883 = vadd.f32 %v3821, 1.0
        %v3884 = vadd.f32 %v3823, 1.0
        %v3885 = vadd.f32 %v3825, 1.0
        %v3886 = vadd.f32 %v3827, 1.0
        %v3887 = vadd.f32 %v3829, 1.0
        %v3888 = vadd.f32 %v3831, 1.0
        %v3889 = vadd.f32 %v3833, 1.0
        %v3890 = vadd.f32 %v3835, 1.0
        %v3891 = vadd.f32 %v3837, 1.0
        %v3892 = vadd.f32 %v3839, 1.0
        %v3893 = vadd.f32 %v3841, 1.0
        %v3894 = vadd.f32 %v3843, 1.0
        %v3895 = vadd.f32 %v3845, 1.0
        %v3896 = vadd.f32 %v3847, 1.0
        %v3897 = vadd.f32 %v3849, 1.0
        %v3898 = vadd.f32 %v3851, 1.0
        %v3899 = vadd.f32 %v3853, 1.0
        %v3900 = vadd.f32 %v3855, 1.0
        %v3901 = vadd.f32 %v3857, 1.0
        %v3902 = vadd.f32 %v3859, 1.0
        %v3903 = vadd.f32 %v3861, 1.0
        %v3904 = vadd.f32 %v3863, 1.0
        %v3905 = vadd.f32 %v3865, 1.0
        %v3906 = vadd.f32 %v3867, 1.0
        %v3907 = vadd.f32 %v3869, 1.0
        %v3908 = vadd.f32 %v3871, 1.0
        %v3909 = vadd.f32 %v3873, 1.0
        %v3910 = vadd.f32 %v3875, 1.0
        %v3911 = vadd.f32 %v3877, 1.0
        %v3912 = vadd.f32 %v3879, 1.0
        %v3913 = vadd.f32 %v3881, 1.0
        %v3914 = vrcp.pop %v3882
        %v3915 = vrcp.pop %v3883
        %v3916 = vrcp.pop %v3884
        %v3917 = vrcp.pop %v3885
        %v3918 = vrcp.pop %v3886
        %v3919 = vrcp.pop %v3887
        %v3920 = vrcp.pop %v3888
        %v3921 = vrcp.pop %v3889
        %v3922 = vrcp.pop %v3890
        %v3923 = vrcp.pop %v3891
        %v3924 = vrcp.pop %v3892
        %v3925 = vrcp.pop %v3893
        %v3926 = vrcp.pop %v3894
        %v3927 = vrcp.pop %v3895
        %v3928 = vrcp.pop %v3896
        %v3929 = vrcp.pop %v3897
        %v3930 = vrcp.pop %v3898
        %v3931 = vrcp.pop %v3899
        %v3932 = vrcp.pop %v3900
        %v3933 = vrcp.pop %v3901
        %v3934 = vrcp.pop %v3902
        %v3935 = vrcp.pop %v3903
        %v3936 = vrcp.pop %v3904
        %v3937 = vrcp.pop %v3905
        %v3938 = vrcp.pop %v3906
        %v3939 = vrcp.pop %v3907
        %v3940 = vrcp.pop %v3908
        %v3941 = vrcp.pop %v3909
        %v3942 = vrcp.pop %v3910
        %v3943 = vrcp.pop %v3911
        %v3944 = vrcp.pop %v3912
        %v3945 = vrcp.pop %v3913
        %v3946 = vmul.f32 %v3628, %v3914
        %v3947 = vmul.f32 %v3633, %v3915
        %v3948 = vmul.f32 %v3638, %v3916
        %v3949 = vmul.f32 %v3643, %v3917
        %v3950 = vmul.f32 %v3648, %v3918
        %v3951 = vmul.f32 %v3653, %v3919
        %v3952 = vmul.f32 %v3658, %v3920
        %v3953 = vmul.f32 %v3663, %v3921
        %v3954 = vmul.f32 %v3668, %v3922
        %v3955 = vmul.f32 %v3673, %v3923
        %v3956 = vmul.f32 %v3678, %v3924
        %v3957 = vmul.f32 %v3683, %v3925
        %v3958 = vmul.f32 %v3688, %v3926
        %v3959 = vmul.f32 %v3693, %v3927
        %v3960 = vmul.f32 %v3698, %v3928
        %v3961 = vmul.f32 %v3703, %v3929
        %v3962 = vmul.f32 %v3708, %v3930
        %v3963 = vmul.f32 %v3713, %v3931
        %v3964 = vmul.f32 %v3718, %v3932
        %v3965 = vmul.f32 %v3723, %v3933
        %v3966 = vmul.f32 %v3728, %v3934
        %v3967 = vmul.f32 %v3733, %v3935
        %v3968 = vmul.f32 %v3738, %v3936
        %v3969 = vmul.f32 %v3743, %v3937
        %v3970 = vmul.f32 %v3748, %v3938
        %v3971 = vmul.f32 %v3753, %v3939
        %v3972 = vmul.f32 %v3758, %v3940
        %v3973 = vmul.f32 %v3763, %v3941
        %v3974 = vmul.f32 %v3768, %v3942
        %v3975 = vmul.f32 %v3773, %v3943
        %v3976 = vmul.f32 %v3778, %v3944
        %v3977 = vmul.f32 %v3783, %v3945
        %v3978 = vadd.f32 %v3946, %v350
        %v3979 = vadd.f32 %v3947, %v352
        %v3980 = vadd.f32 %v3948, %v355
        %v3981 = vadd.f32 %v3949, %v357
        %v3982 = vadd.f32 %v3950, %v360
        %v3983 = vadd.f32 %v3951, %v362
        %v3984 = vadd.f32 %v3952, %v365
        %v3985 = vadd.f32 %v3953, %v367
        %v3986 = vadd.f32 %v3954, %v370
        %v3987 = vadd.f32 %v3955, %v372
        %v3988 = vadd.f32 %v3956, %v375
        %v3989 = vadd.f32 %v3957, %v377
        %v3990 = vadd.f32 %v3958, %v380
        %v3991 = vadd.f32 %v3959, %v382
        %v3992 = vadd.f32 %v3960, %v385
        %v3993 = vadd.f32 %v3961, %v387
        %v3994 = vadd.f32 %v3962, %v390
        %v3995 = vadd.f32 %v3963, %v392
        %v3996 = vadd.f32 %v3964, %v395
        %v3997 = vadd.f32 %v3965, %v397
        %v3998 = vadd.f32 %v3966, %v400
        %v3999 = vadd.f32 %v3967, %v402
        %v4000 = vadd.f32 %v3968, %v405
        %v4001 = vadd.f32 %v3969, %v407
        %v4002 = vadd.f32 %v3970, %v410
        %v4003 = vadd.f32 %v3971, %v412
        %v4004 = vadd.f32 %v3972, %v415
        %v4005 = vadd.f32 %v3973, %v417
        %v4006 = vadd.f32 %v3974, %v420
        %v4007 = vadd.f32 %v3975, %v422
        %v4008 = vadd.f32 %v3976, %v573
        %v4009 = vadd.f32 %v3977, %v575
        %4010 = vst [vmem:[%s239] sm:$0xff] %v3978
        %4011 = vst [vmem:[%s239 + $0x8] sm:$0xff] %v3979
        %4012 = vst [vmem:[%s239 + $0x10] sm:$0xff] %v3980
        %4013 = vst [vmem:[%s239 + $0x18] sm:$0xff] %v3981
        %4014 = vst [vmem:[%s239 + $0x20] sm:$0xff] %v3982
        %4015 = vst [vmem:[%s239 + $0x28] sm:$0xff] %v3983
        %4016 = vst [vmem:[%s239 + $0x30] sm:$0xff] %v3984
        %4017 = vst [vmem:[%s239 + $0x38] sm:$0xff] %v3985
        %4018 = vst [vmem:[%s239 + $0x40] sm:$0xff] %v3986
        %4019 = vst [vmem:[%s239 + $0x48] sm:$0xff] %v3987
        %4020 = vst [vmem:[%s239 + $0x50] sm:$0xff] %v3988
        %4021 = vst [vmem:[%s239 + $0x58] sm:$0xff] %v3989
        %4022 = vst [vmem:[%s239 + $0x60] sm:$0xff] %v3990
        %4023 = vst [vmem:[%s239 + $0x68] sm:$0xff] %v3991
        %4024 = vst [vmem:[%s239 + $0x70] sm:$0xff] %v3992
        %4025 = vst [vmem:[%s239 + $0x78] sm:$0xff] %v3993
        %4026 = vst [vmem:[%s239 + $0x80] sm:$0xff] %v3994
        %4027 = vst [vmem:[%s239 + $0x88] sm:$0xff] %v3995
        %4028 = vst [vmem:[%s239 + $0x90] sm:$0xff] %v3996
        %4029 = vst [vmem:[%s239 + $0x98] sm:$0xff] %v3997
        %4030 = vst [vmem:[%s239 + $0xa0] sm:$0xff] %v3998
        %4031 = vst [vmem:[%s239 + $0xa8] sm:$0xff] %v3999
        %4032 = vst [vmem:[%s239 + $0xb0] sm:$0xff] %v4000
        %4033 = vst [vmem:[%s239 + $0xb8] sm:$0xff] %v4001
        %4034 = vst [vmem:[%s239 + $0xc0] sm:$0xff] %v4002
        %4035 = vst [vmem:[%s239 + $0xc8] sm:$0xff] %v4003
        %4036 = vst [vmem:[%s239 + $0xd0] sm:$0xff] %v4004
        %4037 = vst [vmem:[%s239 + $0xd8] sm:$0xff] %v4005
        %4038 = vst [vmem:[%s239 + $0xe0] sm:$0xff] %v4006
        %4039 = vst [vmem:[%s239 + $0xe8] sm:$0xff] %v4007
        %4040 = vst [vmem:[%s239 + $0xf0] sm:$0xff] %v4008
        %4041 = vst [vmem:[%s239 + $0xf8] sm:$0xff] %v4009
        %p4042 = scmp.lt.s32.totalorder %s17, 1
        %s4043 = scalar_select %p4042, %s17, 1
        %s4044 = smul.addr %s4043, 32
        %s4045 = smul.addr %s4044, 8
        %s4046 = scalar_lea.vmem %s5, %s4045
        // Predicated region
        $region45: #{bottleneck_forward.1} parent=39 // pred_check
          %p4047 = pneg %p145
        $region46: #{bottleneck_forward.1} parent=39 // pred_check_branch
          %4049 = sbr.rel (%p4047) target = $region48
        $region47: #{bottleneck_forward.1} parent=39 // pred_region
          _
        $region48: #{bottleneck_forward.1} parent=39 // pred_fallthru
          _
      $region40: #{bottleneck_forward.1} parent=5 // pred_fallthru
        _
      %p4050 = scmp.le.s32.totalorder 2, %s12
      // Predicated region
      $region49: #{bottleneck_forward.1} parent=5 // pred_check
        %p4051 = pneg %p4050
      $region50: #{bottleneck_forward.1} parent=5 // pred_check_branch
        %4053 = sbr.rel (%p4051) target = $region52
      $region51: #{bottleneck_forward.1} parent=5 // pred_region
        %s4054 = ssub.s32 %s12, 2
        // Predicated region
        $region53: #{bottleneck_forward.1} parent=51 // pred_check
          %p4055 = pneg %p151
        $region54: #{bottleneck_forward.1} parent=51 // pred_check_branch
          %4057 = sbr.rel (%p4055) target = $region56
        $region55: #{bottleneck_forward.1} parent=51 // pred_region
          %p4058 = scmp.lt.s32.totalorder %s18, 1
          %s4059 = scalar_select %p4058, %s18, 1
          %s4060 = smul.addr %s4059, 32
          %s4061 = smul.addr %s4060, 8
          %s4062 = scalar_lea.vmem %s5, %s4061
        $region56: #{bottleneck_forward.1} parent=51 // pred_fallthru
          _
      $region52: #{bottleneck_forward.1} parent=5 // pred_fallthru
        _
    $region6: #{bottleneck_forward.1} parent=1 // loop_footer
      %s16 = sadd.s32 1, %s12
    $region7: #{bottleneck_forward.1} parent=1 // loop_footer_branch
      %11 = sbr.rel target = $region3
    $region8: #{bottleneck_forward.1} parent=1 // loop_exit
      _
    %4063 = vsyncpa [#allocation3], 1
    %s4064 = scalar_lea.sflag [#allocation3], 1
    %4065 = vsyncpa %s4064, 1

</llo_original>
